<compile_context>
chip_gen: v6e
topology: v6e:2x2x1
jax: 0.10.0
libtpu: 0.0.40
codegen_flags: <defaults>
</compile_context>

<pallas_src>
import functools

import jax
import jax.numpy as jnp
from jax.experimental import pallas as pl
from jax.experimental.pallas import tpu as pltpu

HIDDEN_DIM = 128
NUM_CLASSES = 2
FEATURE_DIM = 128

_VMEM = pl.BlockSpec(memory_space=pltpu.MemorySpace.VMEM)
_VMEM_LIMIT = 32 * 1024 * 1024  # conservative: fits v5e..v7x


def _round_up(x, m):
    return ((x + m - 1) // m) * m


# ---------------------------------------------------------------------------
# Pallas kernels
# ---------------------------------------------------------------------------

def _conv_mm_kernel(a_ref, w_ref, b_ref, o_ref):
    # a: (tm, K) bf16, w: (K, N) bf16, b: (1, N) f32 -> relu(a @ w + b) bf16
    acc = jnp.dot(a_ref[...], w_ref[...], preferred_element_type=jnp.float32)
    o_ref[...] = jnp.maximum(acc + b_ref[...], 0.0).astype(o_ref.dtype)


def _conv_pool_kernel(p_ref, w_ref, b_ref, o_ref):
    # p: (1, S, K) bf16 (one frame's im2col patches), w: (K, C) bf16,
    # b: (1, C) f32 -> o: (1, 1, C) f32 = spatial mean of relu(p @ w + b)
    acc = jnp.dot(p_ref[0], w_ref[...], preferred_element_type=jnp.float32)
    act = jnp.maximum(acc + b_ref[...], 0.0)                    # (S, C)
    o_ref[0] = jnp.mean(act, axis=0, keepdims=True)             # (1, C)


def _gru_classifier_kernel(x_ref, wih_ref, whh_ref, bih_ref, bhh_ref,
                           w1_ref, b1_ref, w2_ref, b2_ref, o_ref, *, T, B):
    # x: (T*B, D) bf16, weights pre-transposed: wih (D, 3H), whh (H, 3H) bf16,
    # biases (1, 3H) f32; classifier w1 (H, 64), w2 (64, num_classes) bf16.
    H = whh_ref.shape[0]

    # Hoisted input projection: one matmul for all timesteps (off the
    # latency-critical recurrent path).
    gi_all = jnp.dot(x_ref[...], wih_ref[...],
                     preferred_element_type=jnp.float32) + bih_ref[...]

    h = jnp.zeros((B, H), dtype=jnp.float32)
    # T is small & static: unrolled Python loop; only the recurrent matmul
    # plus the gate math remain per step (PyTorch gate order r, z, n).
    for t in range(T):
        gi = gi_all[t * B:(t + 1) * B]                           # (B, 3H)
        gh = jnp.dot(h.astype(jnp.bfloat16), whh_ref[...],
                     preferred_element_type=jnp.float32) + bhh_ref[...]
        r = jax.nn.sigmoid(gi[:, 0 * H:1 * H] + gh[:, 0 * H:1 * H])
        z = jax.nn.sigmoid(gi[:, 1 * H:2 * H] + gh[:, 1 * H:2 * H])
        n = jnp.tanh(gi[:, 2 * H:3 * H] + r * gh[:, 2 * H:3 * H])
        h = (1.0 - z) * n + z * h

    # Fused classifier epilogue: Linear(H,64) -> ReLU -> Linear(64,classes)
    h1 = jnp.maximum(
        jnp.dot(h.astype(jnp.bfloat16), w1_ref[...],
                preferred_element_type=jnp.float32) + b1_ref[...], 0.0)
    o_ref[...] = jnp.dot(h1.astype(jnp.bfloat16), w2_ref[...],
                         preferred_element_type=jnp.float32) + b2_ref[...]


# ---------------------------------------------------------------------------
# Pallas wrappers
# ---------------------------------------------------------------------------

def matmul_bias_relu_tiled(a, w, b, tile_m=512):
    """relu(a @ w + b) with a grid over M (auto-pipelined, M parallel)."""
    M, K = a.shape
    N = w.shape[1]
    tm = min(tile_m, _round_up(M, 8))
    Mp = _round_up(M, tm)
    if Mp != M:
        a = jnp.pad(a, ((0, Mp - M), (0, 0)))
    out = pl.pallas_call(
        _conv_mm_kernel,
        out_shape=jax.ShapeDtypeStruct((Mp, N), jnp.bfloat16),
        grid_spec=pltpu.PrefetchScalarGridSpec(
            num_scalar_prefetch=0,
            grid=(Mp // tm,),
            in_specs=[
                pl.BlockSpec((tm, K), lambda i: (i, 0)),
                pl.BlockSpec((K, N), lambda i: (0, 0)),
                pl.BlockSpec((1, N), lambda i: (0, 0)),
            ],
            out_specs=pl.BlockSpec((tm, N), lambda i: (i, 0))),
        compiler_params=pltpu.CompilerParams(
            dimension_semantics=("parallel",),
            vmem_limit_bytes=_VMEM_LIMIT),
    )(a, w, b)
    return out[:M] if Mp != M else out


def conv3_pool(patches_nsk, w_flat, b):
    """Fused conv3 matmul + bias + ReLU + spatial mean. Grid over frames."""
    N, S, K = patches_nsk.shape
    C = w_flat.shape[1]
    out = pl.pallas_call(
        _conv_pool_kernel,
        out_shape=jax.ShapeDtypeStruct((N, 1, C), jnp.float32),
        grid_spec=pltpu.PrefetchScalarGridSpec(
            num_scalar_prefetch=0,
            grid=(N,),
            in_specs=[
                pl.BlockSpec((1, S, K), lambda n: (n, 0, 0)),
                pl.BlockSpec((K, C), lambda n: (0, 0)),
                pl.BlockSpec((1, C), lambda n: (0, 0)),
            ],
            out_specs=pl.BlockSpec((1, 1, C), lambda n: (n, 0, 0))),
        compiler_params=pltpu.CompilerParams(
            dimension_semantics=("parallel",),
            vmem_limit_bytes=_VMEM_LIMIT),
    )(patches_nsk, w_flat, b)
    return out.reshape(N, C)


def gru_classifier(feats_btd, wih_t, whh_t, bih, bhh, w1, b1, w2, b2):
    """Single-kernel GRU (last hidden) + classifier MLP. Pads batch to 8."""
    B, T, D = feats_btd.shape
    num_classes = w2.shape[1]
    Bp = max(8, _round_up(B, 8))
    x = jnp.transpose(feats_btd, (1, 0, 2))                  # (T, B, D)
    if Bp != B:
        x = jnp.pad(x, ((0, 0), (0, Bp - B), (0, 0)))
    x = x.reshape(T * Bp, D).astype(jnp.bfloat16)
    kernel = functools.partial(_gru_classifier_kernel, T=T, B=Bp)
    logits_p = pl.pallas_call(
        kernel,
        out_shape=jax.ShapeDtypeStruct((Bp, num_classes), jnp.float32),
        in_specs=[_VMEM] * 9,
        out_specs=_VMEM,
        compiler_params=pltpu.CompilerParams(vmem_limit_bytes=_VMEM_LIMIT),
    )(x, wih_t, whh_t, bih, bhh, w1, b1, w2, b2)
    return logits_p[:B]


# ---------------------------------------------------------------------------
# im2col glue (pure data rearrangement; fused by XLA under jit)
# ---------------------------------------------------------------------------

def conv_im2col(x_nhwc, k=3, s=2, p=1):
    N, H, W, C = x_nhwc.shape
    Ho = (H + 2 * p - k) // s + 1
    Wo = (W + 2 * p - k) // s + 1
    xp = jnp.pad(x_nhwc, ((0, 0), (p, p), (p, p), (0, 0)))
    cols = []
    for kh in range(k):
        for kw in range(k):
            cols.append(xp[:, kh:kh + s * (Ho - 1) + 1:s,
                           kw:kw + s * (Wo - 1) + 1:s, :])
    patches = jnp.stack(cols, axis=3)               # (N, Ho, Wo, k*k, C)
    return patches.reshape(N * Ho * Wo, k * k * C), Ho, Wo


# ---------------------------------------------------------------------------
# Parameter init (deterministic, synthetic)
# ---------------------------------------------------------------------------

def init_params(key, in_channels=3, hidden_dim=HIDDEN_DIM,
                num_classes=NUM_CLASSES):
    keys = jax.random.split(key, 16)
    scale = 0.05

    def nrm(k, shape):
        return (scale * jax.random.normal(k, shape)).astype(jnp.float32)

    params = {}
    # Conv layers, HWIO weights (flattened to (k*k*Cin, Cout) at call time)
    params["conv1_w"] = nrm(keys[0], (3, 3, in_channels, 32))
    params["conv1_b"] = nrm(keys[1], (1, 32))
    params["conv2_w"] = nrm(keys[2], (3, 3, 32, 64))
    params["conv2_b"] = nrm(keys[3], (1, 64))
    params["conv3_w"] = nrm(keys[4], (3, 3, 64, 128))
    params["conv3_b"] = nrm(keys[5], (1, 128))
    # GRU (gate order r, z, n), stored pre-transposed: (in, 3H)
    params["gru_wih_t"] = nrm(keys[6], (FEATURE_DIM, 3 * hidden_dim))
    params["gru_whh_t"] = nrm(keys[7], (hidden_dim, 3 * hidden_dim))
    params["gru_bih"] = nrm(keys[8], (1, 3 * hidden_dim))
    params["gru_bhh"] = nrm(keys[9], (1, 3 * hidden_dim))
    # Classifier MLP
    params["fc1_w"] = nrm(keys[10], (hidden_dim, 64))
    params["fc1_b"] = nrm(keys[11], (1, 64))
    params["fc2_w"] = nrm(keys[12], (64, num_classes))
    params["fc2_b"] = nrm(keys[13], (1, num_classes))
    return params


# ---------------------------------------------------------------------------
# Forward pass (mirrors Validator_Net.forward)
# ---------------------------------------------------------------------------

@jax.jit
def validator_net_forward(params, x_btchw):
    B, T, C, H, W = x_btchw.shape
    # (B, T, C, H, W) -> (B*T, H, W, C), bf16 activations for the MXU
    x = (x_btchw.reshape(B * T, C, H, W)
         .transpose(0, 2, 3, 1).astype(jnp.bfloat16))

    # conv1 (C->32) + ReLU, conv2 (32->64) + ReLU: im2col + tiled matmul
    for w_name, b_name in (("conv1_w", "conv1_b"), ("conv2_w", "conv2_b")):
        w = params[w_name].astype(jnp.bfloat16)
        cin, cout = w.shape[2], w.shape[3]
        patches, Ho, Wo = conv_im2col(x, k=3, s=2, p=1)
        out = matmul_bias_relu_tiled(
            patches, w.reshape(9 * cin, cout), params[b_name])
        x = out.reshape(B * T, Ho, Wo, cout)

    # conv3 (64->128) + ReLU fused with AdaptiveAvgPool2d((1,1))
    w3 = params["conv3_w"].astype(jnp.bfloat16)
    cin3, cout3 = w3.shape[2], w3.shape[3]
    patches3, Ho, Wo = conv_im2col(x, k=3, s=2, p=1)
    N, S = B * T, Ho * Wo
    feats = conv3_pool(patches3.reshape(N, S, 9 * cin3).astype(jnp.bfloat16),
                       w3.reshape(9 * cin3, cout3),
                       params["conv3_b"])                     # (B*T, 128) f32

    # GRU over the sequence (last hidden state) + classifier, one kernel
    logits = gru_classifier(
        feats.reshape(B, T, FEATURE_DIM),
        params["gru_wih_t"].astype(jnp.bfloat16),
        params["gru_whh_t"].astype(jnp.bfloat16),
        params["gru_bih"], params["gru_bhh"],
        params["fc1_w"].astype(jnp.bfloat16), params["fc1_b"],
        params["fc2_w"].astype(jnp.bfloat16), params["fc2_b"])
    return logits                                             # (B, num_classes)


# ---------------------------------------------------------------------------
# Main
# ---------------------------------------------------------------------------

if __name__ == "__main__":
    key = jax.random.PRNGKey(0)
    k_x, k_p = jax.random.split(key)

    B, T, C, H, W = 2, 4, 3, 16, 16
    x = jax.random.normal(k_x, (B, T, C, H, W), dtype=jnp.float32)
    params = init_params(k_p, in_channels=C)

    logits = validator_net_forward(params, x)
    logits = jax.block_until_ready(logits)

    assert logits.shape == (B, NUM_CLASSES), logits.shape
    assert bool(jnp.all(jnp.isfinite(logits)))
    print("KERNEL_OK")
</pallas_src>

<mosaic_0001>
module attributes {stable_mosaic.version = 11 : i64} {
  func.func @_conv_mm_kernel(%arg0: i32, %arg1: memref<512x27xbf16, #tpu.memory_space<vmem>>, %arg2: memref<27x32xbf16, #tpu.memory_space<vmem>>, %arg3: memref<1x32xf32, #tpu.memory_space<vmem>>, %arg4: memref<512x32xbf16, #tpu.memory_space<vmem>>) attributes {dimension_semantics = [#tpu.dimension_semantics<parallel>], iteration_bounds = array<i64: 1>, scalar_prefetch = 0 : i64, scratch_operands = 0 : i64, tpu.core_type = #tpu.core_type<tc>, window_params = [{transform_indices = @transform_0, window_bounds = array<i64: 512, 27>}, {pipeline_mode = #tpu.pipeline_mode<synchronous>, transform_indices = @transform_1, window_bounds = array<i64: 27, 32>}, {pipeline_mode = #tpu.pipeline_mode<synchronous>, transform_indices = @transform_2, window_bounds = array<i64: 1, 32>}, {transform_indices = @transform_3, window_bounds = array<i64: 512, 32>}]} {
    %c0 = arith.constant 0 : index
    %c0_0 = arith.constant 0 : index
    %0 = vector.load %arg1[%c0, %c0_0] : memref<512x27xbf16, #tpu.memory_space<vmem>>, vector<512x27xbf16>
    %c0_1 = arith.constant 0 : index
    %c0_2 = arith.constant 0 : index
    %1 = vector.load %arg2[%c0_1, %c0_2] : memref<27x32xbf16, #tpu.memory_space<vmem>>, vector<27x32xbf16>
    %cst = arith.constant dense<0.000000e+00> : vector<512x32xf32>
    %2 = tpu.matmul %0, %1, %cst {dimension_numbers = #tpu.dot_dimension_numbers<[1], [0], [0], [1], [0, 0, 1, 1], [], []>} : vector<512x27xbf16>, vector<27x32xbf16>, vector<512x32xf32> -> vector<512x32xf32>
    %c0_3 = arith.constant 0 : index
    %c0_4 = arith.constant 0 : index
    %3 = vector.load %arg3[%c0_3, %c0_4] : memref<1x32xf32, #tpu.memory_space<vmem>>, vector<1x32xf32>
    %4 = vector.broadcast %3 : vector<1x32xf32> to vector<512x32xf32>
    %5 = arith.addf %2, %4 : vector<512x32xf32>
    %cst_5 = arith.constant 0.000000e+00 : f32
    %6 = vector.broadcast %cst_5 : f32 to vector<512x32xf32>
    %7 = arith.maximumf %5, %6 : vector<512x32xf32>
    %8 = arith.truncf %7 : vector<512x32xf32> to vector<512x32xbf16>
    %c0_6 = arith.constant 0 : index
    %c0_7 = arith.constant 0 : index
    %9 = vector.load %arg4[%c0_6, %c0_7] : memref<512x32xbf16, #tpu.memory_space<vmem>>, vector<512x32xbf16>
    tpu.vector_store %arg4[%c0_6, %c0_7], %8 {strides = array<i32>} : memref<512x32xbf16, #tpu.memory_space<vmem>>, vector<512x32xbf16>,
    return
  }
  func.func @transform_0(%arg0: i32) -> (i32, i32) {
    %c0_i32 = arith.constant 0 : i32
    %c0_i32_0 = arith.constant 0 : i32
    return %arg0, %c0_i32 : i32, i32
  }
  func.func @transform_1(%arg0: i32) -> (i32, i32) {
    %c0_i32 = arith.constant 0 : i32
    %c0_i32_0 = arith.constant 0 : i32
    %c0_i32_1 = arith.constant 0 : i32
    return %c0_i32, %c0_i32_0 : i32, i32
  }
  func.func @transform_2(%arg0: i32) -> (i32, i32) {
    %c0_i32 = arith.constant 0 : i32
    %c0_i32_0 = arith.constant 0 : i32
    %c0_i32_1 = arith.constant 0 : i32
    return %c0_i32, %c0_i32_0 : i32, i32
  }
  func.func @transform_3(%arg0: i32) -> (i32, i32) {
    %c0_i32 = arith.constant 0 : i32
    %c0_i32_0 = arith.constant 0 : i32
    return %arg0, %c0_i32 : i32, i32
  }
}

module attributes {stable_mosaic.version = 11 : i64} {
  func.func @_conv_mm_kernel(%arg0: i32, %arg1: memref<128x288xbf16, #tpu.memory_space<vmem>>, %arg2: memref<288x64xbf16, #tpu.memory_space<vmem>>, %arg3: memref<1x64xf32, #tpu.memory_space<vmem>>, %arg4: memref<128x64xbf16, #tpu.memory_space<vmem>>) attributes {dimension_semantics = [#tpu.dimension_semantics<parallel>], iteration_bounds = array<i64: 1>, scalar_prefetch = 0 : i64, scratch_operands = 0 : i64, tpu.core_type = #tpu.core_type<tc>, window_params = [{transform_indices = @transform_0, window_bounds = array<i64: 128, 288>}, {pipeline_mode = #tpu.pipeline_mode<synchronous>, transform_indices = @transform_1, window_bounds = array<i64: 288, 64>}, {pipeline_mode = #tpu.pipeline_mode<synchronous>, transform_indices = @transform_2, window_bounds = array<i64: 1, 64>}, {transform_indices = @transform_3, window_bounds = array<i64: 128, 64>}]} {
    %c0 = arith.constant 0 : index
    %c0_0 = arith.constant 0 : index
    %0 = vector.load %arg1[%c0, %c0_0] : memref<128x288xbf16, #tpu.memory_space<vmem>>, vector<128x288xbf16>
    %c0_1 = arith.constant 0 : index
    %c0_2 = arith.constant 0 : index
    %1 = vector.load %arg2[%c0_1, %c0_2] : memref<288x64xbf16, #tpu.memory_space<vmem>>, vector<288x64xbf16>
    %cst = arith.constant dense<0.000000e+00> : vector<128x64xf32>
    %2 = tpu.matmul %0, %1, %cst {dimension_numbers = #tpu.dot_dimension_numbers<[1], [0], [0], [1], [0, 0, 1, 1], [], []>} : vector<128x288xbf16>, vector<288x64xbf16>, vector<128x64xf32> -> vector<128x64xf32>
    %c0_3 = arith.constant 0 : index
    %c0_4 = arith.constant 0 : index
    %3 = vector.load %arg3[%c0_3, %c0_4] : memref<1x64xf32, #tpu.memory_space<vmem>>, vector<1x64xf32>
    %4 = vector.broadcast %3 : vector<1x64xf32> to vector<128x64xf32>
    %5 = arith.addf %2, %4 : vector<128x64xf32>
    %cst_5 = arith.constant 0.000000e+00 : f32
    %6 = vector.broadcast %cst_5 : f32 to vector<128x64xf32>
    %7 = arith.maximumf %5, %6 : vector<128x64xf32>
    %8 = arith.truncf %7 : vector<128x64xf32> to vector<128x64xbf16>
    %c0_6 = arith.constant 0 : index
    %c0_7 = arith.constant 0 : index
    %9 = vector.load %arg4[%c0_6, %c0_7] : memref<128x64xbf16, #tpu.memory_space<vmem>>, vector<128x64xbf16>
    tpu.vector_store %arg4[%c0_6, %c0_7], %8 {strides = array<i32>} : memref<128x64xbf16, #tpu.memory_space<vmem>>, vector<128x64xbf16>,
    return
  }
  func.func @transform_0(%arg0: i32) -> (i32, i32) {
    %c0_i32 = arith.constant 0 : i32
    %c0_i32_0 = arith.constant 0 : i32
    return %arg0, %c0_i32 : i32, i32
  }
  func.func @transform_1(%arg0: i32) -> (i32, i32) {
    %c0_i32 = arith.constant 0 : i32
    %c0_i32_0 = arith.constant 0 : i32
    %c0_i32_1 = arith.constant 0 : i32
    return %c0_i32, %c0_i32_0 : i32, i32
  }
  func.func @transform_2(%arg0: i32) -> (i32, i32) {
    %c0_i32 = arith.constant 0 : i32
    %c0_i32_0 = arith.constant 0 : i32
    %c0_i32_1 = arith.constant 0 : i32
    return %c0_i32, %c0_i32_0 : i32, i32
  }
  func.func @transform_3(%arg0: i32) -> (i32, i32) {
    %c0_i32 = arith.constant 0 : i32
    %c0_i32_0 = arith.constant 0 : i32
    return %arg0, %c0_i32 : i32, i32
  }
}

module attributes {stable_mosaic.version = 11 : i64} {
  func.func @_conv_pool_kernel(%arg0: i32, %arg1: memref<1x4x576xbf16, #tpu.memory_space<vmem>>, %arg2: memref<576x128xbf16, #tpu.memory_space<vmem>>, %arg3: memref<1x128xf32, #tpu.memory_space<vmem>>, %arg4: memref<1x1x128xf32, #tpu.memory_space<vmem>>) attributes {dimension_semantics = [#tpu.dimension_semantics<parallel>], iteration_bounds = array<i64: 8>, scalar_prefetch = 0 : i64, scratch_operands = 0 : i64, tpu.core_type = #tpu.core_type<tc>, window_params = [{transform_indices = @transform_0, window_bounds = array<i64: 1, 4, 576>}, {pipeline_mode = #tpu.pipeline_mode<synchronous>, transform_indices = @transform_1, window_bounds = array<i64: 576, 128>}, {pipeline_mode = #tpu.pipeline_mode<synchronous>, transform_indices = @transform_2, window_bounds = array<i64: 1, 128>}, {transform_indices = @transform_3, window_bounds = array<i64: 1, 1, 128>}]} {
    %c0 = arith.constant 0 : index
    %c0_0 = arith.constant 0 : index
    %c0_1 = arith.constant 0 : index
    %0 = vector.load %arg1[%c0, %c0_0, %c0_1] : memref<1x4x576xbf16, #tpu.memory_space<vmem>>, vector<1x4x576xbf16>
    %1 = vector.shape_cast %0 : vector<1x4x576xbf16> to vector<4x576xbf16>
    %c0_2 = arith.constant 0 : index
    %c0_3 = arith.constant 0 : index
    %2 = vector.load %arg2[%c0_2, %c0_3] : memref<576x128xbf16, #tpu.memory_space<vmem>>, vector<576x128xbf16>
    %cst = arith.constant dense<0.000000e+00> : vector<4x128xf32>
    %3 = tpu.matmul %1, %2, %cst {dimension_numbers = #tpu.dot_dimension_numbers<[1], [0], [0], [1], [0, 0, 1, 1], [], []>} : vector<4x576xbf16>, vector<576x128xbf16>, vector<4x128xf32> -> vector<4x128xf32>
    %c0_4 = arith.constant 0 : index
    %c0_5 = arith.constant 0 : index
    %4 = vector.load %arg3[%c0_4, %c0_5] : memref<1x128xf32, #tpu.memory_space<vmem>>, vector<1x128xf32>
    %5 = vector.broadcast %4 : vector<1x128xf32> to vector<4x128xf32>
    %6 = arith.addf %3, %5 : vector<4x128xf32>
    %cst_6 = arith.constant 0.000000e+00 : f32
    %7 = vector.broadcast %cst_6 : f32 to vector<4x128xf32>
    %8 = arith.maximumf %6, %7 : vector<4x128xf32>
    %cst_7 = arith.constant dense<0.000000e+00> : vector<128xf32>
    %9 = vector.multi_reduction <add>, %8, %cst_7 [0] : vector<4x128xf32> to vector<128xf32>
    %10 = vector.shape_cast %9 : vector<128xf32> to vector<1x128xf32>
    %cst_8 = arith.constant 4.000000e+00 : f32
    %11 = vector.broadcast %cst_8 : f32 to vector<1x128xf32>
    %12 = arith.divf %10, %11 : vector<1x128xf32>
    %c0_9 = arith.constant 0 : index
    %c0_10 = arith.constant 0 : index
    %c0_11 = arith.constant 0 : index
    %13 = vector.load %arg4[%c0_9, %c0_10, %c0_11] : memref<1x1x128xf32, #tpu.memory_space<vmem>>, vector<1x1x128xf32>
    %14 = vector.shape_cast %13 : vector<1x1x128xf32> to vector<1x128xf32>
    %15 = vector.shape_cast %12 : vector<1x128xf32> to vector<1x1x128xf32>
    tpu.vector_store %arg4[%c0_9, %c0_10, %c0_11], %15 {strides = array<i32>} : memref<1x1x128xf32, #tpu.memory_space<vmem>>, vector<1x1x128xf32>,
    return
  }
  func.func @transform_0(%arg0: i32) -> (i32, i32, i32) {
    %c0_i32 = arith.constant 0 : i32
    %c0_i32_0 = arith.constant 0 : i32
    %c0_i32_1 = arith.constant 0 : i32
    return %arg0, %c0_i32, %c0_i32_0 : i32, i32, i32
  }
  func.func @transform_1(%arg0: i32) -> (i32, i32) {
    %c0_i32 = arith.constant 0 : i32
    %c0_i32_0 = arith.constant 0 : i32
    %c0_i32_1 = arith.constant 0 : i32
    return %c0_i32, %c0_i32_0 : i32, i32
  }
  func.func @transform_2(%arg0: i32) -> (i32, i32) {
    %c0_i32 = arith.constant 0 : i32
    %c0_i32_0 = arith.constant 0 : i32
    %c0_i32_1 = arith.constant 0 : i32
    return %c0_i32, %c0_i32_0 : i32, i32
  }
  func.func @transform_3(%arg0: i32) -> (i32, i32, i32) {
    %c0_i32 = arith.constant 0 : i32
    %c0_i32_0 = arith.constant 0 : i32
    %c0_i32_1 = arith.constant 0 : i32
    return %arg0, %c0_i32, %c0_i32_0 : i32, i32, i32
  }
}

module attributes {stable_mosaic.version = 11 : i64} {
  func.func @_gru_classifier_kernel(%arg0: memref<32x128xbf16, #tpu.memory_space<vmem>>, %arg1: memref<128x384xbf16, #tpu.memory_space<vmem>>, %arg2: memref<128x384xbf16, #tpu.memory_space<vmem>>, %arg3: memref<1x384xf32, #tpu.memory_space<vmem>>, %arg4: memref<1x384xf32, #tpu.memory_space<vmem>>, %arg5: memref<128x64xbf16, #tpu.memory_space<vmem>>, %arg6: memref<1x64xf32, #tpu.memory_space<vmem>>, %arg7: memref<64x2xbf16, #tpu.memory_space<vmem>>, %arg8: memref<1x2xf32, #tpu.memory_space<vmem>>, %arg9: memref<8x2xf32, #tpu.memory_space<vmem>>) attributes {dimension_semantics = [], scalar_prefetch = 0 : i64, scratch_operands = 0 : i64, tpu.core_type = #tpu.core_type<tc>} {
    %c0 = arith.constant 0 : index
    %c0_0 = arith.constant 0 : index
    %0 = vector.load %arg0[%c0, %c0_0] : memref<32x128xbf16, #tpu.memory_space<vmem>>, vector<32x128xbf16>
    %c0_1 = arith.constant 0 : index
    %c0_2 = arith.constant 0 : index
    %1 = vector.load %arg1[%c0_1, %c0_2] : memref<128x384xbf16, #tpu.memory_space<vmem>>, vector<128x384xbf16>
    %cst = arith.constant dense<0.000000e+00> : vector<32x384xf32>
    %2 = tpu.matmul %0, %1, %cst {dimension_numbers = #tpu.dot_dimension_numbers<[1], [0], [0], [1], [0, 0, 1, 1], [], []>} : vector<32x128xbf16>, vector<128x384xbf16>, vector<32x384xf32> -> vector<32x384xf32>
    %c0_3 = arith.constant 0 : index
    %c0_4 = arith.constant 0 : index
    %3 = vector.load %arg3[%c0_3, %c0_4] : memref<1x384xf32, #tpu.memory_space<vmem>>, vector<1x384xf32>
    %4 = vector.broadcast %3 : vector<1x384xf32> to vector<32x384xf32>
    %5 = arith.addf %2, %4 : vector<32x384xf32>
    %cst_5 = arith.constant 0.000000e+00 : f32
    %6 = vector.broadcast %cst_5 : f32 to vector<8x128xf32>
    %7 = vector.extract_strided_slice %5 {offsets = [0, 0], sizes = [8, 384], strides = [1, 1]} : vector<32x384xf32> to vector<8x384xf32>
    %8 = arith.truncf %6 : vector<8x128xf32> to vector<8x128xbf16>
    %c0_6 = arith.constant 0 : index
    %c0_7 = arith.constant 0 : index
    %9 = vector.load %arg2[%c0_6, %c0_7] : memref<128x384xbf16, #tpu.memory_space<vmem>>, vector<128x384xbf16>
    %cst_8 = arith.constant dense<0.000000e+00> : vector<8x384xf32>
    %10 = tpu.matmul %8, %9, %cst_8 {dimension_numbers = #tpu.dot_dimension_numbers<[1], [0], [0], [1], [0, 0, 1, 1], [], []>} : vector<8x128xbf16>, vector<128x384xbf16>, vector<8x384xf32> -> vector<8x384xf32>
    %c0_9 = arith.constant 0 : index
    %c0_10 = arith.constant 0 : index
    %11 = vector.load %arg4[%c0_9, %c0_10] : memref<1x384xf32, #tpu.memory_space<vmem>>, vector<1x384xf32>
    %12 = vector.broadcast %11 : vector<1x384xf32> to vector<8x384xf32>
    %13 = arith.addf %10, %12 : vector<8x384xf32>
    %14 = vector.extract_strided_slice %7 {offsets = [0, 0], sizes = [8, 128], strides = [1, 1]} : vector<8x384xf32> to vector<8x128xf32>
    %15 = vector.extract_strided_slice %13 {offsets = [0, 0], sizes = [8, 128], strides = [1, 1]} : vector<8x384xf32> to vector<8x128xf32>
    %16 = arith.addf %14, %15 : vector<8x128xf32>
    %17 = arith.negf %16 : vector<8x128xf32>
    %18 = math.exp %17 : vector<8x128xf32>
    %cst_11 = arith.constant 1.000000e+00 : f32
    %19 = vector.broadcast %cst_11 : f32 to vector<8x128xf32>
    %20 = arith.addf %19, %18 : vector<8x128xf32>
    %21 = arith.divf %19, %20 : vector<8x128xf32>
    %22 = vector.extract_strided_slice %7 {offsets = [0, 128], sizes = [8, 128], strides = [1, 1]} : vector<8x384xf32> to vector<8x128xf32>
    %23 = vector.extract_strided_slice %13 {offsets = [0, 128], sizes = [8, 128], strides = [1, 1]} : vector<8x384xf32> to vector<8x128xf32>
    %24 = arith.addf %22, %23 : vector<8x128xf32>
    %25 = arith.negf %24 : vector<8x128xf32>
    %26 = math.exp %25 : vector<8x128xf32>
    %cst_12 = arith.constant 1.000000e+00 : f32
    %27 = vector.broadcast %cst_12 : f32 to vector<8x128xf32>
    %28 = arith.addf %27, %26 : vector<8x128xf32>
    %29 = arith.divf %27, %28 : vector<8x128xf32>
    %30 = vector.extract_strided_slice %7 {offsets = [0, 256], sizes = [8, 128], strides = [1, 1]} : vector<8x384xf32> to vector<8x128xf32>
    %31 = vector.extract_strided_slice %13 {offsets = [0, 256], sizes = [8, 128], strides = [1, 1]} : vector<8x384xf32> to vector<8x128xf32>
    %32 = arith.mulf %21, %31 : vector<8x128xf32>
    %33 = arith.addf %30, %32 : vector<8x128xf32>
    %34 = math.tanh %33 : vector<8x128xf32>
    %cst_13 = arith.constant 1.000000e+00 : f32
    %35 = vector.broadcast %cst_13 : f32 to vector<8x128xf32>
    %36 = arith.subf %35, %29 : vector<8x128xf32>
    %37 = arith.mulf %36, %34 : vector<8x128xf32>
    %38 = arith.mulf %29, %6 : vector<8x128xf32>
    %39 = arith.addf %37, %38 : vector<8x128xf32>
    %40 = vector.extract_strided_slice %5 {offsets = [8, 0], sizes = [8, 384], strides = [1, 1]} : vector<32x384xf32> to vector<8x384xf32>
    %41 = arith.truncf %39 : vector<8x128xf32> to vector<8x128xbf16>
    %c0_14 = arith.constant 0 : index
    %c0_15 = arith.constant 0 : index
    %42 = vector.load %arg2[%c0_14, %c0_15] : memref<128x384xbf16, #tpu.memory_space<vmem>>, vector<128x384xbf16>
    %cst_16 = arith.constant dense<0.000000e+00> : vector<8x384xf32>
    %43 = tpu.matmul %41, %42, %cst_16 {dimension_numbers = #tpu.dot_dimension_numbers<[1], [0], [0], [1], [0, 0, 1, 1], [], []>} : vector<8x128xbf16>, vector<128x384xbf16>, vector<8x384xf32> -> vector<8x384xf32>
    %c0_17 = arith.constant 0 : index
    %c0_18 = arith.constant 0 : index
    %44 = vector.load %arg4[%c0_17, %c0_18] : memref<1x384xf32, #tpu.memory_space<vmem>>, vector<1x384xf32>
    %45 = vector.broadcast %44 : vector<1x384xf32> to vector<8x384xf32>
    %46 = arith.addf %43, %45 : vector<8x384xf32>
    %47 = vector.extract_strided_slice %40 {offsets = [0, 0], sizes = [8, 128], strides = [1, 1]} : vector<8x384xf32> to vector<8x128xf32>
    %48 = vector.extract_strided_slice %46 {offsets = [0, 0], sizes = [8, 128], strides = [1, 1]} : vector<8x384xf32> to vector<8x128xf32>
    %49 = arith.addf %47, %48 : vector<8x128xf32>
    %50 = arith.negf %49 : vector<8x128xf32>
    %51 = math.exp %50 : vector<8x128xf32>
    %cst_19 = arith.constant 1.000000e+00 : f32
    %52 = vector.broadcast %cst_19 : f32 to vector<8x128xf32>
    %53 = arith.addf %52, %51 : vector<8x128xf32>
    %54 = arith.divf %52, %53 : vector<8x128xf32>
    %55 = vector.extract_strided_slice %40 {offsets = [0, 128], sizes = [8, 128], strides = [1, 1]} : vector<8x384xf32> to vector<8x128xf32>
    %56 = vector.extract_strided_slice %46 {offsets = [0, 128], sizes = [8, 128], strides = [1, 1]} : vector<8x384xf32> to vector<8x128xf32>
    %57 = arith.addf %55, %56 : vector<8x128xf32>
    %58 = arith.negf %57 : vector<8x128xf32>
    %59 = math.exp %58 : vector<8x128xf32>
    %cst_20 = arith.constant 1.000000e+00 : f32
    %60 = vector.broadcast %cst_20 : f32 to vector<8x128xf32>
    %61 = arith.addf %60, %59 : vector<8x128xf32>
    %62 = arith.divf %60, %61 : vector<8x128xf32>
    %63 = vector.extract_strided_slice %40 {offsets = [0, 256], sizes = [8, 128], strides = [1, 1]} : vector<8x384xf32> to vector<8x128xf32>
    %64 = vector.extract_strided_slice %46 {offsets = [0, 256], sizes = [8, 128], strides = [1, 1]} : vector<8x384xf32> to vector<8x128xf32>
    %65 = arith.mulf %54, %64 : vector<8x128xf32>
    %66 = arith.addf %63, %65 : vector<8x128xf32>
    %67 = math.tanh %66 : vector<8x128xf32>
    %cst_21 = arith.constant 1.000000e+00 : f32
    %68 = vector.broadcast %cst_21 : f32 to vector<8x128xf32>
    %69 = arith.subf %68, %62 : vector<8x128xf32>
    %70 = arith.mulf %69, %67 : vector<8x128xf32>
    %71 = arith.mulf %62, %39 : vector<8x128xf32>
    %72 = arith.addf %70, %71 : vector<8x128xf32>
    %73 = vector.extract_strided_slice %5 {offsets = [16, 0], sizes = [8, 384], strides = [1, 1]} : vector<32x384xf32> to vector<8x384xf32>
    %74 = arith.truncf %72 : vector<8x128xf32> to vector<8x128xbf16>
    %c0_22 = arith.constant 0 : index
    %c0_23 = arith.constant 0 : index
    %75 = vector.load %arg2[%c0_22, %c0_23] : memref<128x384xbf16, #tpu.memory_space<vmem>>, vector<128x384xbf16>
    %cst_24 = arith.constant dense<0.000000e+00> : vector<8x384xf32>
    %76 = tpu.matmul %74, %75, %cst_24 {dimension_numbers = #tpu.dot_dimension_numbers<[1], [0], [0], [1], [0, 0, 1, 1], [], []>} : vector<8x128xbf16>, vector<128x384xbf16>, vector<8x384xf32> -> vector<8x384xf32>
    %c0_25 = arith.constant 0 : index
    %c0_26 = arith.constant 0 : index
    %77 = vector.load %arg4[%c0_25, %c0_26] : memref<1x384xf32, #tpu.memory_space<vmem>>, vector<1x384xf32>
    %78 = vector.broadcast %77 : vector<1x384xf32> to vector<8x384xf32>
    %79 = arith.addf %76, %78 : vector<8x384xf32>
    %80 = vector.extract_strided_slice %73 {offsets = [0, 0], sizes = [8, 128], strides = [1, 1]} : vector<8x384xf32> to vector<8x128xf32>
    %81 = vector.extract_strided_slice %79 {offsets = [0, 0], sizes = [8, 128], strides = [1, 1]} : vector<8x384xf32> to vector<8x128xf32>
    %82 = arith.addf %80, %81 : vector<8x128xf32>
    %83 = arith.negf %82 : vector<8x128xf32>
    %84 = math.exp %83 : vector<8x128xf32>
    %cst_27 = arith.constant 1.000000e+00 : f32
    %85 = vector.broadcast %cst_27 : f32 to vector<8x128xf32>
    %86 = arith.addf %85, %84 : vector<8x128xf32>
    %87 = arith.divf %85, %86 : vector<8x128xf32>
    %88 = vector.extract_strided_slice %73 {offsets = [0, 128], sizes = [8, 128], strides = [1, 1]} : vector<8x384xf32> to vector<8x128xf32>
    %89 = vector.extract_strided_slice %79 {offsets = [0, 128], sizes = [8, 128], strides = [1, 1]} : vector<8x384xf32> to vector<8x128xf32>
    %90 = arith.addf %88, %89 : vector<8x128xf32>
    %91 = arith.negf %90 : vector<8x128xf32>
    %92 = math.exp %91 : vector<8x128xf32>
    %cst_28 = arith.constant 1.000000e+00 : f32
    %93 = vector.broadcast %cst_28 : f32 to vector<8x128xf32>
    %94 = arith.addf %93, %92 : vector<8x128xf32>
    %95 = arith.divf %93, %94 : vector<8x128xf32>
    %96 = vector.extract_strided_slice %73 {offsets = [0, 256], sizes = [8, 128], strides = [1, 1]} : vector<8x384xf32> to vector<8x128xf32>
    %97 = vector.extract_strided_slice %79 {offsets = [0, 256], sizes = [8, 128], strides = [1, 1]} : vector<8x384xf32> to vector<8x128xf32>
    %98 = arith.mulf %87, %97 : vector<8x128xf32>
    %99 = arith.addf %96, %98 : vector<8x128xf32>
    %100 = math.tanh %99 : vector<8x128xf32>
    %cst_29 = arith.constant 1.000000e+00 : f32
    %101 = vector.broadcast %cst_29 : f32 to vector<8x128xf32>
    %102 = arith.subf %101, %95 : vector<8x128xf32>
    %103 = arith.mulf %102, %100 : vector<8x128xf32>
    %104 = arith.mulf %95, %72 : vector<8x128xf32>
    %105 = arith.addf %103, %104 : vector<8x128xf32>
    %106 = vector.extract_strided_slice %5 {offsets = [24, 0], sizes = [8, 384], strides = [1, 1]} : vector<32x384xf32> to vector<8x384xf32>
    %107 = arith.truncf %105 : vector<8x128xf32> to vector<8x128xbf16>
    %c0_30 = arith.constant 0 : index
    %c0_31 = arith.constant 0 : index
    %108 = vector.load %arg2[%c0_30, %c0_31] : memref<128x384xbf16, #tpu.memory_space<vmem>>, vector<128x384xbf16>
    %cst_32 = arith.constant dense<0.000000e+00> : vector<8x384xf32>
    %109 = tpu.matmul %107, %108, %cst_32 {dimension_numbers = #tpu.dot_dimension_numbers<[1], [0], [0], [1], [0, 0, 1, 1], [], []>} : vector<8x128xbf16>, vector<128x384xbf16>, vector<8x384xf32> -> vector<8x384xf32>
    %c0_33 = arith.constant 0 : index
    %c0_34 = arith.constant 0 : index
    %110 = vector.load %arg4[%c0_33, %c0_34] : memref<1x384xf32, #tpu.memory_space<vmem>>, vector<1x384xf32>
    %111 = vector.broadcast %110 : vector<1x384xf32> to vector<8x384xf32>
    %112 = arith.addf %109, %111 : vector<8x384xf32>
    %113 = vector.extract_strided_slice %106 {offsets = [0, 0], sizes = [8, 128], strides = [1, 1]} : vector<8x384xf32> to vector<8x128xf32>
    %114 = vector.extract_strided_slice %112 {offsets = [0, 0], sizes = [8, 128], strides = [1, 1]} : vector<8x384xf32> to vector<8x128xf32>
    %115 = arith.addf %113, %114 : vector<8x128xf32>
    %116 = arith.negf %115 : vector<8x128xf32>
    %117 = math.exp %116 : vector<8x128xf32>
    %cst_35 = arith.constant 1.000000e+00 : f32
    %118 = vector.broadcast %cst_35 : f32 to vector<8x128xf32>
    %119 = arith.addf %118, %117 : vector<8x128xf32>
    %120 = arith.divf %118, %119 : vector<8x128xf32>
    %121 = vector.extract_strided_slice %106 {offsets = [0, 128], sizes = [8, 128], strides = [1, 1]} : vector<8x384xf32> to vector<8x128xf32>
    %122 = vector.extract_strided_slice %112 {offsets = [0, 128], sizes = [8, 128], strides = [1, 1]} : vector<8x384xf32> to vector<8x128xf32>
    %123 = arith.addf %121, %122 : vector<8x128xf32>
    %124 = arith.negf %123 : vector<8x128xf32>
    %125 = math.exp %124 : vector<8x128xf32>
    %cst_36 = arith.constant 1.000000e+00 : f32
    %126 = vector.broadcast %cst_36 : f32 to vector<8x128xf32>
    %127 = arith.addf %126, %125 : vector<8x128xf32>
    %128 = arith.divf %126, %127 : vector<8x128xf32>
    %129 = vector.extract_strided_slice %106 {offsets = [0, 256], sizes = [8, 128], strides = [1, 1]} : vector<8x384xf32> to vector<8x128xf32>
    %130 = vector.extract_strided_slice %112 {offsets = [0, 256], sizes = [8, 128], strides = [1, 1]} : vector<8x384xf32> to vector<8x128xf32>
    %131 = arith.mulf %120, %130 : vector<8x128xf32>
    %132 = arith.addf %129, %131 : vector<8x128xf32>
    %133 = math.tanh %132 : vector<8x128xf32>
    %cst_37 = arith.constant 1.000000e+00 : f32
    %134 = vector.broadcast %cst_37 : f32 to vector<8x128xf32>
    %135 = arith.subf %134, %128 : vector<8x128xf32>
    %136 = arith.mulf %135, %133 : vector<8x128xf32>
    %137 = arith.mulf %128, %105 : vector<8x128xf32>
    %138 = arith.addf %136, %137 : vector<8x128xf32>
    %139 = arith.truncf %138 : vector<8x128xf32> to vector<8x128xbf16>
    %c0_38 = arith.constant 0 : index
    %c0_39 = arith.constant 0 : index
    %140 = vector.load %arg5[%c0_38, %c0_39] : memref<128x64xbf16, #tpu.memory_space<vmem>>, vector<128x64xbf16>
    %cst_40 = arith.constant dense<0.000000e+00> : vector<8x64xf32>
    %141 = tpu.matmul %139, %140, %cst_40 {dimension_numbers = #tpu.dot_dimension_numbers<[1], [0], [0], [1], [0, 0, 1, 1], [], []>} : vector<8x128xbf16>, vector<128x64xbf16>, vector<8x64xf32> -> vector<8x64xf32>
    %c0_41 = arith.constant 0 : index
    %c0_42 = arith.constant 0 : index
    %142 = vector.load %arg6[%c0_41, %c0_42] : memref<1x64xf32, #tpu.memory_space<vmem>>, vector<1x64xf32>
    %143 = vector.broadcast %142 : vector<1x64xf32> to vector<8x64xf32>
    %144 = arith.addf %141, %143 : vector<8x64xf32>
    %cst_43 = arith.constant 0.000000e+00 : f32
    %145 = vector.broadcast %cst_43 : f32 to vector<8x64xf32>
    %146 = arith.maximumf %144, %145 : vector<8x64xf32>
    %147 = arith.truncf %146 : vector<8x64xf32> to vector<8x64xbf16>
    %c0_44 = arith.constant 0 : index
    %c0_45 = arith.constant 0 : index
    %148 = vector.load %arg7[%c0_44, %c0_45] : memref<64x2xbf16, #tpu.memory_space<vmem>>, vector<64x2xbf16>
    %cst_46 = arith.constant dense<0.000000e+00> : vector<8x2xf32>
    %149 = tpu.matmul %147, %148, %cst_46 {dimension_numbers = #tpu.dot_dimension_numbers<[1], [0], [0], [1], [0, 0, 1, 1], [], []>} : vector<8x64xbf16>, vector<64x2xbf16>, vector<8x2xf32> -> vector<8x2xf32>
    %c0_47 = arith.constant 0 : index
    %c0_48 = arith.constant 0 : index
    %150 = vector.load %arg8[%c0_47, %c0_48] : memref<1x2xf32, #tpu.memory_space<vmem>>, vector<1x2xf32>
    %151 = vector.broadcast %150 : vector<1x2xf32> to vector<8x2xf32>
    %152 = arith.addf %149, %151 : vector<8x2xf32>
    %c0_49 = arith.constant 0 : index
    %c0_50 = arith.constant 0 : index
    %153 = vector.load %arg9[%c0_49, %c0_50] : memref<8x2xf32, #tpu.memory_space<vmem>>, vector<8x2xf32>
    tpu.vector_store %arg9[%c0_49, %c0_50], %152 {strides = array<i32>} : memref<8x2xf32, #tpu.memory_space<vmem>>, vector<8x2xf32>,
    return
  }
}

</mosaic_0001>

<llo_original>
// kernel: validator_net_forward.4
$region0: #{validator_net_forward.4}
  #allocation0 [shape = 'u32[]', space=smem, size = 0x4, offset = 0x4, fixed_abs, tag = 'smem constant byte address 0x4 - core index']
  #allocation1 [shape = 'u32[144,128]{1,0:T(1,128)}', space=vmem, size = 0x12000, scoped, tag = 'internal scratch']
  %s0 = inlined_call_operand.vmem [shape: bf16[512,27], index: 0, kind: input, shape index: {}]
  %s1 = inlined_call_operand.vmem [shape: bf16[27,32], index: 1, kind: input, shape index: {}]
  %s2 = inlined_call_operand.vmem [shape: f32[1,32], index: 2, kind: input, shape index: {}]
  %s3 = inlined_call_operand.vmem [shape: bf16[512,32], index: 3, kind: output, shape index: {}]
  %s4 = sld [smem:[#allocation0]]
  $region22: #{validator_net_forward.4} parent=0
    _
  %s6 = ssub.s32 1, %s4
  %s7 = scalar_select 0, %s6, %s4
  // Predicated region
  $region2: #{validator_net_forward.4} parent=0 // pred_check
    _
  $region3: #{validator_net_forward.4} parent=0 // pred_check_branch
    %9 = sbr.rel (0) target = $region5
  $region4: #{validator_net_forward.4} parent=0 // pred_region
    _
  $region5: #{validator_net_forward.4} parent=0 // pred_fallthru
    _
  // Predicated region
  $region6: #{validator_net_forward.4} parent=0 // pred_check
    _
  $region7: #{validator_net_forward.4} parent=0 // pred_check_branch
    %11 = sbr.rel (0) target = $region9
  $region8: #{validator_net_forward.4} parent=0 // pred_region
    _
  $region9: #{validator_net_forward.4} parent=0 // pred_fallthru
    _
  // Predicated region
  $region10: #{validator_net_forward.4} parent=0 // pred_check
    _
  $region11: #{validator_net_forward.4} parent=0 // pred_check_branch
    %13 = sbr.rel (0) target = $region13
  $region12: #{validator_net_forward.4} parent=0 // pred_region
    _
  $region13: #{validator_net_forward.4} parent=0 // pred_fallthru
    _
  %v15 = vld [vmem:[%s0] sm:$0xf]
  %v16 = vld [vmem:[%s0 + $0x4] sm:$0xf]
  %v17 = vld [vmem:[%s0 + $0x8] sm:$0xf]
  %v18 = vld [vmem:[%s0 + $0xc] sm:$0xf]
  %v19 = vld [vmem:[%s0 + $0x10] sm:$0xf]
  %v20 = vld [vmem:[%s0 + $0x14] sm:$0xf]
  %v21 = vld [vmem:[%s0 + $0x18] sm:$0xf]
  %v22 = vld [vmem:[%s0 + $0x1c] sm:$0xf]
  %v23 = vld [vmem:[%s0 + $0x20] sm:$0xf]
  %v24 = vld [vmem:[%s0 + $0x24] sm:$0xf]
  %v25 = vld [vmem:[%s0 + $0x28] sm:$0xf]
  %v26 = vld [vmem:[%s0 + $0x2c] sm:$0xf]
  %v27 = vld [vmem:[%s0 + $0x30] sm:$0xf]
  %v28 = vld [vmem:[%s0 + $0x34] sm:$0xf]
  %v29 = vld [vmem:[%s0 + $0x38] sm:$0xf]
  %v30 = vld [vmem:[%s0 + $0x3c] sm:$0xf]
  %v31 = vld [vmem:[%s0 + $0x40] sm:$0xf]
  %v32 = vld [vmem:[%s0 + $0x44] sm:$0xf]
  %v33 = vld [vmem:[%s0 + $0x48] sm:$0xf]
  %v34 = vld [vmem:[%s0 + $0x4c] sm:$0xf]
  %v35 = vld [vmem:[%s0 + $0x50] sm:$0xf]
  %v36 = vld [vmem:[%s0 + $0x54] sm:$0xf]
  %v37 = vld [vmem:[%s0 + $0x58] sm:$0xf]
  %v38 = vld [vmem:[%s0 + $0x5c] sm:$0xf]
  %v39 = vld [vmem:[%s0 + $0x60] sm:$0xf]
  %v40 = vld [vmem:[%s0 + $0x64] sm:$0xf]
  %v41 = vld [vmem:[%s0 + $0x68] sm:$0xf]
  %v42 = vld [vmem:[%s0 + $0x6c] sm:$0xf]
  %v43 = vld [vmem:[%s0 + $0x70] sm:$0xf]
  %v44 = vld [vmem:[%s0 + $0x74] sm:$0xf]
  %v45 = vld [vmem:[%s0 + $0x78] sm:$0xf]
  %v46 = vld [vmem:[%s0 + $0x7c] sm:$0xf]
  %v47 = vld [vmem:[%s0 + $0x80] sm:$0xf]
  %v48 = vld [vmem:[%s0 + $0x84] sm:$0xf]
  %v49 = vld [vmem:[%s0 + $0x88] sm:$0xf]
  %v50 = vld [vmem:[%s0 + $0x8c] sm:$0xf]
  %v51 = vld [vmem:[%s0 + $0x90] sm:$0xf]
  %v52 = vld [vmem:[%s0 + $0x94] sm:$0xf]
  %v53 = vld [vmem:[%s0 + $0x98] sm:$0xf]
  %v54 = vld [vmem:[%s0 + $0x9c] sm:$0xf]
  %v55 = vld [vmem:[%s0 + $0xa0] sm:$0xf]
  %v56 = vld [vmem:[%s0 + $0xa4] sm:$0xf]
  %v57 = vld [vmem:[%s0 + $0xa8] sm:$0xf]
  %v58 = vld [vmem:[%s0 + $0xac] sm:$0xf]
  %v59 = vld [vmem:[%s0 + $0xb0] sm:$0xf]
  %v60 = vld [vmem:[%s0 + $0xb4] sm:$0xf]
  %v61 = vld [vmem:[%s0 + $0xb8] sm:$0xf]
  %v62 = vld [vmem:[%s0 + $0xbc] sm:$0xf]
  %v63 = vld [vmem:[%s0 + $0xc0] sm:$0xf]
  %v64 = vld [vmem:[%s0 + $0xc4] sm:$0xf]
  %v65 = vld [vmem:[%s0 + $0xc8] sm:$0xf]
  %v66 = vld [vmem:[%s0 + $0xcc] sm:$0xf]
  %v67 = vld [vmem:[%s0 + $0xd0] sm:$0xf]
  %v68 = vld [vmem:[%s0 + $0xd4] sm:$0xf]
  %v69 = vld [vmem:[%s0 + $0xd8] sm:$0xf]
  %v70 = vld [vmem:[%s0 + $0xdc] sm:$0xf]
  %v71 = vld [vmem:[%s0 + $0xe0] sm:$0xf]
  %v72 = vld [vmem:[%s0 + $0xe4] sm:$0xf]
  %v73 = vld [vmem:[%s0 + $0xe8] sm:$0xf]
  %v74 = vld [vmem:[%s0 + $0xec] sm:$0xf]
  %v75 = vld [vmem:[%s0 + $0xf0] sm:$0xf]
  %v76 = vld [vmem:[%s0 + $0xf4] sm:$0xf]
  %v77 = vld [vmem:[%s0 + $0xf8] sm:$0xf]
  %v78 = vld [vmem:[%s0 + $0xfc] sm:$0xf]
  %v79 = vld [vmem:[%s1] sm:$0xf]
  %v80 = vld [vmem:[%s1 + $0x4] sm:$0xf]
  %v81 = vld [vmem:[%s1 + $0x8] sm:$0xf]
  %v82 = vld [vmem:[%s1 + $0xc] sm:$0x3]
  %v83 = vld [vmem:[%s2] sm:$0x1]
  %v85 = vlaneseq
  %v86 = vshrl.u32 %v85, 7
  %v87 = vsub.s32 0, %v86
  %v88 = vrot.slane %v83, %v87
  %v154 = vunpack.c.l.b16 %v15
  %v155 = vunpack.c.l.b16 %v16
  %v156 = vunpack.c.l.b16 %v17
  %v157 = vunpack.c.l.b16 %v18
  %v158 = vunpack.c.l.b16 %v19
  %v159 = vunpack.c.l.b16 %v20
  %v160 = vunpack.c.l.b16 %v21
  %v161 = vunpack.c.l.b16 %v22
  %v162 = vunpack.c.l.b16 %v23
  %v163 = vunpack.c.l.b16 %v24
  %v164 = vunpack.c.l.b16 %v25
  %v165 = vunpack.c.l.b16 %v26
  %v166 = vunpack.c.l.b16 %v27
  %v167 = vunpack.c.l.b16 %v28
  %v168 = vunpack.c.l.b16 %v29
  %v169 = vunpack.c.l.b16 %v30
  %v170 = vunpack.c.l.b16 %v31
  %v171 = vunpack.c.l.b16 %v32
  %v172 = vunpack.c.l.b16 %v33
  %v173 = vunpack.c.l.b16 %v34
  %v174 = vunpack.c.l.b16 %v35
  %v175 = vunpack.c.l.b16 %v36
  %v176 = vunpack.c.l.b16 %v37
  %v177 = vunpack.c.l.b16 %v38
  %v178 = vunpack.c.l.b16 %v39
  %v179 = vunpack.c.l.b16 %v40
  %v180 = vunpack.c.l.b16 %v41
  %v181 = vunpack.c.l.b16 %v42
  %v182 = vunpack.c.l.b16 %v43
  %v183 = vunpack.c.l.b16 %v44
  %v184 = vunpack.c.l.b16 %v45
  %v185 = vunpack.c.l.b16 %v46
  %v186 = vunpack.c.l.b16 %v47
  %v187 = vunpack.c.l.b16 %v48
  %v188 = vunpack.c.l.b16 %v49
  %v189 = vunpack.c.l.b16 %v50
  %v190 = vunpack.c.l.b16 %v51
  %v191 = vunpack.c.l.b16 %v52
  %v192 = vunpack.c.l.b16 %v53
  %v193 = vunpack.c.l.b16 %v54
  %v194 = vunpack.c.l.b16 %v55
  %v195 = vunpack.c.l.b16 %v56
  %v196 = vunpack.c.l.b16 %v57
  %v197 = vunpack.c.l.b16 %v58
  %v198 = vunpack.c.l.b16 %v59
  %v199 = vunpack.c.l.b16 %v60
  %v200 = vunpack.c.l.b16 %v61
  %v201 = vunpack.c.l.b16 %v62
  %v202 = vunpack.c.l.b16 %v63
  %v203 = vunpack.c.l.b16 %v64
  %v204 = vunpack.c.l.b16 %v65
  %v205 = vunpack.c.l.b16 %v66
  %v206 = vunpack.c.l.b16 %v67
  %v207 = vunpack.c.l.b16 %v68
  %v208 = vunpack.c.l.b16 %v69
  %v209 = vunpack.c.l.b16 %v70
  %v210 = vunpack.c.l.b16 %v71
  %v211 = vunpack.c.l.b16 %v72
  %v212 = vunpack.c.l.b16 %v73
  %v213 = vunpack.c.l.b16 %v74
  %v214 = vunpack.c.l.b16 %v75
  %v215 = vunpack.c.l.b16 %v76
  %v216 = vunpack.c.l.b16 %v77
  %v217 = vunpack.c.l.b16 %v78
  %v218 = vpack.c.b16 %v155, %v154
  %v219 = vpack.c.b16 %v157, %v156
  %v220 = vpack.c.b16 %v159, %v158
  %v221 = vpack.c.b16 %v161, %v160
  %v222 = vpack.c.b16 %v163, %v162
  %v223 = vpack.c.b16 %v165, %v164
  %v224 = vpack.c.b16 %v167, %v166
  %v225 = vpack.c.b16 %v169, %v168
  %v226 = vpack.c.b16 %v171, %v170
  %v227 = vpack.c.b16 %v173, %v172
  %v228 = vpack.c.b16 %v175, %v174
  %v229 = vpack.c.b16 %v177, %v176
  %v230 = vpack.c.b16 %v179, %v178
  %v231 = vpack.c.b16 %v181, %v180
  %v232 = vpack.c.b16 %v183, %v182
  %v233 = vpack.c.b16 %v185, %v184
  %v234 = vpack.c.b16 %v187, %v186
  %v235 = vpack.c.b16 %v189, %v188
  %v236 = vpack.c.b16 %v191, %v190
  %v237 = vpack.c.b16 %v193, %v192
  %v238 = vpack.c.b16 %v195, %v194
  %v239 = vpack.c.b16 %v197, %v196
  %v240 = vpack.c.b16 %v199, %v198
  %v241 = vpack.c.b16 %v201, %v200
  %v242 = vpack.c.b16 %v203, %v202
  %v243 = vpack.c.b16 %v205, %v204
  %v244 = vpack.c.b16 %v207, %v206
  %v245 = vpack.c.b16 %v209, %v208
  %v246 = vpack.c.b16 %v211, %v210
  %v247 = vpack.c.b16 %v213, %v212
  %v248 = vpack.c.b16 %v215, %v214
  %v249 = vpack.c.b16 %v217, %v216
  %v254 = vunpack.c.l.b16 %v79
  %v255 = vunpack.c.l.b16 %v80
  %v256 = vunpack.c.l.b16 %v81
  %v257 = vunpack.c.l.b16 %v82
  %v258 = vpack.c.b16 %v255, %v254
  %v259 = vpack.c.b16 %v257, %v256
  %vm261 = vcmask 220160
  %v263 = vsel %vm261, %v218, 0
  %v266 = vsel %vm261, %v219, 0
  %v269 = vsel %vm261, %v220, 0
  %v272 = vsel %vm261, %v221, 0
  %v275 = vsel %vm261, %v222, 0
  %v278 = vsel %vm261, %v223, 0
  %v281 = vsel %vm261, %v224, 0
  %v284 = vsel %vm261, %v225, 0
  %v287 = vsel %vm261, %v226, 0
  %v290 = vsel %vm261, %v227, 0
  %v293 = vsel %vm261, %v228, 0
  %v296 = vsel %vm261, %v229, 0
  %v299 = vsel %vm261, %v230, 0
  %v302 = vsel %vm261, %v231, 0
  %v305 = vsel %vm261, %v232, 0
  %v308 = vsel %vm261, %v233, 0
  %v311 = vsel %vm261, %v234, 0
  %v314 = vsel %vm261, %v235, 0
  %v317 = vsel %vm261, %v236, 0
  %v320 = vsel %vm261, %v237, 0
  %v323 = vsel %vm261, %v238, 0
  %v326 = vsel %vm261, %v239, 0
  %v329 = vsel %vm261, %v240, 0
  %v332 = vsel %vm261, %v241, 0
  %v335 = vsel %vm261, %v242, 0
  %v338 = vsel %vm261, %v243, 0
  %v341 = vsel %vm261, %v244, 0
  %v344 = vsel %vm261, %v245, 0
  %v347 = vsel %vm261, %v246, 0
  %v350 = vsel %vm261, %v247, 0
  %v353 = vsel %vm261, %v248, 0
  %v356 = vsel %vm261, %v249, 0
  %vm358 = vcmask 1044480
  %vm359 = vcmask 1045504
  %v360 = vsel %vm358, 4294967295, 65535
  %v361 = vsel %vm359, %v360, 0
  %v363 = vand.u32 %v259, %v361
  %365 = vmatprep.subr.bf16.mxu0 0
  %366 = vmatpush1.bf16.msra.mxu0 0
  %367 = vmatprep.subr.bf16.mxu0 0
  %368 = vmatpush1.bf16.msra.mxu0 0
  %369 = vmatprep.subr.bf16.mxu0 0
  %370 = vmatpush1.bf16.msra.mxu0 0
  %371 = vmatprep.subr.bf16.mxu0 0
  %372 = vmatpush1.bf16.msra.mxu0 0
  %373 = vmatprep.subr.bf16.mxu0 0
  %374 = vmatpush1.bf16.msra.mxu0 0
  %375 = vmatprep.subr.bf16.mxu0 0
  %376 = vmatpush1.bf16.msra.mxu0 0
  %377 = vmatprep.subr.bf16.mxu0 0
  %378 = vmatpush1.bf16.msra.mxu0 %v363
  %379 = vmatprep.subr.bf16.mxu0 0
  %380 = vmatpush1.bf16.msra.mxu0 %v258
  %381 = vmatprep.subr.bf16.mxu0 0
  %382 = vmatpush2.bf16.msra.mxu0 0
  %383 = vmatprep.subr.bf16.mxu0 0
  %384 = vmatpush2.bf16.msra.mxu0 0
  %385 = vmatprep.subr.bf16.mxu0 0
  %386 = vmatpush2.bf16.msra.mxu0 0
  %387 = vmatprep.subr.bf16.mxu0 0
  %388 = vmatpush2.bf16.msra.mxu0 0
  %389 = vmatprep.subr.bf16.mxu0 0
  %390 = vmatpush2.bf16.msra.mxu0 0
  %391 = vmatprep.subr.bf16.mxu0 0
  %392 = vmatpush2.bf16.msra.mxu0 0
  %393 = vmatprep.subr.bf16.mxu0 0
  %394 = vmatpush2.bf16.msra.mxu0 0
  %395 = vmatprep.subr.bf16.mxu0 0
  %396 = vmatpush2.bf16.msra.mxu0 0
  %397 = vmatprep.mubr.bf16.mxu0 0
  %398 = vmatmul.mubr.bf16.gmra.mxu0 %v263
  %v399 = vpop.f32.mrf.mxu0
  %v400 = vadd.f32 %v88, %v399
  %v401 = vpop.f32.mrf.mxu0
  %v402 = vpop.f32.mrf.mxu0
  %v403 = vadd.f32 %v88, %v402
  %v404 = vpop.f32.mrf.mxu0
  %405 = vmatprep.mubr.bf16.mxu0 0
  %406 = vmatmul.mubr.bf16.gmra.mxu0 %v266
  %v407 = vpop.f32.mrf.mxu0
  %v408 = vadd.f32 %v88, %v407
  %v409 = vpop.f32.mrf.mxu0
  %v410 = vpop.f32.mrf.mxu0
  %v411 = vadd.f32 %v88, %v410
  %v412 = vpop.f32.mrf.mxu0
  %413 = vmatprep.mubr.bf16.mxu0 0
  %414 = vmatmul.mubr.bf16.gmra.mxu0 %v269
  %v415 = vpop.f32.mrf.mxu0
  %v416 = vadd.f32 %v88, %v415
  %v417 = vpop.f32.mrf.mxu0
  %v418 = vpop.f32.mrf.mxu0
  %v419 = vadd.f32 %v88, %v418
  %v420 = vpop.f32.mrf.mxu0
  %421 = vmatprep.mubr.bf16.mxu0 0
  %422 = vmatmul.mubr.bf16.gmra.mxu0 %v272
  %v423 = vpop.f32.mrf.mxu0
  %v424 = vadd.f32 %v88, %v423
  %v425 = vpop.f32.mrf.mxu0
  %v426 = vpop.f32.mrf.mxu0
  %v427 = vadd.f32 %v88, %v426
  %v428 = vpop.f32.mrf.mxu0
  %429 = vmatprep.mubr.bf16.mxu0 0
  %430 = vmatmul.mubr.bf16.gmra.mxu0 %v275
  %v431 = vpop.f32.mrf.mxu0
  %v432 = vadd.f32 %v88, %v431
  %v433 = vpop.f32.mrf.mxu0
  %v434 = vpop.f32.mrf.mxu0
  %v435 = vadd.f32 %v88, %v434
  %v436 = vpop.f32.mrf.mxu0
  %437 = vmatprep.mubr.bf16.mxu0 0
  %438 = vmatmul.mubr.bf16.gmra.mxu0 %v278
  %v439 = vpop.f32.mrf.mxu0
  %v440 = vadd.f32 %v88, %v439
  %v441 = vpop.f32.mrf.mxu0
  %v442 = vpop.f32.mrf.mxu0
  %v443 = vadd.f32 %v88, %v442
  %v444 = vpop.f32.mrf.mxu0
  %445 = vmatprep.mubr.bf16.mxu0 0
  %446 = vmatmul.mubr.bf16.gmra.mxu0 %v281
  %v447 = vpop.f32.mrf.mxu0
  %v448 = vadd.f32 %v88, %v447
  %v449 = vpop.f32.mrf.mxu0
  %v450 = vpop.f32.mrf.mxu0
  %v451 = vadd.f32 %v88, %v450
  %v452 = vpop.f32.mrf.mxu0
  %453 = vmatprep.mubr.bf16.mxu0 0
  %454 = vmatmul.mubr.bf16.gmra.mxu0 %v284
  %v455 = vpop.f32.mrf.mxu0
  %v456 = vadd.f32 %v88, %v455
  %v457 = vpop.f32.mrf.mxu0
  %v458 = vpop.f32.mrf.mxu0
  %v459 = vadd.f32 %v88, %v458
  %v460 = vpop.f32.mrf.mxu0
  %461 = vmatprep.mubr.bf16.mxu0 0
  %462 = vmatmul.mubr.bf16.gmra.mxu0 %v287
  %v463 = vpop.f32.mrf.mxu0
  %v464 = vadd.f32 %v88, %v463
  %v465 = vpop.f32.mrf.mxu0
  %v466 = vpop.f32.mrf.mxu0
  %v467 = vadd.f32 %v88, %v466
  %v468 = vpop.f32.mrf.mxu0
  %469 = vmatprep.mubr.bf16.mxu0 0
  %470 = vmatmul.mubr.bf16.gmra.mxu0 %v290
  %v471 = vpop.f32.mrf.mxu0
  %v472 = vadd.f32 %v88, %v471
  %v473 = vpop.f32.mrf.mxu0
  %v474 = vpop.f32.mrf.mxu0
  %v475 = vadd.f32 %v88, %v474
  %v476 = vpop.f32.mrf.mxu0
  %477 = vmatprep.mubr.bf16.mxu0 0
  %478 = vmatmul.mubr.bf16.gmra.mxu0 %v293
  %v479 = vpop.f32.mrf.mxu0
  %v480 = vadd.f32 %v88, %v479
  %v481 = vpop.f32.mrf.mxu0
  %v482 = vpop.f32.mrf.mxu0
  %v483 = vadd.f32 %v88, %v482
  %v484 = vpop.f32.mrf.mxu0
  %485 = vmatprep.mubr.bf16.mxu0 0
  %486 = vmatmul.mubr.bf16.gmra.mxu0 %v296
  %v487 = vpop.f32.mrf.mxu0
  %v488 = vadd.f32 %v88, %v487
  %v489 = vpop.f32.mrf.mxu0
  %v490 = vpop.f32.mrf.mxu0
  %v491 = vadd.f32 %v88, %v490
  %v492 = vpop.f32.mrf.mxu0
  %493 = vmatprep.mubr.bf16.mxu0 0
  %494 = vmatmul.mubr.bf16.gmra.mxu0 %v299
  %v495 = vpop.f32.mrf.mxu0
  %v496 = vadd.f32 %v88, %v495
  %v497 = vpop.f32.mrf.mxu0
  %v498 = vpop.f32.mrf.mxu0
  %v499 = vadd.f32 %v88, %v498
  %v500 = vpop.f32.mrf.mxu0
  %501 = vmatprep.mubr.bf16.mxu0 0
  %502 = vmatmul.mubr.bf16.gmra.mxu0 %v302
  %v503 = vpop.f32.mrf.mxu0
  %v504 = vadd.f32 %v88, %v503
  %v505 = vpop.f32.mrf.mxu0
  %v506 = vpop.f32.mrf.mxu0
  %v507 = vadd.f32 %v88, %v506
  %v508 = vpop.f32.mrf.mxu0
  %509 = vmatprep.mubr.bf16.mxu0 0
  %510 = vmatmul.mubr.bf16.gmra.mxu0 %v305
  %v511 = vpop.f32.mrf.mxu0
  %v512 = vadd.f32 %v88, %v511
  %v513 = vpop.f32.mrf.mxu0
  %v514 = vpop.f32.mrf.mxu0
  %v515 = vadd.f32 %v88, %v514
  %v516 = vpop.f32.mrf.mxu0
  %517 = vmatprep.mubr.bf16.mxu0 0
  %518 = vmatmul.mubr.bf16.gmra.mxu0 %v308
  %v519 = vpop.f32.mrf.mxu0
  %v520 = vadd.f32 %v88, %v519
  %v521 = vpop.f32.mrf.mxu0
  %v522 = vpop.f32.mrf.mxu0
  %v523 = vadd.f32 %v88, %v522
  %v524 = vpop.f32.mrf.mxu0
  %525 = vmatprep.mubr.bf16.mxu0 0
  %526 = vmatmul.mubr.bf16.gmra.mxu0 %v311
  %v527 = vpop.f32.mrf.mxu0
  %v528 = vadd.f32 %v88, %v527
  %v529 = vpop.f32.mrf.mxu0
  %v530 = vpop.f32.mrf.mxu0
  %v531 = vadd.f32 %v88, %v530
  %v532 = vpop.f32.mrf.mxu0
  %533 = vmatprep.mubr.bf16.mxu0 0
  %534 = vmatmul.mubr.bf16.gmra.mxu0 %v314
  %v535 = vpop.f32.mrf.mxu0
  %v536 = vadd.f32 %v88, %v535
  %v537 = vpop.f32.mrf.mxu0
  %v538 = vpop.f32.mrf.mxu0
  %v539 = vadd.f32 %v88, %v538
  %v540 = vpop.f32.mrf.mxu0
  %541 = vmatprep.mubr.bf16.mxu0 0
  %542 = vmatmul.mubr.bf16.gmra.mxu0 %v317
  %v543 = vpop.f32.mrf.mxu0
  %v544 = vadd.f32 %v88, %v543
  %v545 = vpop.f32.mrf.mxu0
  %v546 = vpop.f32.mrf.mxu0
  %v547 = vadd.f32 %v88, %v546
  %v548 = vpop.f32.mrf.mxu0
  %549 = vmatprep.mubr.bf16.mxu0 0
  %550 = vmatmul.mubr.bf16.gmra.mxu0 %v320
  %v551 = vpop.f32.mrf.mxu0
  %v552 = vadd.f32 %v88, %v551
  %v553 = vpop.f32.mrf.mxu0
  %v554 = vpop.f32.mrf.mxu0
  %v555 = vadd.f32 %v88, %v554
  %v556 = vpop.f32.mrf.mxu0
  %557 = vmatprep.mubr.bf16.mxu0 0
  %558 = vmatmul.mubr.bf16.gmra.mxu0 %v323
  %v559 = vpop.f32.mrf.mxu0
  %v560 = vadd.f32 %v88, %v559
  %v561 = vpop.f32.mrf.mxu0
  %v562 = vpop.f32.mrf.mxu0
  %v563 = vadd.f32 %v88, %v562
  %v564 = vpop.f32.mrf.mxu0
  %565 = vmatprep.mubr.bf16.mxu0 0
  %566 = vmatmul.mubr.bf16.gmra.mxu0 %v326
  %v567 = vpop.f32.mrf.mxu0
  %v568 = vadd.f32 %v88, %v567
  %v569 = vpop.f32.mrf.mxu0
  %v570 = vpop.f32.mrf.mxu0
  %v571 = vadd.f32 %v88, %v570
  %v572 = vpop.f32.mrf.mxu0
  %573 = vmatprep.mubr.bf16.mxu0 0
  %574 = vmatmul.mubr.bf16.gmra.mxu0 %v329
  %v575 = vpop.f32.mrf.mxu0
  %v576 = vadd.f32 %v88, %v575
  %v577 = vpop.f32.mrf.mxu0
  %v578 = vpop.f32.mrf.mxu0
  %v579 = vadd.f32 %v88, %v578
  %v580 = vpop.f32.mrf.mxu0
  %581 = vmatprep.mubr.bf16.mxu0 0
  %582 = vmatmul.mubr.bf16.gmra.mxu0 %v332
  %v583 = vpop.f32.mrf.mxu0
  %v584 = vadd.f32 %v88, %v583
  %v585 = vpop.f32.mrf.mxu0
  %v586 = vpop.f32.mrf.mxu0
  %v587 = vadd.f32 %v88, %v586
  %v588 = vpop.f32.mrf.mxu0
  %589 = vmatprep.mubr.bf16.mxu0 0
  %590 = vmatmul.mubr.bf16.gmra.mxu0 %v335
  %v591 = vpop.f32.mrf.mxu0
  %v592 = vadd.f32 %v88, %v591
  %v593 = vpop.f32.mrf.mxu0
  %v594 = vpop.f32.mrf.mxu0
  %v595 = vadd.f32 %v88, %v594
  %v596 = vpop.f32.mrf.mxu0
  %597 = vmatprep.mubr.bf16.mxu0 0
  %598 = vmatmul.mubr.bf16.gmra.mxu0 %v338
  %v599 = vpop.f32.mrf.mxu0
  %v600 = vadd.f32 %v88, %v599
  %v601 = vpop.f32.mrf.mxu0
  %v602 = vpop.f32.mrf.mxu0
  %v603 = vadd.f32 %v88, %v602
  %v604 = vpop.f32.mrf.mxu0
  %605 = vmatprep.mubr.bf16.mxu0 0
  %606 = vmatmul.mubr.bf16.gmra.mxu0 %v341
  %v607 = vpop.f32.mrf.mxu0
  %v608 = vadd.f32 %v88, %v607
  %v609 = vpop.f32.mrf.mxu0
  %v610 = vpop.f32.mrf.mxu0
  %v611 = vadd.f32 %v88, %v610
  %v612 = vpop.f32.mrf.mxu0
  %613 = vmatprep.mubr.bf16.mxu0 0
  %614 = vmatmul.mubr.bf16.gmra.mxu0 %v344
  %v615 = vpop.f32.mrf.mxu0
  %v616 = vadd.f32 %v88, %v615
  %v617 = vpop.f32.mrf.mxu0
  %v618 = vpop.f32.mrf.mxu0
  %v619 = vadd.f32 %v88, %v618
  %v620 = vpop.f32.mrf.mxu0
  %621 = vmatprep.mubr.bf16.mxu0 0
  %622 = vmatmul.mubr.bf16.gmra.mxu0 %v347
  %v623 = vpop.f32.mrf.mxu0
  %v624 = vadd.f32 %v88, %v623
  %v625 = vpop.f32.mrf.mxu0
  %v626 = vpop.f32.mrf.mxu0
  %v627 = vadd.f32 %v88, %v626
  %v628 = vpop.f32.mrf.mxu0
  %629 = vmatprep.mubr.bf16.mxu0 0
  %630 = vmatmul.mubr.bf16.gmra.mxu0 %v350
  %v631 = vpop.f32.mrf.mxu0
  %v632 = vadd.f32 %v88, %v631
  %v633 = vpop.f32.mrf.mxu0
  %v634 = vpop.f32.mrf.mxu0
  %v635 = vadd.f32 %v88, %v634
  %v636 = vpop.f32.mrf.mxu0
  %637 = vmatprep.mubr.bf16.mxu0 0
  %638 = vmatmul.mubr.bf16.gmra.mxu0 %v353
  %v639 = vpop.f32.mrf.mxu0
  %v640 = vadd.f32 %v88, %v639
  %v641 = vpop.f32.mrf.mxu0
  %v642 = vpop.f32.mrf.mxu0
  %v643 = vadd.f32 %v88, %v642
  %v644 = vpop.f32.mrf.mxu0
  %645 = vmatprep.mubr.bf16.mxu0 0
  %646 = vmatmul.mubr.bf16.gmra.mxu0 %v356
  %v647 = vpop.f32.mrf.mxu0
  %v648 = vadd.f32 %v88, %v647
  %v649 = vpop.f32.mrf.mxu0
  %v650 = vpop.f32.mrf.mxu0
  %v651 = vadd.f32 %v88, %v650
  %v652 = vpop.f32.mrf.mxu0
  %653 = vdwg.mxu0
  %v654 = vmax.f32 %v400, 0.0
  %v655 = vmax.f32 %v403, 0.0
  %v656 = vmax.f32 %v408, 0.0
  %v657 = vmax.f32 %v411, 0.0
  %v658 = vmax.f32 %v416, 0.0
  %v659 = vmax.f32 %v419, 0.0
  %v660 = vmax.f32 %v424, 0.0
  %v661 = vmax.f32 %v427, 0.0
  %v662 = vmax.f32 %v432, 0.0
  %v663 = vmax.f32 %v435, 0.0
  %v664 = vmax.f32 %v440, 0.0
  %v665 = vmax.f32 %v443, 0.0
  %v666 = vmax.f32 %v448, 0.0
  %v667 = vmax.f32 %v451, 0.0
  %v668 = vmax.f32 %v456, 0.0
  %v669 = vmax.f32 %v459, 0.0
  %v670 = vmax.f32 %v464, 0.0
  %v671 = vmax.f32 %v467, 0.0
  %v672 = vmax.f32 %v472, 0.0
  %v673 = vmax.f32 %v475, 0.0
  %v674 = vmax.f32 %v480, 0.0
  %v675 = vmax.f32 %v483, 0.0
  %v676 = vmax.f32 %v488, 0.0
  %v677 = vmax.f32 %v491, 0.0
  %v678 = vmax.f32 %v496, 0.0
  %v679 = vmax.f32 %v499, 0.0
  %v680 = vmax.f32 %v504, 0.0
  %v681 = vmax.f32 %v507, 0.0
  %v682 = vmax.f32 %v512, 0.0
  %v683 = vmax.f32 %v515, 0.0
  %v684 = vmax.f32 %v520, 0.0
  %v685 = vmax.f32 %v523, 0.0
  %v686 = vmax.f32 %v528, 0.0
  %v687 = vmax.f32 %v531, 0.0
  %v688 = vmax.f32 %v536, 0.0
  %v689 = vmax.f32 %v539, 0.0
  %v690 = vmax.f32 %v544, 0.0
  %v691 = vmax.f32 %v547, 0.0
  %v692 = vmax.f32 %v552, 0.0
  %v693 = vmax.f32 %v555, 0.0
  %v694 = vmax.f32 %v560, 0.0
  %v695 = vmax.f32 %v563, 0.0
  %v696 = vmax.f32 %v568, 0.0
  %v697 = vmax.f32 %v571, 0.0
  %v698 = vmax.f32 %v576, 0.0
  %v699 = vmax.f32 %v579, 0.0
  %v700 = vmax.f32 %v584, 0.0
  %v701 = vmax.f32 %v587, 0.0
  %v702 = vmax.f32 %v592, 0.0
  %v703 = vmax.f32 %v595, 0.0
  %v704 = vmax.f32 %v600, 0.0
  %v705 = vmax.f32 %v603, 0.0
  %v706 = vmax.f32 %v608, 0.0
  %v707 = vmax.f32 %v611, 0.0
  %v708 = vmax.f32 %v616, 0.0
  %v709 = vmax.f32 %v619, 0.0
  %v710 = vmax.f32 %v624, 0.0
  %v711 = vmax.f32 %v627, 0.0
  %v712 = vmax.f32 %v632, 0.0
  %v713 = vmax.f32 %v635, 0.0
  %v714 = vmax.f32 %v640, 0.0
  %v715 = vmax.f32 %v643, 0.0
  %v716 = vmax.f32 %v648, 0.0
  %v717 = vmax.f32 %v651, 0.0
  %v718 = vpack.c.bf16 %v655, %v654
  %v719 = vpack.c.bf16 %v657, %v656
  %v720 = vpack.c.bf16 %v659, %v658
  %v721 = vpack.c.bf16 %v661, %v660
  %v722 = vpack.c.bf16 %v663, %v662
  %v723 = vpack.c.bf16 %v665, %v664
  %v724 = vpack.c.bf16 %v667, %v666
  %v725 = vpack.c.bf16 %v669, %v668
  %v726 = vpack.c.bf16 %v671, %v670
  %v727 = vpack.c.bf16 %v673, %v672
  %v728 = vpack.c.bf16 %v675, %v674
  %v729 = vpack.c.bf16 %v677, %v676
  %v730 = vpack.c.bf16 %v679, %v678
  %v731 = vpack.c.bf16 %v681, %v680
  %v732 = vpack.c.bf16 %v683, %v682
  %v733 = vpack.c.bf16 %v685, %v684
  %v734 = vpack.c.bf16 %v687, %v686
  %v735 = vpack.c.bf16 %v689, %v688
  %v736 = vpack.c.bf16 %v691, %v690
  %v737 = vpack.c.bf16 %v693, %v692
  %v738 = vpack.c.bf16 %v695, %v694
  %v739 = vpack.c.bf16 %v697, %v696
  %v740 = vpack.c.bf16 %v699, %v698
  %v741 = vpack.c.bf16 %v701, %v700
  %v742 = vpack.c.bf16 %v703, %v702
  %v743 = vpack.c.bf16 %v705, %v704
  %v744 = vpack.c.bf16 %v707, %v706
  %v745 = vpack.c.bf16 %v709, %v708
  %v746 = vpack.c.bf16 %v711, %v710
  %v747 = vpack.c.bf16 %v713, %v712
  %v748 = vpack.c.bf16 %v715, %v714
  %v749 = vpack.c.bf16 %v717, %v716
  %v782 = vunpack.c.l.b16 %v718
  %v783 = vunpack.c.h.b16 %v718
  %v784 = vunpack.c.l.b16 %v719
  %v785 = vunpack.c.h.b16 %v719
  %v786 = vunpack.c.l.b16 %v720
  %v787 = vunpack.c.h.b16 %v720
  %v788 = vunpack.c.l.b16 %v721
  %v789 = vunpack.c.h.b16 %v721
  %v790 = vunpack.c.l.b16 %v722
  %v791 = vunpack.c.h.b16 %v722
  %v792 = vunpack.c.l.b16 %v723
  %v793 = vunpack.c.h.b16 %v723
  %v794 = vunpack.c.l.b16 %v724
  %v795 = vunpack.c.h.b16 %v724
  %v796 = vunpack.c.l.b16 %v725
  %v797 = vunpack.c.h.b16 %v725
  %v798 = vunpack.c.l.b16 %v726
  %v799 = vunpack.c.h.b16 %v726
  %v800 = vunpack.c.l.b16 %v727
  %v801 = vunpack.c.h.b16 %v727
  %v802 = vunpack.c.l.b16 %v728
  %v803 = vunpack.c.h.b16 %v728
  %v804 = vunpack.c.l.b16 %v729
  %v805 = vunpack.c.h.b16 %v729
  %v806 = vunpack.c.l.b16 %v730
  %v807 = vunpack.c.h.b16 %v730
  %v808 = vunpack.c.l.b16 %v731
  %v809 = vunpack.c.h.b16 %v731
  %v810 = vunpack.c.l.b16 %v732
  %v811 = vunpack.c.h.b16 %v732
  %v812 = vunpack.c.l.b16 %v733
  %v813 = vunpack.c.h.b16 %v733
  %v814 = vunpack.c.l.b16 %v734
  %v815 = vunpack.c.h.b16 %v734
  %v816 = vunpack.c.l.b16 %v735
  %v817 = vunpack.c.h.b16 %v735
  %v818 = vunpack.c.l.b16 %v736
  %v819 = vunpack.c.h.b16 %v736
  %v820 = vunpack.c.l.b16 %v737
  %v821 = vunpack.c.h.b16 %v737
  %v822 = vunpack.c.l.b16 %v738
  %v823 = vunpack.c.h.b16 %v738
  %v824 = vunpack.c.l.b16 %v739
  %v825 = vunpack.c.h.b16 %v739
  %v826 = vunpack.c.l.b16 %v740
  %v827 = vunpack.c.h.b16 %v740
  %v828 = vunpack.c.l.b16 %v741
  %v829 = vunpack.c.h.b16 %v741
  %v830 = vunpack.c.l.b16 %v742
  %v831 = vunpack.c.h.b16 %v742
  %v832 = vunpack.c.l.b16 %v743
  %v833 = vunpack.c.h.b16 %v743
  %v834 = vunpack.c.l.b16 %v744
  %v835 = vunpack.c.h.b16 %v744
  %v836 = vunpack.c.l.b16 %v745
  %v837 = vunpack.c.h.b16 %v745
  %v838 = vunpack.c.l.b16 %v746
  %v839 = vunpack.c.h.b16 %v746
  %v840 = vunpack.c.l.b16 %v747
  %v841 = vunpack.c.h.b16 %v747
  %v842 = vunpack.c.l.b16 %v748
  %v843 = vunpack.c.h.b16 %v748
  %v844 = vunpack.c.l.b16 %v749
  %v845 = vunpack.c.h.b16 %v749
  %v846 = vpack.c.b16 %v782, %v782
  %v847 = vpack.c.b16 %v783, %v783
  %v848 = vpack.c.b16 %v784, %v784
  %v849 = vpack.c.b16 %v785, %v785
  %v850 = vpack.c.b16 %v786, %v786
  %v851 = vpack.c.b16 %v787, %v787
  %v852 = vpack.c.b16 %v788, %v788
  %v853 = vpack.c.b16 %v789, %v789
  %v854 = vpack.c.b16 %v790, %v790
  %v855 = vpack.c.b16 %v791, %v791
  %v856 = vpack.c.b16 %v792, %v792
  %v857 = vpack.c.b16 %v793, %v793
  %v858 = vpack.c.b16 %v794, %v794
  %v859 = vpack.c.b16 %v795, %v795
  %v860 = vpack.c.b16 %v796, %v796
  %v861 = vpack.c.b16 %v797, %v797
  %v862 = vpack.c.b16 %v798, %v798
  %v863 = vpack.c.b16 %v799, %v799
  %v864 = vpack.c.b16 %v800, %v800
  %v865 = vpack.c.b16 %v801, %v801
  %v866 = vpack.c.b16 %v802, %v802
  %v867 = vpack.c.b16 %v803, %v803
  %v868 = vpack.c.b16 %v804, %v804
  %v869 = vpack.c.b16 %v805, %v805
  %v870 = vpack.c.b16 %v806, %v806
  %v871 = vpack.c.b16 %v807, %v807
  %v872 = vpack.c.b16 %v808, %v808
  %v873 = vpack.c.b16 %v809, %v809
  %v874 = vpack.c.b16 %v810, %v810
  %v875 = vpack.c.b16 %v811, %v811
  %v876 = vpack.c.b16 %v812, %v812
  %v877 = vpack.c.b16 %v813, %v813
  %v878 = vpack.c.b16 %v814, %v814
  %v879 = vpack.c.b16 %v815, %v815
  %v880 = vpack.c.b16 %v816, %v816
  %v881 = vpack.c.b16 %v817, %v817
  %v882 = vpack.c.b16 %v818, %v818
  %v883 = vpack.c.b16 %v819, %v819
  %v884 = vpack.c.b16 %v820, %v820
  %v885 = vpack.c.b16 %v821, %v821
  %v886 = vpack.c.b16 %v822, %v822
  %v887 = vpack.c.b16 %v823, %v823
  %v888 = vpack.c.b16 %v824, %v824
  %v889 = vpack.c.b16 %v825, %v825
  %v890 = vpack.c.b16 %v826, %v826
  %v891 = vpack.c.b16 %v827, %v827
  %v892 = vpack.c.b16 %v828, %v828
  %v893 = vpack.c.b16 %v829, %v829
  %v894 = vpack.c.b16 %v830, %v830
  %v895 = vpack.c.b16 %v831, %v831
  %v896 = vpack.c.b16 %v832, %v832
  %v897 = vpack.c.b16 %v833, %v833
  %v898 = vpack.c.b16 %v834, %v834
  %v899 = vpack.c.b16 %v835, %v835
  %v900 = vpack.c.b16 %v836, %v836
  %v901 = vpack.c.b16 %v837, %v837
  %v902 = vpack.c.b16 %v838, %v838
  %v903 = vpack.c.b16 %v839, %v839
  %v904 = vpack.c.b16 %v840, %v840
  %v905 = vpack.c.b16 %v841, %v841
  %v906 = vpack.c.b16 %v842, %v842
  %v907 = vpack.c.b16 %v843, %v843
  %v908 = vpack.c.b16 %v844, %v844
  %v909 = vpack.c.b16 %v845, %v845
  %vm974 = vcmask 257024
  %975 = vst.msk [vmem:[%s3] sm:$0xf] %vm974, %v846
  %976 = vst.msk [vmem:[%s3 + $0x4] sm:$0xf] %vm974, %v847
  %977 = vst.msk [vmem:[%s3 + $0x8] sm:$0xf] %vm974, %v848
  %978 = vst.msk [vmem:[%s3 + $0xc] sm:$0xf] %vm974, %v849
  %979 = vst.msk [vmem:[%s3 + $0x10] sm:$0xf] %vm974, %v850
  %980 = vst.msk [vmem:[%s3 + $0x14] sm:$0xf] %vm974, %v851
  %981 = vst.msk [vmem:[%s3 + $0x18] sm:$0xf] %vm974, %v852
  %982 = vst.msk [vmem:[%s3 + $0x1c] sm:$0xf] %vm974, %v853
  %983 = vst.msk [vmem:[%s3 + $0x20] sm:$0xf] %vm974, %v854
  %984 = vst.msk [vmem:[%s3 + $0x24] sm:$0xf] %vm974, %v855
  %985 = vst.msk [vmem:[%s3 + $0x28] sm:$0xf] %vm974, %v856
  %986 = vst.msk [vmem:[%s3 + $0x2c] sm:$0xf] %vm974, %v857
  %987 = vst.msk [vmem:[%s3 + $0x30] sm:$0xf] %vm974, %v858
  %988 = vst.msk [vmem:[%s3 + $0x34] sm:$0xf] %vm974, %v859
  %989 = vst.msk [vmem:[%s3 + $0x38] sm:$0xf] %vm974, %v860
  %990 = vst.msk [vmem:[%s3 + $0x3c] sm:$0xf] %vm974, %v861
  %991 = vst.msk [vmem:[%s3 + $0x40] sm:$0xf] %vm974, %v862
  %992 = vst.msk [vmem:[%s3 + $0x44] sm:$0xf] %vm974, %v863
  %993 = vst.msk [vmem:[%s3 + $0x48] sm:$0xf] %vm974, %v864
  %994 = vst.msk [vmem:[%s3 + $0x4c] sm:$0xf] %vm974, %v865
  %995 = vst.msk [vmem:[%s3 + $0x50] sm:$0xf] %vm974, %v866
  %996 = vst.msk [vmem:[%s3 + $0x54] sm:$0xf] %vm974, %v867
  %997 = vst.msk [vmem:[%s3 + $0x58] sm:$0xf] %vm974, %v868
  %998 = vst.msk [vmem:[%s3 + $0x5c] sm:$0xf] %vm974, %v869
  %999 = vst.msk [vmem:[%s3 + $0x60] sm:$0xf] %vm974, %v870
  %1000 = vst.msk [vmem:[%s3 + $0x64] sm:$0xf] %vm974, %v871
  %1001 = vst.msk [vmem:[%s3 + $0x68] sm:$0xf] %vm974, %v872
  %1002 = vst.msk [vmem:[%s3 + $0x6c] sm:$0xf] %vm974, %v873
  %1003 = vst.msk [vmem:[%s3 + $0x70] sm:$0xf] %vm974, %v874
  %1004 = vst.msk [vmem:[%s3 + $0x74] sm:$0xf] %vm974, %v875
  %1005 = vst.msk [vmem:[%s3 + $0x78] sm:$0xf] %vm974, %v876
  %1006 = vst.msk [vmem:[%s3 + $0x7c] sm:$0xf] %vm974, %v877
  %1007 = vst.msk [vmem:[%s3 + $0x80] sm:$0xf] %vm974, %v878
  %1008 = vst.msk [vmem:[%s3 + $0x84] sm:$0xf] %vm974, %v879
  %1009 = vst.msk [vmem:[%s3 + $0x88] sm:$0xf] %vm974, %v880
  %1010 = vst.msk [vmem:[%s3 + $0x8c] sm:$0xf] %vm974, %v881
  %1011 = vst.msk [vmem:[%s3 + $0x90] sm:$0xf] %vm974, %v882
  %1012 = vst.msk [vmem:[%s3 + $0x94] sm:$0xf] %vm974, %v883
  %1013 = vst.msk [vmem:[%s3 + $0x98] sm:$0xf] %vm974, %v884
  %1014 = vst.msk [vmem:[%s3 + $0x9c] sm:$0xf] %vm974, %v885
  %1015 = vst.msk [vmem:[%s3 + $0xa0] sm:$0xf] %vm974, %v886
  %1016 = vst.msk [vmem:[%s3 + $0xa4] sm:$0xf] %vm974, %v887
  %1017 = vst.msk [vmem:[%s3 + $0xa8] sm:$0xf] %vm974, %v888
  %1018 = vst.msk [vmem:[%s3 + $0xac] sm:$0xf] %vm974, %v889
  %1019 = vst.msk [vmem:[%s3 + $0xb0] sm:$0xf] %vm974, %v890
  %1020 = vst.msk [vmem:[%s3 + $0xb4] sm:$0xf] %vm974, %v891
  %1021 = vst.msk [vmem:[%s3 + $0xb8] sm:$0xf] %vm974, %v892
  %1022 = vst.msk [vmem:[%s3 + $0xbc] sm:$0xf] %vm974, %v893
  %1023 = vst.msk [vmem:[%s3 + $0xc0] sm:$0xf] %vm974, %v894
  %1024 = vst.msk [vmem:[%s3 + $0xc4] sm:$0xf] %vm974, %v895
  %1025 = vst.msk [vmem:[%s3 + $0xc8] sm:$0xf] %vm974, %v896
  %1026 = vst.msk [vmem:[%s3 + $0xcc] sm:$0xf] %vm974, %v897
  %1027 = vst.msk [vmem:[%s3 + $0xd0] sm:$0xf] %vm974, %v898
  %1028 = vst.msk [vmem:[%s3 + $0xd4] sm:$0xf] %vm974, %v899
  %1029 = vst.msk [vmem:[%s3 + $0xd8] sm:$0xf] %vm974, %v900
  %1030 = vst.msk [vmem:[%s3 + $0xdc] sm:$0xf] %vm974, %v901
  %1031 = vst.msk [vmem:[%s3 + $0xe0] sm:$0xf] %vm974, %v902
  %1032 = vst.msk [vmem:[%s3 + $0xe4] sm:$0xf] %vm974, %v903
  %1033 = vst.msk [vmem:[%s3 + $0xe8] sm:$0xf] %vm974, %v904
  %1034 = vst.msk [vmem:[%s3 + $0xec] sm:$0xf] %vm974, %v905
  %1035 = vst.msk [vmem:[%s3 + $0xf0] sm:$0xf] %vm974, %v906
  %1036 = vst.msk [vmem:[%s3 + $0xf4] sm:$0xf] %vm974, %v907
  %1037 = vst.msk [vmem:[%s3 + $0xf8] sm:$0xf] %vm974, %v908
  %1038 = vst.msk [vmem:[%s3 + $0xfc] sm:$0xf] %vm974, %v909
  // Predicated region
  $region14: #{validator_net_forward.4} parent=0 // pred_check
    _
  $region15: #{validator_net_forward.4} parent=0 // pred_check_branch
    %1040 = sbr.rel (0) target = $region17
  $region16: #{validator_net_forward.4} parent=0 // pred_region
    _
  $region17: #{validator_net_forward.4} parent=0 // pred_fallthru
    _
  // Predicated region
  $region18: #{validator_net_forward.4} parent=0 // pred_check
    _
  $region19: #{validator_net_forward.4} parent=0 // pred_check_branch
    %1042 = sbr.rel (0) target = $region21
  $region20: #{validator_net_forward.4} parent=0 // pred_region
    _
  $region21: #{validator_net_forward.4} parent=0 // pred_fallthru
    _

// kernel: validator_net_forward.5
$region0: #{validator_net_forward.5}
  #allocation0 [shape = 'u32[]', space=smem, size = 0x4, offset = 0x4, fixed_abs, tag = 'smem constant byte address 0x4 - core index']
  #allocation1 [shape = 'u32[144,128]{1,0:T(1,128)}', space=vmem, size = 0x12000, scoped, tag = 'internal scratch']
  %s0 = inlined_call_operand.vmem [shape: bf16[128,288], index: 0, kind: input, shape index: {}]
  %s1 = inlined_call_operand.vmem [shape: bf16[288,64], index: 1, kind: input, shape index: {}]
  %s2 = inlined_call_operand.vmem [shape: f32[1,64], index: 2, kind: input, shape index: {}]
  %s3 = inlined_call_operand.vmem [shape: bf16[128,64], index: 3, kind: output, shape index: {}]
  %s4 = sld [smem:[#allocation0]]
  $region22: #{validator_net_forward.5} parent=0
    _
  %s6 = ssub.s32 1, %s4
  %s7 = scalar_select 0, %s6, %s4
  // Predicated region
  $region2: #{validator_net_forward.5} parent=0 // pred_check
    _
  $region3: #{validator_net_forward.5} parent=0 // pred_check_branch
    %9 = sbr.rel (0) target = $region5
  $region4: #{validator_net_forward.5} parent=0 // pred_region
    _
  $region5: #{validator_net_forward.5} parent=0 // pred_fallthru
    _
  // Predicated region
  $region6: #{validator_net_forward.5} parent=0 // pred_check
    _
  $region7: #{validator_net_forward.5} parent=0 // pred_check_branch
    %11 = sbr.rel (0) target = $region9
  $region8: #{validator_net_forward.5} parent=0 // pred_region
    _
  $region9: #{validator_net_forward.5} parent=0 // pred_fallthru
    _
  // Predicated region
  $region10: #{validator_net_forward.5} parent=0 // pred_check
    _
  $region11: #{validator_net_forward.5} parent=0 // pred_check_branch
    %13 = sbr.rel (0) target = $region13
  $region12: #{validator_net_forward.5} parent=0 // pred_region
    _
  $region13: #{validator_net_forward.5} parent=0 // pred_fallthru
    _
  %v15 = vld [vmem:[%s0] sm:$0xff]
  %v16 = vld [vmem:[%s0 + $0x8] sm:$0xf]
  %v17 = vld [vmem:[%s0 + $0xc] sm:$0xff]
  %v18 = vld [vmem:[%s0 + $0x14] sm:$0xf]
  %v19 = vld [vmem:[%s0 + $0x18] sm:$0xff]
  %v20 = vld [vmem:[%s0 + $0x20] sm:$0xf]
  %v21 = vld [vmem:[%s0 + $0x24] sm:$0xff]
  %v22 = vld [vmem:[%s0 + $0x2c] sm:$0xf]
  %v23 = vld [vmem:[%s0 + $0x30] sm:$0xff]
  %v24 = vld [vmem:[%s0 + $0x38] sm:$0xf]
  %v25 = vld [vmem:[%s0 + $0x3c] sm:$0xff]
  %v26 = vld [vmem:[%s0 + $0x44] sm:$0xf]
  %v27 = vld [vmem:[%s0 + $0x48] sm:$0xff]
  %v28 = vld [vmem:[%s0 + $0x50] sm:$0xf]
  %v29 = vld [vmem:[%s0 + $0x54] sm:$0xff]
  %v30 = vld [vmem:[%s0 + $0x5c] sm:$0xf]
  %v31 = vld [vmem:[%s0 + $0x60] sm:$0xff]
  %v32 = vld [vmem:[%s0 + $0x68] sm:$0xf]
  %v33 = vld [vmem:[%s0 + $0x6c] sm:$0xff]
  %v34 = vld [vmem:[%s0 + $0x74] sm:$0xf]
  %v35 = vld [vmem:[%s0 + $0x78] sm:$0xff]
  %v36 = vld [vmem:[%s0 + $0x80] sm:$0xf]
  %v37 = vld [vmem:[%s0 + $0x84] sm:$0xff]
  %v38 = vld [vmem:[%s0 + $0x8c] sm:$0xf]
  %v39 = vld [vmem:[%s0 + $0x90] sm:$0xff]
  %v40 = vld [vmem:[%s0 + $0x98] sm:$0xf]
  %v41 = vld [vmem:[%s0 + $0x9c] sm:$0xff]
  %v42 = vld [vmem:[%s0 + $0xa4] sm:$0xf]
  %v43 = vld [vmem:[%s0 + $0xa8] sm:$0xff]
  %v44 = vld [vmem:[%s0 + $0xb0] sm:$0xf]
  %v45 = vld [vmem:[%s0 + $0xb4] sm:$0xff]
  %v46 = vld [vmem:[%s0 + $0xbc] sm:$0xf]
  %v47 = vld [vmem:[%s1] sm:$0xf]
  %v48 = vld [vmem:[%s1 + $0x4] sm:$0xf]
  %v49 = vld [vmem:[%s1 + $0x8] sm:$0xf]
  %v50 = vld [vmem:[%s1 + $0xc] sm:$0xf]
  %v51 = vld [vmem:[%s1 + $0x10] sm:$0xf]
  %v52 = vld [vmem:[%s1 + $0x14] sm:$0xf]
  %v53 = vld [vmem:[%s1 + $0x18] sm:$0xf]
  %v54 = vld [vmem:[%s1 + $0x1c] sm:$0xf]
  %v55 = vld [vmem:[%s1 + $0x20] sm:$0xf]
  %v56 = vld [vmem:[%s1 + $0x24] sm:$0xf]
  %v57 = vld [vmem:[%s1 + $0x28] sm:$0xf]
  %v58 = vld [vmem:[%s1 + $0x2c] sm:$0xf]
  %v59 = vld [vmem:[%s1 + $0x30] sm:$0xf]
  %v60 = vld [vmem:[%s1 + $0x34] sm:$0xf]
  %v61 = vld [vmem:[%s1 + $0x38] sm:$0xf]
  %v62 = vld [vmem:[%s1 + $0x3c] sm:$0xf]
  %v63 = vld [vmem:[%s1 + $0x40] sm:$0xf]
  %v64 = vld [vmem:[%s1 + $0x44] sm:$0xf]
  %v65 = vld [vmem:[%s1 + $0x48] sm:$0xf]
  %v66 = vld [vmem:[%s1 + $0x4c] sm:$0xf]
  %v67 = vld [vmem:[%s1 + $0x50] sm:$0xf]
  %v68 = vld [vmem:[%s1 + $0x54] sm:$0xf]
  %v69 = vld [vmem:[%s1 + $0x58] sm:$0xf]
  %v70 = vld [vmem:[%s1 + $0x5c] sm:$0xf]
  %v71 = vld [vmem:[%s1 + $0x60] sm:$0xf]
  %v72 = vld [vmem:[%s1 + $0x64] sm:$0xf]
  %v73 = vld [vmem:[%s1 + $0x68] sm:$0xf]
  %v74 = vld [vmem:[%s1 + $0x6c] sm:$0xf]
  %v75 = vld [vmem:[%s1 + $0x70] sm:$0xf]
  %v76 = vld [vmem:[%s1 + $0x74] sm:$0xf]
  %v77 = vld [vmem:[%s1 + $0x78] sm:$0xf]
  %v78 = vld [vmem:[%s1 + $0x7c] sm:$0xf]
  %v79 = vld [vmem:[%s1 + $0x80] sm:$0xf]
  %v80 = vld [vmem:[%s1 + $0x84] sm:$0xf]
  %v81 = vld [vmem:[%s1 + $0x88] sm:$0xf]
  %v82 = vld [vmem:[%s1 + $0x8c] sm:$0xf]
  %v83 = vld [vmem:[%s2] sm:$0x1]
  %v85 = vlaneseq
  %v86 = vshrl.u32 %v85, 7
  %v87 = vsub.s32 0, %v86
  %v88 = vrot.slane %v83, %v87
  %v122 = vunpack.c.l.b16 %v15
  %v123 = vunpack.c.h.b16 %v15
  %v124 = vunpack.c.l.b16 %v16
  %v125 = vunpack.c.l.b16 %v17
  %v126 = vunpack.c.h.b16 %v17
  %v127 = vunpack.c.l.b16 %v18
  %v128 = vunpack.c.l.b16 %v19
  %v129 = vunpack.c.h.b16 %v19
  %v130 = vunpack.c.l.b16 %v20
  %v131 = vunpack.c.l.b16 %v21
  %v132 = vunpack.c.h.b16 %v21
  %v133 = vunpack.c.l.b16 %v22
  %v134 = vunpack.c.l.b16 %v23
  %v135 = vunpack.c.h.b16 %v23
  %v136 = vunpack.c.l.b16 %v24
  %v137 = vunpack.c.l.b16 %v25
  %v138 = vunpack.c.h.b16 %v25
  %v139 = vunpack.c.l.b16 %v26
  %v140 = vunpack.c.l.b16 %v27
  %v141 = vunpack.c.h.b16 %v27
  %v142 = vunpack.c.l.b16 %v28
  %v143 = vunpack.c.l.b16 %v29
  %v144 = vunpack.c.h.b16 %v29
  %v145 = vunpack.c.l.b16 %v30
  %v146 = vunpack.c.l.b16 %v31
  %v147 = vunpack.c.h.b16 %v31
  %v148 = vunpack.c.l.b16 %v32
  %v149 = vunpack.c.l.b16 %v33
  %v150 = vunpack.c.h.b16 %v33
  %v151 = vunpack.c.l.b16 %v34
  %v152 = vunpack.c.l.b16 %v35
  %v153 = vunpack.c.h.b16 %v35
  %v154 = vunpack.c.l.b16 %v36
  %v155 = vunpack.c.l.b16 %v37
  %v156 = vunpack.c.h.b16 %v37
  %v157 = vunpack.c.l.b16 %v38
  %v158 = vunpack.c.l.b16 %v39
  %v159 = vunpack.c.h.b16 %v39
  %v160 = vunpack.c.l.b16 %v40
  %v161 = vunpack.c.l.b16 %v41
  %v162 = vunpack.c.h.b16 %v41
  %v163 = vunpack.c.l.b16 %v42
  %v164 = vunpack.c.l.b16 %v43
  %v165 = vunpack.c.h.b16 %v43
  %v166 = vunpack.c.l.b16 %v44
  %v167 = vunpack.c.l.b16 %v45
  %v168 = vunpack.c.h.b16 %v45
  %v169 = vunpack.c.l.b16 %v46
  %v170 = vpack.c.b16 %v125, %v122
  %v171 = vpack.c.b16 %v126, %v123
  %v172 = vpack.c.b16 %v127, %v124
  %v173 = vpack.c.b16 %v131, %v128
  %v174 = vpack.c.b16 %v132, %v129
  %v175 = vpack.c.b16 %v133, %v130
  %v176 = vpack.c.b16 %v137, %v134
  %v177 = vpack.c.b16 %v138, %v135
  %v178 = vpack.c.b16 %v139, %v136
  %v179 = vpack.c.b16 %v143, %v140
  %v180 = vpack.c.b16 %v144, %v141
  %v181 = vpack.c.b16 %v145, %v142
  %v182 = vpack.c.b16 %v149, %v146
  %v183 = vpack.c.b16 %v150, %v147
  %v184 = vpack.c.b16 %v151, %v148
  %v185 = vpack.c.b16 %v155, %v152
  %v186 = vpack.c.b16 %v156, %v153
  %v187 = vpack.c.b16 %v157, %v154
  %v188 = vpack.c.b16 %v161, %v158
  %v189 = vpack.c.b16 %v162, %v159
  %v190 = vpack.c.b16 %v163, %v160
  %v191 = vpack.c.b16 %v167, %v164
  %v192 = vpack.c.b16 %v168, %v165
  %v193 = vpack.c.b16 %v169, %v166
  %v246 = vunpack.c.l.b16 %v47
  %v247 = vunpack.c.l.b16 %v48
  %v248 = vunpack.c.l.b16 %v49
  %v249 = vunpack.c.l.b16 %v50
  %v250 = vunpack.c.l.b16 %v51
  %v251 = vunpack.c.l.b16 %v52
  %v252 = vunpack.c.l.b16 %v53
  %v253 = vunpack.c.l.b16 %v54
  %v254 = vunpack.c.l.b16 %v55
  %v255 = vunpack.c.l.b16 %v56
  %v256 = vunpack.c.l.b16 %v57
  %v257 = vunpack.c.l.b16 %v58
  %v258 = vunpack.c.l.b16 %v59
  %v259 = vunpack.c.l.b16 %v60
  %v260 = vunpack.c.l.b16 %v61
  %v261 = vunpack.c.l.b16 %v62
  %v262 = vunpack.c.l.b16 %v63
  %v263 = vunpack.c.l.b16 %v64
  %v264 = vunpack.c.l.b16 %v65
  %v265 = vunpack.c.l.b16 %v66
  %v266 = vunpack.c.l.b16 %v67
  %v267 = vunpack.c.l.b16 %v68
  %v268 = vunpack.c.l.b16 %v69
  %v269 = vunpack.c.l.b16 %v70
  %v270 = vunpack.c.l.b16 %v71
  %v271 = vunpack.c.l.b16 %v72
  %v272 = vunpack.c.l.b16 %v73
  %v273 = vunpack.c.l.b16 %v74
  %v274 = vunpack.c.l.b16 %v75
  %v275 = vunpack.c.l.b16 %v76
  %v276 = vunpack.c.l.b16 %v77
  %v277 = vunpack.c.l.b16 %v78
  %v278 = vunpack.c.l.b16 %v79
  %v279 = vunpack.c.l.b16 %v80
  %v280 = vunpack.c.l.b16 %v81
  %v281 = vunpack.c.l.b16 %v82
  %v282 = vpack.c.b16 %v247, %v246
  %v283 = vpack.c.b16 %v249, %v248
  %v284 = vpack.c.b16 %v251, %v250
  %v285 = vpack.c.b16 %v253, %v252
  %v286 = vpack.c.b16 %v255, %v254
  %v287 = vpack.c.b16 %v257, %v256
  %v288 = vpack.c.b16 %v259, %v258
  %v289 = vpack.c.b16 %v261, %v260
  %v290 = vpack.c.b16 %v263, %v262
  %v291 = vpack.c.b16 %v265, %v264
  %v292 = vpack.c.b16 %v267, %v266
  %v293 = vpack.c.b16 %v269, %v268
  %v294 = vpack.c.b16 %v271, %v270
  %v295 = vpack.c.b16 %v273, %v272
  %v296 = vpack.c.b16 %v275, %v274
  %v297 = vpack.c.b16 %v277, %v276
  %v298 = vpack.c.b16 %v279, %v278
  %v299 = vpack.c.b16 %v281, %v280
  %vm318 = vcmask 261120
  %v320 = vsel %vm318, %v172, 0
  %v323 = vsel %vm318, %v175, 0
  %v326 = vsel %vm318, %v178, 0
  %v329 = vsel %vm318, %v181, 0
  %v332 = vsel %vm318, %v184, 0
  %v335 = vsel %vm318, %v187, 0
  %v338 = vsel %vm318, %v190, 0
  %v341 = vsel %vm318, %v193, 0
  %343 = vmatprep.subr.bf16.mxu0 0
  %344 = vmatpush1.bf16.msra.mxu0 %v289
  %345 = vmatprep.subr.bf16.mxu0 0
  %346 = vmatpush1.bf16.msra.mxu0 %v288
  %347 = vmatprep.subr.bf16.mxu0 0
  %348 = vmatpush1.bf16.msra.mxu0 %v287
  %349 = vmatprep.subr.bf16.mxu0 0
  %350 = vmatpush1.bf16.msra.mxu0 %v286
  %351 = vmatprep.subr.bf16.mxu0 0
  %352 = vmatpush1.bf16.msra.mxu0 %v285
  %353 = vmatprep.subr.bf16.mxu0 0
  %354 = vmatpush1.bf16.msra.mxu0 %v284
  %355 = vmatprep.subr.bf16.mxu0 0
  %356 = vmatpush1.bf16.msra.mxu0 %v283
  %357 = vmatprep.subr.bf16.mxu0 0
  %358 = vmatpush1.bf16.msra.mxu0 %v282
  %359 = vmatprep.subr.bf16.mxu0 0
  %360 = vmatpush2.bf16.msra.mxu0 %v297
  %361 = vmatprep.subr.bf16.mxu0 0
  %362 = vmatpush2.bf16.msra.mxu0 %v296
  %363 = vmatprep.subr.bf16.mxu0 0
  %364 = vmatpush2.bf16.msra.mxu0 %v295
  %365 = vmatprep.subr.bf16.mxu0 0
  %366 = vmatpush2.bf16.msra.mxu0 %v294
  %367 = vmatprep.subr.bf16.mxu0 0
  %368 = vmatpush2.bf16.msra.mxu0 %v293
  %369 = vmatprep.subr.bf16.mxu0 0
  %370 = vmatpush2.bf16.msra.mxu0 %v292
  %371 = vmatprep.subr.bf16.mxu0 0
  %372 = vmatpush2.bf16.msra.mxu0 %v291
  %373 = vmatprep.subr.bf16.mxu0 0
  %374 = vmatpush2.bf16.msra.mxu0 %v290
  %375 = vmatprep.mubr.bf16.mxu0 %v171
  %376 = vmatmul.mubr.bf16.gmra.mxu0 %v170
  %v377 = vpop.f32.mrf.mxu0
  %v378 = vadd.f32 %v88, %v377
  %v379 = vpop.f32.mrf.mxu0
  %v380 = vpop.f32.mrf.mxu0
  %v381 = vadd.f32 %v88, %v380
  %v382 = vpop.f32.mrf.mxu0
  %383 = vmatprep.mubr.bf16.mxu0 %v174
  %384 = vmatmul.mubr.bf16.gmra.mxu0 %v173
  %v385 = vpop.f32.mrf.mxu0
  %v386 = vadd.f32 %v88, %v385
  %v387 = vpop.f32.mrf.mxu0
  %v388 = vpop.f32.mrf.mxu0
  %v389 = vadd.f32 %v88, %v388
  %v390 = vpop.f32.mrf.mxu0
  %391 = vmatprep.mubr.bf16.mxu0 %v177
  %392 = vmatmul.mubr.bf16.gmra.mxu0 %v176
  %v393 = vpop.f32.mrf.mxu0
  %v394 = vadd.f32 %v88, %v393
  %v395 = vpop.f32.mrf.mxu0
  %v396 = vpop.f32.mrf.mxu0
  %v397 = vadd.f32 %v88, %v396
  %v398 = vpop.f32.mrf.mxu0
  %399 = vmatprep.mubr.bf16.mxu0 %v180
  %400 = vmatmul.mubr.bf16.gmra.mxu0 %v179
  %v401 = vpop.f32.mrf.mxu0
  %v402 = vadd.f32 %v88, %v401
  %v403 = vpop.f32.mrf.mxu0
  %v404 = vpop.f32.mrf.mxu0
  %v405 = vadd.f32 %v88, %v404
  %v406 = vpop.f32.mrf.mxu0
  %407 = vmatprep.mubr.bf16.mxu0 %v183
  %408 = vmatmul.mubr.bf16.gmra.mxu0 %v182
  %v409 = vpop.f32.mrf.mxu0
  %v410 = vadd.f32 %v88, %v409
  %v411 = vpop.f32.mrf.mxu0
  %v412 = vpop.f32.mrf.mxu0
  %v413 = vadd.f32 %v88, %v412
  %v414 = vpop.f32.mrf.mxu0
  %415 = vmatprep.mubr.bf16.mxu0 %v186
  %416 = vmatmul.mubr.bf16.gmra.mxu0 %v185
  %v417 = vpop.f32.mrf.mxu0
  %v418 = vadd.f32 %v88, %v417
  %v419 = vpop.f32.mrf.mxu0
  %v420 = vpop.f32.mrf.mxu0
  %v421 = vadd.f32 %v88, %v420
  %v422 = vpop.f32.mrf.mxu0
  %423 = vmatprep.mubr.bf16.mxu0 %v189
  %424 = vmatmul.mubr.bf16.gmra.mxu0 %v188
  %v425 = vpop.f32.mrf.mxu0
  %v426 = vadd.f32 %v88, %v425
  %v427 = vpop.f32.mrf.mxu0
  %v428 = vpop.f32.mrf.mxu0
  %v429 = vadd.f32 %v88, %v428
  %v430 = vpop.f32.mrf.mxu0
  %431 = vmatprep.mubr.bf16.mxu0 %v192
  %432 = vmatmul.mubr.bf16.gmra.mxu0 %v191
  %v433 = vpop.f32.mrf.mxu0
  %v434 = vadd.f32 %v88, %v433
  %v435 = vpop.f32.mrf.mxu0
  %v436 = vpop.f32.mrf.mxu0
  %v437 = vadd.f32 %v88, %v436
  %v438 = vpop.f32.mrf.mxu0
  %439 = vdwg.mxu0
  %440 = vmatprep.subr.bf16.mxu0 0
  %441 = vmatpush1.bf16.msra.mxu0 0
  %442 = vmatprep.subr.bf16.mxu0 0
  %443 = vmatpush1.bf16.msra.mxu0 0
  %444 = vmatprep.subr.bf16.mxu0 0
  %445 = vmatpush1.bf16.msra.mxu0 0
  %446 = vmatprep.subr.bf16.mxu0 0
  %447 = vmatpush1.bf16.msra.mxu0 0
  %448 = vmatprep.subr.bf16.mxu0 0
  %449 = vmatpush1.bf16.msra.mxu0 0
  %450 = vmatprep.subr.bf16.mxu0 0
  %451 = vmatpush1.bf16.msra.mxu0 0
  %452 = vmatprep.subr.bf16.mxu0 0
  %453 = vmatpush1.bf16.msra.mxu0 %v299
  %454 = vmatprep.subr.bf16.mxu0 0
  %455 = vmatpush1.bf16.msra.mxu0 %v298
  %456 = vmatprep.subr.bf16.mxu0 0
  %457 = vmatpush2.bf16.msra.mxu0 0
  %458 = vmatprep.subr.bf16.mxu0 0
  %459 = vmatpush2.bf16.msra.mxu0 0
  %460 = vmatprep.subr.bf16.mxu0 0
  %461 = vmatpush2.bf16.msra.mxu0 0
  %462 = vmatprep.subr.bf16.mxu0 0
  %463 = vmatpush2.bf16.msra.mxu0 0
  %464 = vmatprep.subr.bf16.mxu0 0
  %465 = vmatpush2.bf16.msra.mxu0 0
  %466 = vmatprep.subr.bf16.mxu0 0
  %467 = vmatpush2.bf16.msra.mxu0 0
  %468 = vmatprep.subr.bf16.mxu0 0
  %469 = vmatpush2.bf16.msra.mxu0 0
  %470 = vmatprep.subr.bf16.mxu0 0
  %471 = vmatpush2.bf16.msra.mxu0 0
  %472 = vmatprep.mubr.bf16.mxu0 0
  %473 = vmatmul.mubr.bf16.gmra.mxu0 %v320
  %v474 = vpop.f32.mrf.mxu0
  %v475 = vadd.f32 %v378, %v474
  %v476 = vpop.f32.mrf.mxu0
  %v477 = vpop.f32.mrf.mxu0
  %v478 = vadd.f32 %v381, %v477
  %v479 = vpop.f32.mrf.mxu0
  %480 = vmatprep.mubr.bf16.mxu0 0
  %481 = vmatmul.mubr.bf16.gmra.mxu0 %v323
  %v482 = vpop.f32.mrf.mxu0
  %v483 = vadd.f32 %v386, %v482
  %v484 = vpop.f32.mrf.mxu0
  %v485 = vpop.f32.mrf.mxu0
  %v486 = vadd.f32 %v389, %v485
  %v487 = vpop.f32.mrf.mxu0
  %488 = vmatprep.mubr.bf16.mxu0 0
  %489 = vmatmul.mubr.bf16.gmra.mxu0 %v326
  %v490 = vpop.f32.mrf.mxu0
  %v491 = vadd.f32 %v394, %v490
  %v492 = vpop.f32.mrf.mxu0
  %v493 = vpop.f32.mrf.mxu0
  %v494 = vadd.f32 %v397, %v493
  %v495 = vpop.f32.mrf.mxu0
  %496 = vmatprep.mubr.bf16.mxu0 0
  %497 = vmatmul.mubr.bf16.gmra.mxu0 %v329
  %v498 = vpop.f32.mrf.mxu0
  %v499 = vadd.f32 %v402, %v498
  %v500 = vpop.f32.mrf.mxu0
  %v501 = vpop.f32.mrf.mxu0
  %v502 = vadd.f32 %v405, %v501
  %v503 = vpop.f32.mrf.mxu0
  %504 = vmatprep.mubr.bf16.mxu0 0
  %505 = vmatmul.mubr.bf16.gmra.mxu0 %v332
  %v506 = vpop.f32.mrf.mxu0
  %v507 = vadd.f32 %v410, %v506
  %v508 = vpop.f32.mrf.mxu0
  %v509 = vpop.f32.mrf.mxu0
  %v510 = vadd.f32 %v413, %v509
  %v511 = vpop.f32.mrf.mxu0
  %512 = vmatprep.mubr.bf16.mxu0 0
  %513 = vmatmul.mubr.bf16.gmra.mxu0 %v335
  %v514 = vpop.f32.mrf.mxu0
  %v515 = vadd.f32 %v418, %v514
  %v516 = vpop.f32.mrf.mxu0
  %v517 = vpop.f32.mrf.mxu0
  %v518 = vadd.f32 %v421, %v517
  %v519 = vpop.f32.mrf.mxu0
  %520 = vmatprep.mubr.bf16.mxu0 0
  %521 = vmatmul.mubr.bf16.gmra.mxu0 %v338
  %v522 = vpop.f32.mrf.mxu0
  %v523 = vadd.f32 %v426, %v522
  %v524 = vpop.f32.mrf.mxu0
  %v525 = vpop.f32.mrf.mxu0
  %v526 = vadd.f32 %v429, %v525
  %v527 = vpop.f32.mrf.mxu0
  %528 = vmatprep.mubr.bf16.mxu0 0
  %529 = vmatmul.mubr.bf16.gmra.mxu0 %v341
  %v530 = vpop.f32.mrf.mxu0
  %v531 = vadd.f32 %v434, %v530
  %v532 = vpop.f32.mrf.mxu0
  %v533 = vpop.f32.mrf.mxu0
  %v534 = vadd.f32 %v437, %v533
  %v535 = vpop.f32.mrf.mxu0
  %536 = vdwg.mxu0
  %v537 = vmax.f32 %v475, 0.0
  %v538 = vmax.f32 %v478, 0.0
  %v539 = vmax.f32 %v483, 0.0
  %v540 = vmax.f32 %v486, 0.0
  %v541 = vmax.f32 %v491, 0.0
  %v542 = vmax.f32 %v494, 0.0
  %v543 = vmax.f32 %v499, 0.0
  %v544 = vmax.f32 %v502, 0.0
  %v545 = vmax.f32 %v507, 0.0
  %v546 = vmax.f32 %v510, 0.0
  %v547 = vmax.f32 %v515, 0.0
  %v548 = vmax.f32 %v518, 0.0
  %v549 = vmax.f32 %v523, 0.0
  %v550 = vmax.f32 %v526, 0.0
  %v551 = vmax.f32 %v531, 0.0
  %v552 = vmax.f32 %v534, 0.0
  %v553 = vpack.c.bf16 %v538, %v537
  %v554 = vpack.c.bf16 %v540, %v539
  %v555 = vpack.c.bf16 %v542, %v541
  %v556 = vpack.c.bf16 %v544, %v543
  %v557 = vpack.c.bf16 %v546, %v545
  %v558 = vpack.c.bf16 %v548, %v547
  %v559 = vpack.c.bf16 %v550, %v549
  %v560 = vpack.c.bf16 %v552, %v551
  %v569 = vunpack.c.l.b16 %v553
  %v570 = vunpack.c.h.b16 %v553
  %v571 = vunpack.c.l.b16 %v554
  %v572 = vunpack.c.h.b16 %v554
  %v573 = vunpack.c.l.b16 %v555
  %v574 = vunpack.c.h.b16 %v555
  %v575 = vunpack.c.l.b16 %v556
  %v576 = vunpack.c.h.b16 %v556
  %v577 = vunpack.c.l.b16 %v557
  %v578 = vunpack.c.h.b16 %v557
  %v579 = vunpack.c.l.b16 %v558
  %v580 = vunpack.c.h.b16 %v558
  %v581 = vunpack.c.l.b16 %v559
  %v582 = vunpack.c.h.b16 %v559
  %v583 = vunpack.c.l.b16 %v560
  %v584 = vunpack.c.h.b16 %v560
  %v585 = vpack.c.b16 %v569, %v569
  %v586 = vpack.c.b16 %v570, %v570
  %v587 = vpack.c.b16 %v571, %v571
  %v588 = vpack.c.b16 %v572, %v572
  %v589 = vpack.c.b16 %v573, %v573
  %v590 = vpack.c.b16 %v574, %v574
  %v591 = vpack.c.b16 %v575, %v575
  %v592 = vpack.c.b16 %v576, %v576
  %v593 = vpack.c.b16 %v577, %v577
  %v594 = vpack.c.b16 %v578, %v578
  %v595 = vpack.c.b16 %v579, %v579
  %v596 = vpack.c.b16 %v580, %v580
  %v597 = vpack.c.b16 %v581, %v581
  %v598 = vpack.c.b16 %v582, %v582
  %v599 = vpack.c.b16 %v583, %v583
  %v600 = vpack.c.b16 %v584, %v584
  %vm617 = vcmask 519168
  %618 = vst.msk [vmem:[%s3] sm:$0xf] %vm617, %v585
  %619 = vst.msk [vmem:[%s3 + $0x4] sm:$0xf] %vm617, %v586
  %620 = vst.msk [vmem:[%s3 + $0x8] sm:$0xf] %vm617, %v587
  %621 = vst.msk [vmem:[%s3 + $0xc] sm:$0xf] %vm617, %v588
  %622 = vst.msk [vmem:[%s3 + $0x10] sm:$0xf] %vm617, %v589
  %623 = vst.msk [vmem:[%s3 + $0x14] sm:$0xf] %vm617, %v590
  %624 = vst.msk [vmem:[%s3 + $0x18] sm:$0xf] %vm617, %v591
  %625 = vst.msk [vmem:[%s3 + $0x1c] sm:$0xf] %vm617, %v592
  %626 = vst.msk [vmem:[%s3 + $0x20] sm:$0xf] %vm617, %v593
  %627 = vst.msk [vmem:[%s3 + $0x24] sm:$0xf] %vm617, %v594
  %628 = vst.msk [vmem:[%s3 + $0x28] sm:$0xf] %vm617, %v595
  %629 = vst.msk [vmem:[%s3 + $0x2c] sm:$0xf] %vm617, %v596
  %630 = vst.msk [vmem:[%s3 + $0x30] sm:$0xf] %vm617, %v597
  %631 = vst.msk [vmem:[%s3 + $0x34] sm:$0xf] %vm617, %v598
  %632 = vst.msk [vmem:[%s3 + $0x38] sm:$0xf] %vm617, %v599
  %633 = vst.msk [vmem:[%s3 + $0x3c] sm:$0xf] %vm617, %v600
  // Predicated region
  $region14: #{validator_net_forward.5} parent=0 // pred_check
    _
  $region15: #{validator_net_forward.5} parent=0 // pred_check_branch
    %635 = sbr.rel (0) target = $region17
  $region16: #{validator_net_forward.5} parent=0 // pred_region
    _
  $region17: #{validator_net_forward.5} parent=0 // pred_fallthru
    _
  // Predicated region
  $region18: #{validator_net_forward.5} parent=0 // pred_check
    _
  $region19: #{validator_net_forward.5} parent=0 // pred_check_branch
    %637 = sbr.rel (0) target = $region21
  $region20: #{validator_net_forward.5} parent=0 // pred_region
    _
  $region21: #{validator_net_forward.5} parent=0 // pred_fallthru
    _

// kernel: validator_net_forward.6
$region0: #{validator_net_forward.6}
  #allocation0 [shape = 'u32[]', space=smem, size = 0x4, offset = 0x4, fixed_abs, tag = 'smem constant byte address 0x4 - core index']
  #allocation1 [shape = 'u32[144,128]{1,0:T(1,128)}', space=vmem, size = 0x12000, scoped, tag = 'internal scratch']
  %s0 = inlined_call_operand.vmem [shape: bf16[8,4,576], index: 0, kind: input, shape index: {}]
  %s1 = inlined_call_operand.vmem [shape: bf16[576,128], index: 1, kind: input, shape index: {}]
  %s2 = inlined_call_operand.vmem [shape: f32[1,128], index: 2, kind: input, shape index: {}]
  %s3 = inlined_call_operand.vmem [shape: f32[8,1,128], index: 3, kind: output, shape index: {}]
  %s4 = sld [smem:[#allocation0]]
  $region45: #{validator_net_forward.6} parent=0
    _
  %s6 = ssub.s32 1, %s4
  %s7 = scalar_select 0, %s6, %s4
  loop: start=0, step=1, limit=10
  $region2: #{validator_net_forward.6} parent=0 // loop_pre_header
    _
  $region3: #{validator_net_forward.6} parent=0 // loop_header
    %s9 = sphi 0, %s13
    %p10 = scmp.ge.s32.totalorder %s9, 10
    %s19 = sphi 0, %s21
    %s22 = sphi 0, %s19
    %s23 = sphi 0, %s22
    %s39 = sphi 0, %s23
    %s43 = sphi 0, %s43
    %s45 = sphi 0, %s43
    %s46 = sphi 0, %s45
    %s60 = sphi 0, %s46
    %s64 = sphi 0, %s64
    %s66 = sphi 0, %s64
    %s67 = sphi 0, %s66
    %s81 = sphi 0, %s67
    %s87 = sphi 0, %s89
    %s90 = sphi 0, %s87
    %s91 = sphi 0, %s90
    %s107 = sphi 0, %s91
  $region4: #{validator_net_forward.6} parent=0 // loop_header_branch
    %12 = sbr.rel (%p10) target = $region8
  $region5: #{validator_net_forward.6} parent=0 // loop_body
    %s14 = ssub.s32 %s9, 1
    %s15 = ssub.s32 %s9, 2
    %s16 = sadd.s32 %s9, 1
    %s17 = ssub.s32 %s9, %s16
    %p18 = scmp.eq.s32.totalorder %s17, 0
    %s20 = sadd.s32 %s19, 1
    %s21 = scalar_select %p18, %s19, %s20
    %p24 = pneg %p18
    %p25 = scmp.eq.s32.totalorder %s9, 7
    %p26 = por %p24, %p25
    %p27 = scmp.ne.s32.totalorder %s19, %s22
    %p28 = scmp.eq.s32.totalorder %s9, 0
    %p29 = por %p27, %p28
    %p30 = scmp.ne.s32.totalorder %s19, %s22
    %p31 = scmp.eq.s32.totalorder %s14, 7
    %p32 = por %p30, %p31
    %p33 = scmp.ne.s32.totalorder %s22, %s23
    %p34 = scmp.eq.s32.totalorder %s14, 0
    %p35 = por %p33, %p34
    %p36 = scmp.ne.s32.totalorder %s22, %s23
    %p37 = scmp.eq.s32.totalorder %s15, 7
    %p38 = por %p36, %p37
    %p40 = scmp.ne.s32.totalorder %s23, %s39
    %p41 = scmp.eq.s32.totalorder %s15, 0
    %p42 = por %p40, %p41
    %s44 = sadd.s32 %s43, 1
    %p47 = scmp.eq.s32.totalorder %s9, 7
    %p48 = scmp.ne.s32.totalorder %s43, %s45
    %p49 = scmp.eq.s32.totalorder %s9, 0
    %p50 = por %p48, %p49
    %p51 = scmp.ne.s32.totalorder %s43, %s45
    %p52 = scmp.eq.s32.totalorder %s14, 7
    %p53 = por %p51, %p52
    %p54 = scmp.ne.s32.totalorder %s45, %s46
    %p55 = scmp.eq.s32.totalorder %s14, 0
    %p56 = por %p54, %p55
    %p57 = scmp.ne.s32.totalorder %s45, %s46
    %p58 = scmp.eq.s32.totalorder %s15, 7
    %p59 = por %p57, %p58
    %p61 = scmp.ne.s32.totalorder %s46, %s60
    %p62 = scmp.eq.s32.totalorder %s15, 0
    %p63 = por %p61, %p62
    %s65 = sadd.s32 %s64, 1
    %p68 = scmp.eq.s32.totalorder %s9, 7
    %p69 = scmp.ne.s32.totalorder %s64, %s66
    %p70 = scmp.eq.s32.totalorder %s9, 0
    %p71 = por %p69, %p70
    %p72 = scmp.ne.s32.totalorder %s64, %s66
    %p73 = scmp.eq.s32.totalorder %s14, 7
    %p74 = por %p72, %p73
    %p75 = scmp.ne.s32.totalorder %s66, %s67
    %p76 = scmp.eq.s32.totalorder %s14, 0
    %p77 = por %p75, %p76
    %p78 = scmp.ne.s32.totalorder %s66, %s67
    %p79 = scmp.eq.s32.totalorder %s15, 7
    %p80 = por %p78, %p79
    %p82 = scmp.ne.s32.totalorder %s67, %s81
    %p83 = scmp.eq.s32.totalorder %s15, 0
    %p84 = por %p82, %p83
    %s85 = ssub.s32 %s9, %s16
    %p86 = scmp.eq.s32.totalorder %s85, 0
    %s88 = sadd.s32 %s87, 1
    %s89 = scalar_select %p86, %s87, %s88
    %p92 = pneg %p86
    %p93 = scmp.eq.s32.totalorder %s9, 7
    %p94 = por %p92, %p93
    %p95 = scmp.ne.s32.totalorder %s87, %s90
    %p96 = scmp.eq.s32.totalorder %s9, 0
    %p97 = por %p95, %p96
    %p98 = scmp.ne.s32.totalorder %s87, %s90
    %p99 = scmp.eq.s32.totalorder %s14, 7
    %p100 = por %p98, %p99
    %p101 = scmp.ne.s32.totalorder %s90, %s91
    %p102 = scmp.eq.s32.totalorder %s14, 0
    %p103 = por %p101, %p102
    %p104 = scmp.ne.s32.totalorder %s90, %s91
    %p105 = scmp.eq.s32.totalorder %s15, 7
    %p106 = por %p104, %p105
    %p108 = scmp.ne.s32.totalorder %s91, %s107
    %p109 = scmp.eq.s32.totalorder %s15, 0
    %p110 = por %p108, %p109
    %p111 = scmp.le.s32.totalorder 1, %s9
    %p112 = scmp.lt.s32.totalorder %s9, 9
    %p113 = pnand %p111, %p112
    %p114 = pneg %p113
    // Predicated region
    $region9: #{validator_net_forward.6} parent=5 // pred_check
      _
    $region10: #{validator_net_forward.6} parent=5 // pred_check_branch
      %116 = sbr.rel (%p113) target = $region12
    $region11: #{validator_net_forward.6} parent=5 // pred_region
      %s117 = ssub.s32 %s9, 1
      // Predicated region
      $region13: #{validator_net_forward.6} parent=11 // pred_check
        %p118 = pneg %p56
      $region14: #{validator_net_forward.6} parent=11 // pred_check_branch
        %120 = sbr.rel (%p118) target = $region16
      $region15: #{validator_net_forward.6} parent=11 // pred_region
        _
      $region16: #{validator_net_forward.6} parent=11 // pred_fallthru
        _
      // Predicated region
      $region17: #{validator_net_forward.6} parent=11 // pred_check
        %p121 = pneg %p77
      $region18: #{validator_net_forward.6} parent=11 // pred_check_branch
        %123 = sbr.rel (%p121) target = $region20
      $region19: #{validator_net_forward.6} parent=11 // pred_region
        _
      $region20: #{validator_net_forward.6} parent=11 // pred_fallthru
        _
    $region12: #{validator_net_forward.6} parent=5 // pred_fallthru
      _
    %p124 = scmp.lt.s32.totalorder %s9, 8
    // Predicated region
    $region21: #{validator_net_forward.6} parent=5 // pred_check
      %p125 = pneg %p124
    $region22: #{validator_net_forward.6} parent=5 // pred_check_branch
      %127 = sbr.rel (%p125) target = $region24
    $region23: #{validator_net_forward.6} parent=5 // pred_region
      // Predicated region
      $region25: #{validator_net_forward.6} parent=23 // pred_check
        %p128 = pneg %p29
      $region26: #{validator_net_forward.6} parent=23 // pred_check_branch
        %130 = sbr.rel (%p128) target = $region28
      $region27: #{validator_net_forward.6} parent=23 // pred_region
        %p131 = scmp.lt.s32.totalorder %s9, 7
        %s132 = scalar_select %p131, %s9, 7
        %s133 = smul.addr %s132, 5
        %s134 = smul.addr %s133, 2
        %s135 = scalar_lea.vmem %s0, %s134
      $region28: #{validator_net_forward.6} parent=23 // pred_fallthru
        _
    $region24: #{validator_net_forward.6} parent=5 // pred_fallthru
      _
    %p136 = scmp.le.s32.totalorder 1, %s9
    %p137 = scmp.lt.s32.totalorder %s9, 9
    %p138 = pnand %p136, %p137
    %p139 = pneg %p138
    // Predicated region
    $region29: #{validator_net_forward.6} parent=5 // pred_check
      _
    $region30: #{validator_net_forward.6} parent=5 // pred_check_branch
      %141 = sbr.rel (%p138) target = $region32
    $region31: #{validator_net_forward.6} parent=5 // pred_region
      %s142 = ssub.s32 %s9, 1
      %p143 = scmp.lt.s32.totalorder %s14, 7
      %s144 = scalar_select %p143, %s14, 7
      %s145 = smul.addr %s144, 5
      %s146 = smul.addr %s145, 2
      %s147 = scalar_lea.vmem %s0, %s146
      %p148 = pneg %p35
      %p149 = pneg %p32
      %p150 = pneg %p56
      %p151 = pneg %p53
      %p152 = pneg %p77
      %p153 = pneg %p74
      %p154 = pneg %p103
      %p155 = pneg %p100
      %p156 = scmp.lt.s32.totalorder %s14, 7
      %s157 = scalar_select %p156, %s14, 7
      %s158 = scalar_lea.vmem %s3, %s157
      %p159 = scmp.lt.s32.totalorder %s14, 7
      %s160 = scalar_select %p159, %s14, 7
      %s161 = smul.addr %s160, 5
      %s162 = smul.addr %s161, 2
      %s163 = scalar_lea.vmem %s0, %s162
      %p164 = scmp.lt.s32.totalorder %s14, 7
      %s165 = scalar_select %p164, %s14, 7
      %s166 = scalar_lea.vmem %s3, %s165
      %v168 = vld [vmem:[%s163] sm:$0xff]
      %v169 = vld [vmem:[%s163 + $0x8] sm:$0x3]
      %v170 = vld [vmem:[%s1] sm:$0xf]
      %v171 = vld [vmem:[%s1 + $0x4] sm:$0xf]
      %v172 = vld [vmem:[%s1 + $0x8] sm:$0xf]
      %v173 = vld [vmem:[%s1 + $0xc] sm:$0xf]
      %v174 = vld [vmem:[%s1 + $0x10] sm:$0xf]
      %v175 = vld [vmem:[%s1 + $0x14] sm:$0xf]
      %v176 = vld [vmem:[%s1 + $0x18] sm:$0xf]
      %v177 = vld [vmem:[%s1 + $0x1c] sm:$0xf]
      %v178 = vld [vmem:[%s1 + $0x20] sm:$0xf]
      %v179 = vld [vmem:[%s1 + $0x24] sm:$0xf]
      %v180 = vld [vmem:[%s1 + $0x28] sm:$0xf]
      %v181 = vld [vmem:[%s1 + $0x2c] sm:$0xf]
      %v182 = vld [vmem:[%s1 + $0x30] sm:$0xf]
      %v183 = vld [vmem:[%s1 + $0x34] sm:$0xf]
      %v184 = vld [vmem:[%s1 + $0x38] sm:$0xf]
      %v185 = vld [vmem:[%s1 + $0x3c] sm:$0xf]
      %v186 = vld [vmem:[%s1 + $0x40] sm:$0xf]
      %v187 = vld [vmem:[%s1 + $0x44] sm:$0xf]
      %v188 = vld [vmem:[%s1 + $0x48] sm:$0xf]
      %v189 = vld [vmem:[%s1 + $0x4c] sm:$0xf]
      %v190 = vld [vmem:[%s1 + $0x50] sm:$0xf]
      %v191 = vld [vmem:[%s1 + $0x54] sm:$0xf]
      %v192 = vld [vmem:[%s1 + $0x58] sm:$0xf]
      %v193 = vld [vmem:[%s1 + $0x5c] sm:$0xf]
      %v194 = vld [vmem:[%s1 + $0x60] sm:$0xf]
      %v195 = vld [vmem:[%s1 + $0x64] sm:$0xf]
      %v196 = vld [vmem:[%s1 + $0x68] sm:$0xf]
      %v197 = vld [vmem:[%s1 + $0x6c] sm:$0xf]
      %v198 = vld [vmem:[%s1 + $0x70] sm:$0xf]
      %v199 = vld [vmem:[%s1 + $0x74] sm:$0xf]
      %v200 = vld [vmem:[%s1 + $0x78] sm:$0xf]
      %v201 = vld [vmem:[%s1 + $0x7c] sm:$0xf]
      %v202 = vld [vmem:[%s1 + $0x80] sm:$0xf]
      %v203 = vld [vmem:[%s1 + $0x84] sm:$0xf]
      %v204 = vld [vmem:[%s1 + $0x88] sm:$0xf]
      %v205 = vld [vmem:[%s1 + $0x8c] sm:$0xf]
      %v206 = vld [vmem:[%s1 + $0x90] sm:$0xf]
      %v207 = vld [vmem:[%s1 + $0x94] sm:$0xf]
      %v208 = vld [vmem:[%s1 + $0x98] sm:$0xf]
      %v209 = vld [vmem:[%s1 + $0x9c] sm:$0xf]
      %v210 = vld [vmem:[%s1 + $0xa0] sm:$0xf]
      %v211 = vld [vmem:[%s1 + $0xa4] sm:$0xf]
      %v212 = vld [vmem:[%s1 + $0xa8] sm:$0xf]
      %v213 = vld [vmem:[%s1 + $0xac] sm:$0xf]
      %v214 = vld [vmem:[%s1 + $0xb0] sm:$0xf]
      %v215 = vld [vmem:[%s1 + $0xb4] sm:$0xf]
      %v216 = vld [vmem:[%s1 + $0xb8] sm:$0xf]
      %v217 = vld [vmem:[%s1 + $0xbc] sm:$0xf]
      %v218 = vld [vmem:[%s1 + $0xc0] sm:$0xf]
      %v219 = vld [vmem:[%s1 + $0xc4] sm:$0xf]
      %v220 = vld [vmem:[%s1 + $0xc8] sm:$0xf]
      %v221 = vld [vmem:[%s1 + $0xcc] sm:$0xf]
      %v222 = vld [vmem:[%s1 + $0xd0] sm:$0xf]
      %v223 = vld [vmem:[%s1 + $0xd4] sm:$0xf]
      %v224 = vld [vmem:[%s1 + $0xd8] sm:$0xf]
      %v225 = vld [vmem:[%s1 + $0xdc] sm:$0xf]
      %v226 = vld [vmem:[%s1 + $0xe0] sm:$0xf]
      %v227 = vld [vmem:[%s1 + $0xe4] sm:$0xf]
      %v228 = vld [vmem:[%s1 + $0xe8] sm:$0xf]
      %v229 = vld [vmem:[%s1 + $0xec] sm:$0xf]
      %v230 = vld [vmem:[%s1 + $0xf0] sm:$0xf]
      %v231 = vld [vmem:[%s1 + $0xf4] sm:$0xf]
      %v232 = vld [vmem:[%s1 + $0xf8] sm:$0xf]
      %v233 = vld [vmem:[%s1 + $0xfc] sm:$0xf]
      %v234 = vld [vmem:[%s1 + $0x100] sm:$0xf]
      %v235 = vld [vmem:[%s1 + $0x104] sm:$0xf]
      %v236 = vld [vmem:[%s1 + $0x108] sm:$0xf]
      %v237 = vld [vmem:[%s1 + $0x10c] sm:$0xf]
      %v238 = vld [vmem:[%s1 + $0x110] sm:$0xf]
      %v239 = vld [vmem:[%s1 + $0x114] sm:$0xf]
      %v240 = vld [vmem:[%s1 + $0x118] sm:$0xf]
      %v241 = vld [vmem:[%s1 + $0x11c] sm:$0xf]
      %v242 = vld [vmem:[%s2] sm:$0x1]
      %v244 = vlaneseq
      %v245 = vshrl.u32 %v244, 7
      %v246 = vsub.s32 0, %v245
      %v247 = vrot.slane %v242, %v246
      %v251 = vcombine.high %v168, %v168
      %v253 = vunpack.c.l.s4 1983009808
      %v254 = vunpack.c.0.s8 %v253
      %v255 = vlaneseq
      %v256 = vshrl.u32 %v255, 7
      %v257 = vsub.s32 %v254, %v256
      %v258 = vrot.slane %v168, %v257
      %v260 = vunpack.c.l.s4 1983009808
      %v261 = vunpack.c.0.s8 %v260
      %v262 = vlaneseq
      %v263 = vshrl.u32 %v262, 7
      %v264 = vsub.s32 %v261, %v263
      %v265 = vrot.slane %v251, %v264
      %v266 = vcombine.high %v258, %v258
      %v267 = vcombine.high %v265, %v265
      %v269 = vunpack.c.l.s4 1983009808
      %v270 = vunpack.c.0.s8 %v269
      %v271 = vlaneseq
      %v272 = vshrl.u32 %v271, 7
      %v273 = vsub.s32 %v270, %v272
      %v274 = vrot.slane %v169, %v273
      %v351 = vunpack.c.l.b16 %v170
      %v352 = vunpack.c.l.b16 %v171
      %v353 = vunpack.c.l.b16 %v172
      %v354 = vunpack.c.l.b16 %v173
      %v355 = vunpack.c.l.b16 %v174
      %v356 = vunpack.c.l.b16 %v175
      %v357 = vunpack.c.l.b16 %v176
      %v358 = vunpack.c.l.b16 %v177
      %v359 = vunpack.c.l.b16 %v178
      %v360 = vunpack.c.l.b16 %v179
      %v361 = vunpack.c.l.b16 %v180
      %v362 = vunpack.c.l.b16 %v181
      %v363 = vunpack.c.l.b16 %v182
      %v364 = vunpack.c.l.b16 %v183
      %v365 = vunpack.c.l.b16 %v184
      %v366 = vunpack.c.l.b16 %v185
      %v367 = vunpack.c.l.b16 %v186
      %v368 = vunpack.c.l.b16 %v187
      %v369 = vunpack.c.l.b16 %v188
      %v370 = vunpack.c.l.b16 %v189
      %v371 = vunpack.c.l.b16 %v190
      %v372 = vunpack.c.l.b16 %v191
      %v373 = vunpack.c.l.b16 %v192
      %v374 = vunpack.c.l.b16 %v193
      %v375 = vunpack.c.l.b16 %v194
      %v376 = vunpack.c.l.b16 %v195
      %v377 = vunpack.c.l.b16 %v196
      %v378 = vunpack.c.l.b16 %v197
      %v379 = vunpack.c.l.b16 %v198
      %v380 = vunpack.c.l.b16 %v199
      %v381 = vunpack.c.l.b16 %v200
      %v382 = vunpack.c.l.b16 %v201
      %v383 = vunpack.c.l.b16 %v202
      %v384 = vunpack.c.l.b16 %v203
      %v385 = vunpack.c.l.b16 %v204
      %v386 = vunpack.c.l.b16 %v205
      %v387 = vunpack.c.l.b16 %v206
      %v388 = vunpack.c.l.b16 %v207
      %v389 = vunpack.c.l.b16 %v208
      %v390 = vunpack.c.l.b16 %v209
      %v391 = vunpack.c.l.b16 %v210
      %v392 = vunpack.c.l.b16 %v211
      %v393 = vunpack.c.l.b16 %v212
      %v394 = vunpack.c.l.b16 %v213
      %v395 = vunpack.c.l.b16 %v214
      %v396 = vunpack.c.l.b16 %v215
      %v397 = vunpack.c.l.b16 %v216
      %v398 = vunpack.c.l.b16 %v217
      %v399 = vunpack.c.l.b16 %v218
      %v400 = vunpack.c.l.b16 %v219
      %v401 = vunpack.c.l.b16 %v220
      %v402 = vunpack.c.l.b16 %v221
      %v403 = vunpack.c.l.b16 %v222
      %v404 = vunpack.c.l.b16 %v223
      %v405 = vunpack.c.l.b16 %v224
      %v406 = vunpack.c.l.b16 %v225
      %v407 = vunpack.c.l.b16 %v226
      %v408 = vunpack.c.l.b16 %v227
      %v409 = vunpack.c.l.b16 %v228
      %v410 = vunpack.c.l.b16 %v229
      %v411 = vunpack.c.l.b16 %v230
      %v412 = vunpack.c.l.b16 %v231
      %v413 = vunpack.c.l.b16 %v232
      %v414 = vunpack.c.l.b16 %v233
      %v415 = vunpack.c.l.b16 %v234
      %v416 = vunpack.c.l.b16 %v235
      %v417 = vunpack.c.l.b16 %v236
      %v418 = vunpack.c.l.b16 %v237
      %v419 = vunpack.c.l.b16 %v238
      %v420 = vunpack.c.l.b16 %v239
      %v421 = vunpack.c.l.b16 %v240
      %v422 = vunpack.c.l.b16 %v241
      %v423 = vpack.c.b16 %v352, %v351
      %v424 = vpack.c.b16 %v354, %v353
      %v425 = vpack.c.b16 %v356, %v355
      %v426 = vpack.c.b16 %v358, %v357
      %v427 = vpack.c.b16 %v360, %v359
      %v428 = vpack.c.b16 %v362, %v361
      %v429 = vpack.c.b16 %v364, %v363
      %v430 = vpack.c.b16 %v366, %v365
      %v431 = vpack.c.b16 %v368, %v367
      %v432 = vpack.c.b16 %v370, %v369
      %v433 = vpack.c.b16 %v372, %v371
      %v434 = vpack.c.b16 %v374, %v373
      %v435 = vpack.c.b16 %v376, %v375
      %v436 = vpack.c.b16 %v378, %v377
      %v437 = vpack.c.b16 %v380, %v379
      %v438 = vpack.c.b16 %v382, %v381
      %v439 = vpack.c.b16 %v384, %v383
      %v440 = vpack.c.b16 %v386, %v385
      %v441 = vpack.c.b16 %v388, %v387
      %v442 = vpack.c.b16 %v390, %v389
      %v443 = vpack.c.b16 %v392, %v391
      %v444 = vpack.c.b16 %v394, %v393
      %v445 = vpack.c.b16 %v396, %v395
      %v446 = vpack.c.b16 %v398, %v397
      %v447 = vpack.c.b16 %v400, %v399
      %v448 = vpack.c.b16 %v402, %v401
      %v449 = vpack.c.b16 %v404, %v403
      %v450 = vpack.c.b16 %v406, %v405
      %v451 = vpack.c.b16 %v408, %v407
      %v452 = vpack.c.b16 %v410, %v409
      %v453 = vpack.c.b16 %v412, %v411
      %v454 = vpack.c.b16 %v414, %v413
      %v455 = vpack.c.b16 %v416, %v415
      %v456 = vpack.c.b16 %v418, %v417
      %v457 = vpack.c.b16 %v420, %v419
      %v458 = vpack.c.b16 %v422, %v421
      %vm495 = vcmask 523264
      %v497 = vsel %vm495, %v274, 0
      %499 = vmatprep.subr.bf16.mxu0 0
      %500 = vmatpush1.bf16.msra.mxu0 %v430
      %501 = vmatprep.subr.bf16.mxu0 0
      %502 = vmatpush1.bf16.msra.mxu0 %v429
      %503 = vmatprep.subr.bf16.mxu0 0
      %504 = vmatpush1.bf16.msra.mxu0 %v428
      %505 = vmatprep.subr.bf16.mxu0 0
      %506 = vmatpush1.bf16.msra.mxu0 %v427
      %507 = vmatprep.subr.bf16.mxu0 0
      %508 = vmatpush1.bf16.msra.mxu0 %v426
      %509 = vmatprep.subr.bf16.mxu0 0
      %510 = vmatpush1.bf16.msra.mxu0 %v425
      %511 = vmatprep.subr.bf16.mxu0 0
      %512 = vmatpush1.bf16.msra.mxu0 %v424
      %513 = vmatprep.subr.bf16.mxu0 0
      %514 = vmatpush1.bf16.msra.mxu0 %v423
      %515 = vmatprep.subr.bf16.mxu0 0
      %516 = vmatpush2.bf16.msra.mxu0 %v438
      %517 = vmatprep.subr.bf16.mxu0 0
      %518 = vmatpush2.bf16.msra.mxu0 %v437
      %519 = vmatprep.subr.bf16.mxu0 0
      %520 = vmatpush2.bf16.msra.mxu0 %v436
      %521 = vmatprep.subr.bf16.mxu0 0
      %522 = vmatpush2.bf16.msra.mxu0 %v435
      %523 = vmatprep.subr.bf16.mxu0 0
      %524 = vmatpush2.bf16.msra.mxu0 %v434
      %525 = vmatprep.subr.bf16.mxu0 0
      %526 = vmatpush2.bf16.msra.mxu0 %v433
      %527 = vmatprep.subr.bf16.mxu0 0
      %528 = vmatpush2.bf16.msra.mxu0 %v432
      %529 = vmatprep.subr.bf16.mxu0 0
      %530 = vmatpush2.bf16.msra.mxu0 %v431
      %531 = vmatprep.mubr.bf16.mxu0 %v266
      %532 = vmatmul.mubr.bf16.gmra.mxu0 %v258
      %v533 = vpop.f32.mrf.mxu0
      %v534 = vadd.f32 %v247, %v533
      %v535 = vpop.f32.mrf.mxu0
      %v536 = vpop.f32.mrf.mxu0
      %v537 = vpop.f32.mrf.mxu0
      %538 = vdwg.mxu0
      %539 = vmatprep.subr.bf16.mxu0 0
      %540 = vmatpush1.bf16.msra.mxu0 %v446
      %541 = vmatprep.subr.bf16.mxu0 0
      %542 = vmatpush1.bf16.msra.mxu0 %v445
      %543 = vmatprep.subr.bf16.mxu0 0
      %544 = vmatpush1.bf16.msra.mxu0 %v444
      %545 = vmatprep.subr.bf16.mxu0 0
      %546 = vmatpush1.bf16.msra.mxu0 %v443
      %547 = vmatprep.subr.bf16.mxu0 0
      %548 = vmatpush1.bf16.msra.mxu0 %v442
      %549 = vmatprep.subr.bf16.mxu0 0
      %550 = vmatpush1.bf16.msra.mxu0 %v441
      %551 = vmatprep.subr.bf16.mxu0 0
      %552 = vmatpush1.bf16.msra.mxu0 %v440
      %553 = vmatprep.subr.bf16.mxu0 0
      %554 = vmatpush1.bf16.msra.mxu0 %v439
      %555 = vmatprep.subr.bf16.mxu0 0
      %556 = vmatpush2.bf16.msra.mxu0 %v454
      %557 = vmatprep.subr.bf16.mxu0 0
      %558 = vmatpush2.bf16.msra.mxu0 %v453
      %559 = vmatprep.subr.bf16.mxu0 0
      %560 = vmatpush2.bf16.msra.mxu0 %v452
      %561 = vmatprep.subr.bf16.mxu0 0
      %562 = vmatpush2.bf16.msra.mxu0 %v451
      %563 = vmatprep.subr.bf16.mxu0 0
      %564 = vmatpush2.bf16.msra.mxu0 %v450
      %565 = vmatprep.subr.bf16.mxu0 0
      %566 = vmatpush2.bf16.msra.mxu0 %v449
      %567 = vmatprep.subr.bf16.mxu0 0
      %568 = vmatpush2.bf16.msra.mxu0 %v448
      %569 = vmatprep.subr.bf16.mxu0 0
      %570 = vmatpush2.bf16.msra.mxu0 %v447
      %571 = vmatprep.mubr.bf16.mxu0 %v267
      %572 = vmatmul.mubr.bf16.gmra.mxu0 %v265
      %v573 = vpop.f32.mrf.mxu0
      %v574 = vadd.f32 %v534, %v573
      %v575 = vpop.f32.mrf.mxu0
      %v576 = vpop.f32.mrf.mxu0
      %v577 = vpop.f32.mrf.mxu0
      %578 = vdwg.mxu0
      %579 = vmatprep.subr.bf16.mxu0 0
      %580 = vmatpush1.bf16.msra.mxu0 0
      %581 = vmatprep.subr.bf16.mxu0 0
      %582 = vmatpush1.bf16.msra.mxu0 0
      %583 = vmatprep.subr.bf16.mxu0 0
      %584 = vmatpush1.bf16.msra.mxu0 0
      %585 = vmatprep.subr.bf16.mxu0 0
      %586 = vmatpush1.bf16.msra.mxu0 0
      %587 = vmatprep.subr.bf16.mxu0 0
      %588 = vmatpush1.bf16.msra.mxu0 %v458
      %589 = vmatprep.subr.bf16.mxu0 0
      %590 = vmatpush1.bf16.msra.mxu0 %v457
      %591 = vmatprep.subr.bf16.mxu0 0
      %592 = vmatpush1.bf16.msra.mxu0 %v456
      %593 = vmatprep.subr.bf16.mxu0 0
      %594 = vmatpush1.bf16.msra.mxu0 %v455
      %595 = vmatprep.subr.bf16.mxu0 0
      %596 = vmatpush2.bf16.msra.mxu0 0
      %597 = vmatprep.subr.bf16.mxu0 0
      %598 = vmatpush2.bf16.msra.mxu0 0
      %599 = vmatprep.subr.bf16.mxu0 0
      %600 = vmatpush2.bf16.msra.mxu0 0
      %601 = vmatprep.subr.bf16.mxu0 0
      %602 = vmatpush2.bf16.msra.mxu0 0
      %603 = vmatprep.subr.bf16.mxu0 0
      %604 = vmatpush2.bf16.msra.mxu0 0
      %605 = vmatprep.subr.bf16.mxu0 0
      %606 = vmatpush2.bf16.msra.mxu0 0
      %607 = vmatprep.subr.bf16.mxu0 0
      %608 = vmatpush2.bf16.msra.mxu0 0
      %609 = vmatprep.subr.bf16.mxu0 0
      %610 = vmatpush2.bf16.msra.mxu0 0
      %611 = vmatprep.mubr.bf16.mxu0 0
      %612 = vmatmul.mubr.bf16.gmra.mxu0 %v497
      %v613 = vpop.f32.mrf.mxu0
      %v614 = vadd.f32 %v574, %v613
      %v615 = vpop.f32.mrf.mxu0
      %v616 = vpop.f32.mrf.mxu0
      %v617 = vpop.f32.mrf.mxu0
      %618 = vdwg.mxu0
      %v619 = vmax.f32 %v614, 0.0
      %vm620 = vcmask 1043456
      %v621 = vsel %vm620, %v619, 0.0
      %v622 = vrot.slane %v621, 4
      %v623 = vadd.f32 %v621, %v622
      %v624 = vrot.slane %v623, 2
      %v625 = vadd.f32 %v623, %v624
      %v626 = vrot.slane %v625, 1
      %v627 = vadd.f32 %v625, %v626
      %v628 = vrcp.pop 4.0
      %v629 = vmul.f32 %v627, %v628
      %630 = vst [vmem:[%s166] sm:$0x1] %v629
      %p631 = scmp.lt.s32.totalorder %s14, 7
      %s632 = scalar_select %p631, %s14, 7
      %s633 = scalar_lea.vmem %s3, %s632
      // Predicated region
      $region33: #{validator_net_forward.6} parent=31 // pred_check
        %p634 = pneg %p100
      $region34: #{validator_net_forward.6} parent=31 // pred_check_branch
        %636 = sbr.rel (%p634) target = $region36
      $region35: #{validator_net_forward.6} parent=31 // pred_region
        _
      $region36: #{validator_net_forward.6} parent=31 // pred_fallthru
        _
    $region32: #{validator_net_forward.6} parent=5 // pred_fallthru
      _
    %p637 = scmp.le.s32.totalorder 2, %s9
    // Predicated region
    $region37: #{validator_net_forward.6} parent=5 // pred_check
      %p638 = pneg %p637
    $region38: #{validator_net_forward.6} parent=5 // pred_check_branch
      %640 = sbr.rel (%p638) target = $region40
    $region39: #{validator_net_forward.6} parent=5 // pred_region
      %s641 = ssub.s32 %s9, 2
      // Predicated region
      $region41: #{validator_net_forward.6} parent=39 // pred_check
        %p642 = pneg %p106
      $region42: #{validator_net_forward.6} parent=39 // pred_check_branch
        %644 = sbr.rel (%p642) target = $region44
      $region43: #{validator_net_forward.6} parent=39 // pred_region
        %p645 = scmp.lt.s32.totalorder %s15, 7
        %s646 = scalar_select %p645, %s15, 7
        %s647 = scalar_lea.vmem %s3, %s646
      $region44: #{validator_net_forward.6} parent=39 // pred_fallthru
        _
    $region40: #{validator_net_forward.6} parent=5 // pred_fallthru
      _
  $region6: #{validator_net_forward.6} parent=0 // loop_footer
    %s13 = sadd.s32 1, %s9
  $region7: #{validator_net_forward.6} parent=0 // loop_footer_branch
    %8 = sbr.rel target = $region3
  $region8: #{validator_net_forward.6} parent=0 // loop_exit
    _

// kernel: validator_net_forward.7
$region0: #{validator_net_forward.7}
  #allocation0 [shape = 'u32[]', space=smem, size = 0x4, offset = 0x4, fixed_abs, tag = 'smem constant byte address 0x4 - core index']
  #allocation1 [shape = 'u32[144,128]{1,0:T(1,128)}', space=vmem, size = 0x12000, scoped, tag = 'internal scratch']
  %s0 = inlined_call_operand.vmem [shape: bf16[32,128], index: 0, kind: input, shape index: {}]
  %s1 = inlined_call_operand.vmem [shape: bf16[128,384], index: 1, kind: input, shape index: {}]
  %s2 = inlined_call_operand.vmem [shape: bf16[128,384], index: 2, kind: input, shape index: {}]
  %s3 = inlined_call_operand.vmem [shape: f32[1,384], index: 3, kind: input, shape index: {}]
  %s4 = inlined_call_operand.vmem [shape: f32[1,384], index: 4, kind: input, shape index: {}]
  %s5 = inlined_call_operand.vmem [shape: bf16[128,64], index: 5, kind: input, shape index: {}]
  %s6 = inlined_call_operand.vmem [shape: f32[1,64], index: 6, kind: input, shape index: {}]
  %s7 = inlined_call_operand.vmem [shape: bf16[64,2], index: 7, kind: input, shape index: {}]
  %s8 = inlined_call_operand.vmem [shape: f32[1,2], index: 8, kind: input, shape index: {}]
  %s9 = inlined_call_operand.vmem [shape: f32[8,2], index: 9, kind: output, shape index: {}]
  %s10 = sld [smem:[#allocation0]]
  $region46: #{validator_net_forward.7} parent=0
    _
  %s12 = ssub.s32 1, %s10
  %s13 = scalar_select 0, %s12, %s10
  // Predicated region
  $region2: #{validator_net_forward.7} parent=0 // pred_check
    _
  $region3: #{validator_net_forward.7} parent=0 // pred_check_branch
    %15 = sbr.rel (0) target = $region5
  $region4: #{validator_net_forward.7} parent=0 // pred_region
    _
  $region5: #{validator_net_forward.7} parent=0 // pred_fallthru
    _
  // Predicated region
  $region6: #{validator_net_forward.7} parent=0 // pred_check
    _
  $region7: #{validator_net_forward.7} parent=0 // pred_check_branch
    %17 = sbr.rel (0) target = $region9
  $region8: #{validator_net_forward.7} parent=0 // pred_region
    _
  $region9: #{validator_net_forward.7} parent=0 // pred_fallthru
    _
  // Predicated region
  $region10: #{validator_net_forward.7} parent=0 // pred_check
    _
  $region11: #{validator_net_forward.7} parent=0 // pred_check_branch
    %19 = sbr.rel (0) target = $region13
  $region12: #{validator_net_forward.7} parent=0 // pred_region
    _
  $region13: #{validator_net_forward.7} parent=0 // pred_fallthru
    _
  // Predicated region
  $region14: #{validator_net_forward.7} parent=0 // pred_check
    _
  $region15: #{validator_net_forward.7} parent=0 // pred_check_branch
    %21 = sbr.rel (0) target = $region17
  $region16: #{validator_net_forward.7} parent=0 // pred_region
    _
  $region17: #{validator_net_forward.7} parent=0 // pred_fallthru
    _
  // Predicated region
  $region18: #{validator_net_forward.7} parent=0 // pred_check
    _
  $region19: #{validator_net_forward.7} parent=0 // pred_check_branch
    %23 = sbr.rel (0) target = $region21
  $region20: #{validator_net_forward.7} parent=0 // pred_region
    _
  $region21: #{validator_net_forward.7} parent=0 // pred_fallthru
    _
  // Predicated region
  $region22: #{validator_net_forward.7} parent=0 // pred_check
    _
  $region23: #{validator_net_forward.7} parent=0 // pred_check_branch
    %25 = sbr.rel (0) target = $region25
  $region24: #{validator_net_forward.7} parent=0 // pred_region
    _
  $region25: #{validator_net_forward.7} parent=0 // pred_fallthru
    _
  // Predicated region
  $region26: #{validator_net_forward.7} parent=0 // pred_check
    _
  $region27: #{validator_net_forward.7} parent=0 // pred_check_branch
    %27 = sbr.rel (0) target = $region29
  $region28: #{validator_net_forward.7} parent=0 // pred_region
    _
  $region29: #{validator_net_forward.7} parent=0 // pred_fallthru
    _
  // Predicated region
  $region30: #{validator_net_forward.7} parent=0 // pred_check
    _
  $region31: #{validator_net_forward.7} parent=0 // pred_check_branch
    %29 = sbr.rel (0) target = $region33
  $region32: #{validator_net_forward.7} parent=0 // pred_region
    _
  $region33: #{validator_net_forward.7} parent=0 // pred_fallthru
    _
  // Predicated region
  $region34: #{validator_net_forward.7} parent=0 // pred_check
    _
  $region35: #{validator_net_forward.7} parent=0 // pred_check_branch
    %31 = sbr.rel (0) target = $region37
  $region36: #{validator_net_forward.7} parent=0 // pred_region
    _
  $region37: #{validator_net_forward.7} parent=0 // pred_fallthru
    _
  %v33 = vld [vmem:[%s0] sm:$0xf]
  %v34 = vld [vmem:[%s0 + $0x4] sm:$0xf]
  %v35 = vld [vmem:[%s0 + $0x8] sm:$0xf]
  %v36 = vld [vmem:[%s0 + $0xc] sm:$0xf]
  %v37 = vld [vmem:[%s1] sm:$0xff]
  %v38 = vld [vmem:[%s1 + $0x8] sm:$0xf]
  %v39 = vld [vmem:[%s1 + $0xc] sm:$0xff]
  %v40 = vld [vmem:[%s1 + $0x14] sm:$0xf]
  %v41 = vld [vmem:[%s1 + $0x18] sm:$0xff]
  %v42 = vld [vmem:[%s1 + $0x20] sm:$0xf]
  %v43 = vld [vmem:[%s1 + $0x24] sm:$0xff]
  %v44 = vld [vmem:[%s1 + $0x2c] sm:$0xf]
  %v45 = vld [vmem:[%s1 + $0x30] sm:$0xff]
  %v46 = vld [vmem:[%s1 + $0x38] sm:$0xf]
  %v47 = vld [vmem:[%s1 + $0x3c] sm:$0xff]
  %v48 = vld [vmem:[%s1 + $0x44] sm:$0xf]
  %v49 = vld [vmem:[%s1 + $0x48] sm:$0xff]
  %v50 = vld [vmem:[%s1 + $0x50] sm:$0xf]
  %v51 = vld [vmem:[%s1 + $0x54] sm:$0xff]
  %v52 = vld [vmem:[%s1 + $0x5c] sm:$0xf]
  %v53 = vld [vmem:[%s1 + $0x60] sm:$0xff]
  %v54 = vld [vmem:[%s1 + $0x68] sm:$0xf]
  %v55 = vld [vmem:[%s1 + $0x6c] sm:$0xff]
  %v56 = vld [vmem:[%s1 + $0x74] sm:$0xf]
  %v57 = vld [vmem:[%s1 + $0x78] sm:$0xff]
  %v58 = vld [vmem:[%s1 + $0x80] sm:$0xf]
  %v59 = vld [vmem:[%s1 + $0x84] sm:$0xff]
  %v60 = vld [vmem:[%s1 + $0x8c] sm:$0xf]
  %v61 = vld [vmem:[%s1 + $0x90] sm:$0xff]
  %v62 = vld [vmem:[%s1 + $0x98] sm:$0xf]
  %v63 = vld [vmem:[%s1 + $0x9c] sm:$0xff]
  %v64 = vld [vmem:[%s1 + $0xa4] sm:$0xf]
  %v65 = vld [vmem:[%s1 + $0xa8] sm:$0xff]
  %v66 = vld [vmem:[%s1 + $0xb0] sm:$0xf]
  %v67 = vld [vmem:[%s1 + $0xb4] sm:$0xff]
  %v68 = vld [vmem:[%s1 + $0xbc] sm:$0xf]
  %v69 = vld [vmem:[%s3] sm:$0x7]
  %v71 = vlaneseq
  %v72 = vshrl.u32 %v71, 7
  %v73 = vsub.s32 0, %v72
  %v74 = vrot.slane %v69, %v73
  %v75 = vlaneseq
  %v76 = vshrl.u32 %v75, 7
  %v77 = vsub.s32 1, %v76
  %v78 = vrot.slane %v69, %v77
  %v79 = vlaneseq
  %v80 = vshrl.u32 %v79, 7
  %v81 = vsub.s32 2, %v80
  %v82 = vrot.slane %v69, %v81
  %v90 = vunpack.c.l.b16 %v33
  %v91 = vunpack.c.l.b16 %v34
  %v92 = vunpack.c.l.b16 %v35
  %v93 = vunpack.c.l.b16 %v36
  %v94 = vpack.c.b16 %v91, %v90
  %v95 = vpack.c.b16 %v93, %v92
  %v130 = vunpack.c.l.b16 %v37
  %v131 = vunpack.c.h.b16 %v37
  %v132 = vunpack.c.l.b16 %v38
  %v133 = vunpack.c.l.b16 %v39
  %v134 = vunpack.c.h.b16 %v39
  %v135 = vunpack.c.l.b16 %v40
  %v136 = vunpack.c.l.b16 %v41
  %v137 = vunpack.c.h.b16 %v41
  %v138 = vunpack.c.l.b16 %v42
  %v139 = vunpack.c.l.b16 %v43
  %v140 = vunpack.c.h.b16 %v43
  %v141 = vunpack.c.l.b16 %v44
  %v142 = vunpack.c.l.b16 %v45
  %v143 = vunpack.c.h.b16 %v45
  %v144 = vunpack.c.l.b16 %v46
  %v145 = vunpack.c.l.b16 %v47
  %v146 = vunpack.c.h.b16 %v47
  %v147 = vunpack.c.l.b16 %v48
  %v148 = vunpack.c.l.b16 %v49
  %v149 = vunpack.c.h.b16 %v49
  %v150 = vunpack.c.l.b16 %v50
  %v151 = vunpack.c.l.b16 %v51
  %v152 = vunpack.c.h.b16 %v51
  %v153 = vunpack.c.l.b16 %v52
  %v154 = vunpack.c.l.b16 %v53
  %v155 = vunpack.c.h.b16 %v53
  %v156 = vunpack.c.l.b16 %v54
  %v157 = vunpack.c.l.b16 %v55
  %v158 = vunpack.c.h.b16 %v55
  %v159 = vunpack.c.l.b16 %v56
  %v160 = vunpack.c.l.b16 %v57
  %v161 = vunpack.c.h.b16 %v57
  %v162 = vunpack.c.l.b16 %v58
  %v163 = vunpack.c.l.b16 %v59
  %v164 = vunpack.c.h.b16 %v59
  %v165 = vunpack.c.l.b16 %v60
  %v166 = vunpack.c.l.b16 %v61
  %v167 = vunpack.c.h.b16 %v61
  %v168 = vunpack.c.l.b16 %v62
  %v169 = vunpack.c.l.b16 %v63
  %v170 = vunpack.c.h.b16 %v63
  %v171 = vunpack.c.l.b16 %v64
  %v172 = vunpack.c.l.b16 %v65
  %v173 = vunpack.c.h.b16 %v65
  %v174 = vunpack.c.l.b16 %v66
  %v175 = vunpack.c.l.b16 %v67
  %v176 = vunpack.c.h.b16 %v67
  %v177 = vunpack.c.l.b16 %v68
  %v178 = vpack.c.b16 %v133, %v130
  %v179 = vpack.c.b16 %v134, %v131
  %v180 = vpack.c.b16 %v135, %v132
  %v181 = vpack.c.b16 %v139, %v136
  %v182 = vpack.c.b16 %v140, %v137
  %v183 = vpack.c.b16 %v141, %v138
  %v184 = vpack.c.b16 %v145, %v142
  %v185 = vpack.c.b16 %v146, %v143
  %v186 = vpack.c.b16 %v147, %v144
  %v187 = vpack.c.b16 %v151, %v148
  %v188 = vpack.c.b16 %v152, %v149
  %v189 = vpack.c.b16 %v153, %v150
  %v190 = vpack.c.b16 %v157, %v154
  %v191 = vpack.c.b16 %v158, %v155
  %v192 = vpack.c.b16 %v159, %v156
  %v193 = vpack.c.b16 %v163, %v160
  %v194 = vpack.c.b16 %v164, %v161
  %v195 = vpack.c.b16 %v165, %v162
  %v196 = vpack.c.b16 %v169, %v166
  %v197 = vpack.c.b16 %v170, %v167
  %v198 = vpack.c.b16 %v171, %v168
  %v199 = vpack.c.b16 %v175, %v172
  %v200 = vpack.c.b16 %v176, %v173
  %v201 = vpack.c.b16 %v177, %v174
  %226 = vmatprep.subr.bf16.mxu0 %v200
  %227 = vmatpush1.bf16.msra.mxu0 %v199
  %228 = vmatprep.subr.bf16.mxu0 %v197
  %229 = vmatpush1.bf16.msra.mxu0 %v196
  %230 = vmatprep.subr.bf16.mxu0 %v194
  %231 = vmatpush1.bf16.msra.mxu0 %v193
  %232 = vmatprep.subr.bf16.mxu0 %v191
  %233 = vmatpush1.bf16.msra.mxu0 %v190
  %234 = vmatprep.subr.bf16.mxu0 %v188
  %235 = vmatpush1.bf16.msra.mxu0 %v187
  %236 = vmatprep.subr.bf16.mxu0 %v185
  %237 = vmatpush1.bf16.msra.mxu0 %v184
  %238 = vmatprep.subr.bf16.mxu0 %v182
  %239 = vmatpush1.bf16.msra.mxu0 %v181
  %240 = vmatprep.subr.bf16.mxu0 %v179
  %241 = vmatpush1.bf16.msra.mxu0 %v178
  %242 = vmatprep.subr.bf16.mxu0 0
  %243 = vmatpush2.bf16.msra.mxu0 0
  %244 = vmatprep.subr.bf16.mxu0 0
  %245 = vmatpush2.bf16.msra.mxu0 0
  %246 = vmatprep.subr.bf16.mxu0 0
  %247 = vmatpush2.bf16.msra.mxu0 0
  %248 = vmatprep.subr.bf16.mxu0 0
  %249 = vmatpush2.bf16.msra.mxu0 0
  %250 = vmatprep.subr.bf16.mxu0 0
  %251 = vmatpush2.bf16.msra.mxu0 0
  %252 = vmatprep.subr.bf16.mxu0 0
  %253 = vmatpush2.bf16.msra.mxu0 0
  %254 = vmatprep.subr.bf16.mxu0 0
  %255 = vmatpush2.bf16.msra.mxu0 0
  %256 = vmatprep.subr.bf16.mxu0 0
  %257 = vmatpush2.bf16.msra.mxu0 0
  %258 = vmatprep.mubr.bf16.mxu0 0
  %259 = vmatmul.mubr.bf16.gmra.mxu0 %v94
  %v260 = vpop.f32.mrf.mxu0
  %v261 = vadd.f32 %v74, %v260
  %v262 = vpop.f32.mrf.mxu0
  %v263 = vadd.f32 %v78, %v262
  %v264 = vpop.f32.mrf.mxu0
  %v265 = vadd.f32 %v74, %v264
  %v266 = vpop.f32.mrf.mxu0
  %v267 = vadd.f32 %v78, %v266
  %268 = vmatprep.mubr.bf16.mxu0 0
  %269 = vmatmul.mubr.bf16.gmra.mxu0 %v95
  %v270 = vpop.f32.mrf.mxu0
  %v271 = vadd.f32 %v74, %v270
  %v272 = vpop.f32.mrf.mxu0
  %v273 = vadd.f32 %v78, %v272
  %v274 = vpop.f32.mrf.mxu0
  %v275 = vadd.f32 %v74, %v274
  %v276 = vpop.f32.mrf.mxu0
  %v277 = vadd.f32 %v78, %v276
  %278 = vdwg.mxu0
  %279 = vmatprep.subr.bf16.mxu0 0
  %280 = vmatpush1.bf16.msra.mxu0 %v201
  %281 = vmatprep.subr.bf16.mxu0 0
  %282 = vmatpush1.bf16.msra.mxu0 %v198
  %283 = vmatprep.subr.bf16.mxu0 0
  %284 = vmatpush1.bf16.msra.mxu0 %v195
  %285 = vmatprep.subr.bf16.mxu0 0
  %286 = vmatpush1.bf16.msra.mxu0 %v192
  %287 = vmatprep.subr.bf16.mxu0 0
  %288 = vmatpush1.bf16.msra.mxu0 %v189
  %289 = vmatprep.subr.bf16.mxu0 0
  %290 = vmatpush1.bf16.msra.mxu0 %v186
  %291 = vmatprep.subr.bf16.mxu0 0
  %292 = vmatpush1.bf16.msra.mxu0 %v183
  %293 = vmatprep.subr.bf16.mxu0 0
  %294 = vmatpush1.bf16.msra.mxu0 %v180
  %295 = vmatprep.subr.bf16.mxu0 0
  %296 = vmatpush2.bf16.msra.mxu0 0
  %297 = vmatprep.subr.bf16.mxu0 0
  %298 = vmatpush2.bf16.msra.mxu0 0
  %299 = vmatprep.subr.bf16.mxu0 0
  %300 = vmatpush2.bf16.msra.mxu0 0
  %301 = vmatprep.subr.bf16.mxu0 0
  %302 = vmatpush2.bf16.msra.mxu0 0
  %303 = vmatprep.subr.bf16.mxu0 0
  %304 = vmatpush2.bf16.msra.mxu0 0
  %305 = vmatprep.subr.bf16.mxu0 0
  %306 = vmatpush2.bf16.msra.mxu0 0
  %307 = vmatprep.subr.bf16.mxu0 0
  %308 = vmatpush2.bf16.msra.mxu0 0
  %309 = vmatprep.subr.bf16.mxu0 0
  %310 = vmatpush2.bf16.msra.mxu0 0
  %311 = vmatprep.mubr.bf16.mxu0 0
  %312 = vmatmul.mubr.bf16.gmra.mxu0 %v94
  %v313 = vpop.f32.mrf.mxu0
  %v314 = vadd.f32 %v82, %v313
  %v315 = vpop.f32.mrf.mxu0
  %v316 = vpop.f32.mrf.mxu0
  %v317 = vadd.f32 %v82, %v316
  %v318 = vpop.f32.mrf.mxu0
  %319 = vmatprep.mubr.bf16.mxu0 0
  %320 = vmatmul.mubr.bf16.gmra.mxu0 %v95
  %v321 = vpop.f32.mrf.mxu0
  %v322 = vadd.f32 %v82, %v321
  %v323 = vpop.f32.mrf.mxu0
  %v324 = vpop.f32.mrf.mxu0
  %v325 = vadd.f32 %v82, %v324
  %v326 = vpop.f32.mrf.mxu0
  %327 = vdwg.mxu0
  %v328 = vld [vmem:[%s2] sm:$0xff]
  %v329 = vld [vmem:[%s2 + $0x8] sm:$0xf]
  %v330 = vld [vmem:[%s2 + $0xc] sm:$0xff]
  %v331 = vld [vmem:[%s2 + $0x14] sm:$0xf]
  %v332 = vld [vmem:[%s2 + $0x18] sm:$0xff]
  %v333 = vld [vmem:[%s2 + $0x20] sm:$0xf]
  %v334 = vld [vmem:[%s2 + $0x24] sm:$0xff]
  %v335 = vld [vmem:[%s2 + $0x2c] sm:$0xf]
  %v336 = vld [vmem:[%s2 + $0x30] sm:$0xff]
  %v337 = vld [vmem:[%s2 + $0x38] sm:$0xf]
  %v338 = vld [vmem:[%s2 + $0x3c] sm:$0xff]
  %v339 = vld [vmem:[%s2 + $0x44] sm:$0xf]
  %v340 = vld [vmem:[%s2 + $0x48] sm:$0xff]
  %v341 = vld [vmem:[%s2 + $0x50] sm:$0xf]
  %v342 = vld [vmem:[%s2 + $0x54] sm:$0xff]
  %v343 = vld [vmem:[%s2 + $0x5c] sm:$0xf]
  %v344 = vld [vmem:[%s2 + $0x60] sm:$0xff]
  %v345 = vld [vmem:[%s2 + $0x68] sm:$0xf]
  %v346 = vld [vmem:[%s2 + $0x6c] sm:$0xff]
  %v347 = vld [vmem:[%s2 + $0x74] sm:$0xf]
  %v348 = vld [vmem:[%s2 + $0x78] sm:$0xff]
  %v349 = vld [vmem:[%s2 + $0x80] sm:$0xf]
  %v350 = vld [vmem:[%s2 + $0x84] sm:$0xff]
  %v351 = vld [vmem:[%s2 + $0x8c] sm:$0xf]
  %v352 = vld [vmem:[%s2 + $0x90] sm:$0xff]
  %v353 = vld [vmem:[%s2 + $0x98] sm:$0xf]
  %v354 = vld [vmem:[%s2 + $0x9c] sm:$0xff]
  %v355 = vld [vmem:[%s2 + $0xa4] sm:$0xf]
  %v356 = vld [vmem:[%s2 + $0xa8] sm:$0xff]
  %v357 = vld [vmem:[%s2 + $0xb0] sm:$0xf]
  %v358 = vld [vmem:[%s2 + $0xb4] sm:$0xff]
  %v359 = vld [vmem:[%s2 + $0xbc] sm:$0xf]
  %v360 = vld [vmem:[%s4] sm:$0x7]
  %v362 = vlaneseq
  %v363 = vshrl.u32 %v362, 7
  %v364 = vsub.s32 0, %v363
  %v365 = vrot.slane %v360, %v364
  %v366 = vlaneseq
  %v367 = vshrl.u32 %v366, 7
  %v368 = vsub.s32 1, %v367
  %v369 = vrot.slane %v360, %v368
  %v370 = vlaneseq
  %v371 = vshrl.u32 %v370, 7
  %v372 = vsub.s32 2, %v371
  %v373 = vrot.slane %v360, %v372
  %v409 = vunpack.c.l.b16 %v328
  %v410 = vunpack.c.h.b16 %v328
  %v411 = vunpack.c.l.b16 %v329
  %v412 = vunpack.c.l.b16 %v330
  %v413 = vunpack.c.h.b16 %v330
  %v414 = vunpack.c.l.b16 %v331
  %v415 = vunpack.c.l.b16 %v332
  %v416 = vunpack.c.h.b16 %v332
  %v417 = vunpack.c.l.b16 %v333
  %v418 = vunpack.c.l.b16 %v334
  %v419 = vunpack.c.h.b16 %v334
  %v420 = vunpack.c.l.b16 %v335
  %v421 = vunpack.c.l.b16 %v336
  %v422 = vunpack.c.h.b16 %v336
  %v423 = vunpack.c.l.b16 %v337
  %v424 = vunpack.c.l.b16 %v338
  %v425 = vunpack.c.h.b16 %v338
  %v426 = vunpack.c.l.b16 %v339
  %v427 = vunpack.c.l.b16 %v340
  %v428 = vunpack.c.h.b16 %v340
  %v429 = vunpack.c.l.b16 %v341
  %v430 = vunpack.c.l.b16 %v342
  %v431 = vunpack.c.h.b16 %v342
  %v432 = vunpack.c.l.b16 %v343
  %v433 = vunpack.c.l.b16 %v344
  %v434 = vunpack.c.h.b16 %v344
  %v435 = vunpack.c.l.b16 %v345
  %v436 = vunpack.c.l.b16 %v346
  %v437 = vunpack.c.h.b16 %v346
  %v438 = vunpack.c.l.b16 %v347
  %v439 = vunpack.c.l.b16 %v348
  %v440 = vunpack.c.h.b16 %v348
  %v441 = vunpack.c.l.b16 %v349
  %v442 = vunpack.c.l.b16 %v350
  %v443 = vunpack.c.h.b16 %v350
  %v444 = vunpack.c.l.b16 %v351
  %v445 = vunpack.c.l.b16 %v352
  %v446 = vunpack.c.h.b16 %v352
  %v447 = vunpack.c.l.b16 %v353
  %v448 = vunpack.c.l.b16 %v354
  %v449 = vunpack.c.h.b16 %v354
  %v450 = vunpack.c.l.b16 %v355
  %v451 = vunpack.c.l.b16 %v356
  %v452 = vunpack.c.h.b16 %v356
  %v453 = vunpack.c.l.b16 %v357
  %v454 = vunpack.c.l.b16 %v358
  %v455 = vunpack.c.h.b16 %v358
  %v456 = vunpack.c.l.b16 %v359
  %v457 = vpack.c.b16 %v412, %v409
  %v458 = vpack.c.b16 %v413, %v410
  %v459 = vpack.c.b16 %v414, %v411
  %v460 = vpack.c.b16 %v418, %v415
  %v461 = vpack.c.b16 %v419, %v416
  %v462 = vpack.c.b16 %v420, %v417
  %v463 = vpack.c.b16 %v424, %v421
  %v464 = vpack.c.b16 %v425, %v422
  %v465 = vpack.c.b16 %v426, %v423
  %v466 = vpack.c.b16 %v430, %v427
  %v467 = vpack.c.b16 %v431, %v428
  %v468 = vpack.c.b16 %v432, %v429
  %v469 = vpack.c.b16 %v436, %v433
  %v470 = vpack.c.b16 %v437, %v434
  %v471 = vpack.c.b16 %v438, %v435
  %v472 = vpack.c.b16 %v442, %v439
  %v473 = vpack.c.b16 %v443, %v440
  %v474 = vpack.c.b16 %v444, %v441
  %v475 = vpack.c.b16 %v448, %v445
  %v476 = vpack.c.b16 %v449, %v446
  %v477 = vpack.c.b16 %v450, %v447
  %v478 = vpack.c.b16 %v454, %v451
  %v479 = vpack.c.b16 %v455, %v452
  %v480 = vpack.c.b16 %v456, %v453
  %505 = vmatprep.subr.bf16.mxu0 %v479
  %506 = vmatpush1.bf16.msra.mxu0 %v478
  %507 = vmatprep.subr.bf16.mxu0 %v476
  %508 = vmatpush1.bf16.msra.mxu0 %v475
  %509 = vmatprep.subr.bf16.mxu0 %v473
  %510 = vmatpush1.bf16.msra.mxu0 %v472
  %511 = vmatprep.subr.bf16.mxu0 %v470
  %512 = vmatpush1.bf16.msra.mxu0 %v469
  %513 = vmatprep.subr.bf16.mxu0 %v467
  %514 = vmatpush1.bf16.msra.mxu0 %v466
  %515 = vmatprep.subr.bf16.mxu0 %v464
  %516 = vmatpush1.bf16.msra.mxu0 %v463
  %517 = vmatprep.subr.bf16.mxu0 %v461
  %518 = vmatpush1.bf16.msra.mxu0 %v460
  %519 = vmatprep.subr.bf16.mxu0 %v458
  %520 = vmatpush1.bf16.msra.mxu0 %v457
  %521 = vmatprep.subr.bf16.mxu0 0
  %522 = vmatpush2.bf16.msra.mxu0 0
  %523 = vmatprep.subr.bf16.mxu0 0
  %524 = vmatpush2.bf16.msra.mxu0 0
  %525 = vmatprep.subr.bf16.mxu0 0
  %526 = vmatpush2.bf16.msra.mxu0 0
  %527 = vmatprep.subr.bf16.mxu0 0
  %528 = vmatpush2.bf16.msra.mxu0 0
  %529 = vmatprep.subr.bf16.mxu0 0
  %530 = vmatpush2.bf16.msra.mxu0 0
  %531 = vmatprep.subr.bf16.mxu0 0
  %532 = vmatpush2.bf16.msra.mxu0 0
  %533 = vmatprep.subr.bf16.mxu0 0
  %534 = vmatpush2.bf16.msra.mxu0 0
  %535 = vmatprep.subr.bf16.mxu0 0
  %536 = vmatpush2.bf16.msra.mxu0 0
  %537 = vmatprep.mubr.bf16.mxu0 0
  %538 = vmatmul.mubr.bf16.gmra.mxu0 0
  %v539 = vpop.f32.mrf.mxu0
  %v540 = vadd.f32 %v365, %v539
  %v541 = vpop.f32.mrf.mxu0
  %v542 = vadd.f32 %v369, %v541
  %v543 = vpop.f32.mrf.mxu0
  %v544 = vpop.f32.mrf.mxu0
  %545 = vdwg.mxu0
  %546 = vmatprep.subr.bf16.mxu0 0
  %547 = vmatpush1.bf16.msra.mxu0 %v480
  %548 = vmatprep.subr.bf16.mxu0 0
  %549 = vmatpush1.bf16.msra.mxu0 %v477
  %550 = vmatprep.subr.bf16.mxu0 0
  %551 = vmatpush1.bf16.msra.mxu0 %v474
  %552 = vmatprep.subr.bf16.mxu0 0
  %553 = vmatpush1.bf16.msra.mxu0 %v471
  %554 = vmatprep.subr.bf16.mxu0 0
  %555 = vmatpush1.bf16.msra.mxu0 %v468
  %556 = vmatprep.subr.bf16.mxu0 0
  %557 = vmatpush1.bf16.msra.mxu0 %v465
  %558 = vmatprep.subr.bf16.mxu0 0
  %559 = vmatpush1.bf16.msra.mxu0 %v462
  %560 = vmatprep.subr.bf16.mxu0 0
  %561 = vmatpush1.bf16.msra.mxu0 %v459
  %562 = vmatprep.subr.bf16.mxu0 0
  %563 = vmatpush2.bf16.msra.mxu0 0
  %564 = vmatprep.subr.bf16.mxu0 0
  %565 = vmatpush2.bf16.msra.mxu0 0
  %566 = vmatprep.subr.bf16.mxu0 0
  %567 = vmatpush2.bf16.msra.mxu0 0
  %568 = vmatprep.subr.bf16.mxu0 0
  %569 = vmatpush2.bf16.msra.mxu0 0
  %570 = vmatprep.subr.bf16.mxu0 0
  %571 = vmatpush2.bf16.msra.mxu0 0
  %572 = vmatprep.subr.bf16.mxu0 0
  %573 = vmatpush2.bf16.msra.mxu0 0
  %574 = vmatprep.subr.bf16.mxu0 0
  %575 = vmatpush2.bf16.msra.mxu0 0
  %576 = vmatprep.subr.bf16.mxu0 0
  %577 = vmatpush2.bf16.msra.mxu0 0
  %578 = vmatprep.mubr.bf16.mxu0 0
  %579 = vmatmul.mubr.bf16.gmra.mxu0 0
  %v580 = vpop.f32.mrf.mxu0
  %v581 = vadd.f32 %v373, %v580
  %v582 = vpop.f32.mrf.mxu0
  %v583 = vpop.f32.mrf.mxu0
  %v584 = vpop.f32.mrf.mxu0
  %585 = vdwg.mxu0
  %v586 = vadd.f32 %v261, %v540
  %v587 = vxor.u32 %v586, 2147483648
  %v588 = vmul.f32 %v587, 1.442695
  %v589 = vpow.pop %v588
  %v590 = vadd.f32 %v589, 1.0
  %v591 = vrcp.pop %v590
  %v592 = vmul.f32 1.0, %v591
  %v593 = vadd.f32 %v263, %v542
  %v594 = vxor.u32 %v593, 2147483648
  %v595 = vmul.f32 %v594, 1.442695
  %v596 = vpow.pop %v595
  %v597 = vadd.f32 %v596, 1.0
  %v598 = vrcp.pop %v597
  %v599 = vmul.f32 1.0, %v598
  %v600 = vmul.f32 %v592, %v581
  %v601 = vadd.f32 %v314, %v600
  %v602 = vtanh.pop %v601
  %v603 = vsub.f32 1.0, %v599
  %v604 = vmul.f32 %v603, %v602
  %v605 = vmul.f32 %v599, 0.0
  %v606 = vadd.f32 %v604, %v605
  %v607 = vpack.c.bf16 %v606, %v606
  %608 = vmatprep.subr.bf16.mxu0 %v479
  %609 = vmatpush1.bf16.msra.mxu0 %v478
  %610 = vmatprep.subr.bf16.mxu0 %v476
  %611 = vmatpush1.bf16.msra.mxu0 %v475
  %612 = vmatprep.subr.bf16.mxu0 %v473
  %613 = vmatpush1.bf16.msra.mxu0 %v472
  %614 = vmatprep.subr.bf16.mxu0 %v470
  %615 = vmatpush1.bf16.msra.mxu0 %v469
  %616 = vmatprep.subr.bf16.mxu0 %v467
  %617 = vmatpush1.bf16.msra.mxu0 %v466
  %618 = vmatprep.subr.bf16.mxu0 %v464
  %619 = vmatpush1.bf16.msra.mxu0 %v463
  %620 = vmatprep.subr.bf16.mxu0 %v461
  %621 = vmatpush1.bf16.msra.mxu0 %v460
  %622 = vmatprep.subr.bf16.mxu0 %v458
  %623 = vmatpush1.bf16.msra.mxu0 %v457
  %624 = vmatprep.subr.bf16.mxu0 0
  %625 = vmatpush2.bf16.msra.mxu0 0
  %626 = vmatprep.subr.bf16.mxu0 0
  %627 = vmatpush2.bf16.msra.mxu0 0
  %628 = vmatprep.subr.bf16.mxu0 0
  %629 = vmatpush2.bf16.msra.mxu0 0
  %630 = vmatprep.subr.bf16.mxu0 0
  %631 = vmatpush2.bf16.msra.mxu0 0
  %632 = vmatprep.subr.bf16.mxu0 0
  %633 = vmatpush2.bf16.msra.mxu0 0
  %634 = vmatprep.subr.bf16.mxu0 0
  %635 = vmatpush2.bf16.msra.mxu0 0
  %636 = vmatprep.subr.bf16.mxu0 0
  %637 = vmatpush2.bf16.msra.mxu0 0
  %638 = vmatprep.subr.bf16.mxu0 0
  %639 = vmatpush2.bf16.msra.mxu0 0
  %640 = vmatprep.mubr.bf16.mxu0 0
  %641 = vmatmul.mubr.bf16.gmra.mxu0 %v607
  %v642 = vpop.f32.mrf.mxu0
  %v643 = vadd.f32 %v365, %v642
  %v644 = vpop.f32.mrf.mxu0
  %v645 = vadd.f32 %v369, %v644
  %v646 = vpop.f32.mrf.mxu0
  %v647 = vpop.f32.mrf.mxu0
  %648 = vdwg.mxu0
  %649 = vmatprep.subr.bf16.mxu0 0
  %650 = vmatpush1.bf16.msra.mxu0 %v480
  %651 = vmatprep.subr.bf16.mxu0 0
  %652 = vmatpush1.bf16.msra.mxu0 %v477
  %653 = vmatprep.subr.bf16.mxu0 0
  %654 = vmatpush1.bf16.msra.mxu0 %v474
  %655 = vmatprep.subr.bf16.mxu0 0
  %656 = vmatpush1.bf16.msra.mxu0 %v471
  %657 = vmatprep.subr.bf16.mxu0 0
  %658 = vmatpush1.bf16.msra.mxu0 %v468
  %659 = vmatprep.subr.bf16.mxu0 0
  %660 = vmatpush1.bf16.msra.mxu0 %v465
  %661 = vmatprep.subr.bf16.mxu0 0
  %662 = vmatpush1.bf16.msra.mxu0 %v462
  %663 = vmatprep.subr.bf16.mxu0 0
  %664 = vmatpush1.bf16.msra.mxu0 %v459
  %665 = vmatprep.subr.bf16.mxu0 0
  %666 = vmatpush2.bf16.msra.mxu0 0
  %667 = vmatprep.subr.bf16.mxu0 0
  %668 = vmatpush2.bf16.msra.mxu0 0
  %669 = vmatprep.subr.bf16.mxu0 0
  %670 = vmatpush2.bf16.msra.mxu0 0
  %671 = vmatprep.subr.bf16.mxu0 0
  %672 = vmatpush2.bf16.msra.mxu0 0
  %673 = vmatprep.subr.bf16.mxu0 0
  %674 = vmatpush2.bf16.msra.mxu0 0
  %675 = vmatprep.subr.bf16.mxu0 0
  %676 = vmatpush2.bf16.msra.mxu0 0
  %677 = vmatprep.subr.bf16.mxu0 0
  %678 = vmatpush2.bf16.msra.mxu0 0
  %679 = vmatprep.subr.bf16.mxu0 0
  %680 = vmatpush2.bf16.msra.mxu0 0
  %681 = vmatprep.mubr.bf16.mxu0 0
  %682 = vmatmul.mubr.bf16.gmra.mxu0 %v607
  %v683 = vpop.f32.mrf.mxu0
  %v684 = vadd.f32 %v373, %v683
  %v685 = vpop.f32.mrf.mxu0
  %v686 = vpop.f32.mrf.mxu0
  %v687 = vpop.f32.mrf.mxu0
  %688 = vdwg.mxu0
  %v689 = vadd.f32 %v265, %v643
  %v690 = vxor.u32 %v689, 2147483648
  %v691 = vmul.f32 %v690, 1.442695
  %v692 = vpow.pop %v691
  %v693 = vadd.f32 %v692, 1.0
  %v694 = vrcp.pop %v693
  %v695 = vmul.f32 1.0, %v694
  %v696 = vadd.f32 %v267, %v645
  %v697 = vxor.u32 %v696, 2147483648
  %v698 = vmul.f32 %v697, 1.442695
  %v699 = vpow.pop %v698
  %v700 = vadd.f32 %v699, 1.0
  %v701 = vrcp.pop %v700
  %v702 = vmul.f32 1.0, %v701
  %v703 = vmul.f32 %v695, %v684
  %v704 = vadd.f32 %v317, %v703
  %v705 = vtanh.pop %v704
  %v706 = vsub.f32 1.0, %v702
  %v707 = vmul.f32 %v706, %v705
  %v708 = vmul.f32 %v702, %v606
  %v709 = vadd.f32 %v707, %v708
  %v710 = vpack.c.bf16 %v709, %v709
  %711 = vmatprep.subr.bf16.mxu0 %v479
  %712 = vmatpush1.bf16.msra.mxu0 %v478
  %713 = vmatprep.subr.bf16.mxu0 %v476
  %714 = vmatpush1.bf16.msra.mxu0 %v475
  %715 = vmatprep.subr.bf16.mxu0 %v473
  %716 = vmatpush1.bf16.msra.mxu0 %v472
  %717 = vmatprep.subr.bf16.mxu0 %v470
  %718 = vmatpush1.bf16.msra.mxu0 %v469
  %719 = vmatprep.subr.bf16.mxu0 %v467
  %720 = vmatpush1.bf16.msra.mxu0 %v466
  %721 = vmatprep.subr.bf16.mxu0 %v464
  %722 = vmatpush1.bf16.msra.mxu0 %v463
  %723 = vmatprep.subr.bf16.mxu0 %v461
  %724 = vmatpush1.bf16.msra.mxu0 %v460
  %725 = vmatprep.subr.bf16.mxu0 %v458
  %726 = vmatpush1.bf16.msra.mxu0 %v457
  %727 = vmatprep.subr.bf16.mxu0 0
  %728 = vmatpush2.bf16.msra.mxu0 0
  %729 = vmatprep.subr.bf16.mxu0 0
  %730 = vmatpush2.bf16.msra.mxu0 0
  %731 = vmatprep.subr.bf16.mxu0 0
  %732 = vmatpush2.bf16.msra.mxu0 0
  %733 = vmatprep.subr.bf16.mxu0 0
  %734 = vmatpush2.bf16.msra.mxu0 0
  %735 = vmatprep.subr.bf16.mxu0 0
  %736 = vmatpush2.bf16.msra.mxu0 0
  %737 = vmatprep.subr.bf16.mxu0 0
  %738 = vmatpush2.bf16.msra.mxu0 0
  %739 = vmatprep.subr.bf16.mxu0 0
  %740 = vmatpush2.bf16.msra.mxu0 0
  %741 = vmatprep.subr.bf16.mxu0 0
  %742 = vmatpush2.bf16.msra.mxu0 0
  %743 = vmatprep.mubr.bf16.mxu0 0
  %744 = vmatmul.mubr.bf16.gmra.mxu0 %v710
  %v745 = vpop.f32.mrf.mxu0
  %v746 = vadd.f32 %v365, %v745
  %v747 = vpop.f32.mrf.mxu0
  %v748 = vadd.f32 %v369, %v747
  %v749 = vpop.f32.mrf.mxu0
  %v750 = vpop.f32.mrf.mxu0
  %751 = vdwg.mxu0
  %752 = vmatprep.subr.bf16.mxu0 0
  %753 = vmatpush1.bf16.msra.mxu0 %v480
  %754 = vmatprep.subr.bf16.mxu0 0
  %755 = vmatpush1.bf16.msra.mxu0 %v477
  %756 = vmatprep.subr.bf16.mxu0 0
  %757 = vmatpush1.bf16.msra.mxu0 %v474
  %758 = vmatprep.subr.bf16.mxu0 0
  %759 = vmatpush1.bf16.msra.mxu0 %v471
  %760 = vmatprep.subr.bf16.mxu0 0
  %761 = vmatpush1.bf16.msra.mxu0 %v468
  %762 = vmatprep.subr.bf16.mxu0 0
  %763 = vmatpush1.bf16.msra.mxu0 %v465
  %764 = vmatprep.subr.bf16.mxu0 0
  %765 = vmatpush1.bf16.msra.mxu0 %v462
  %766 = vmatprep.subr.bf16.mxu0 0
  %767 = vmatpush1.bf16.msra.mxu0 %v459
  %768 = vmatprep.subr.bf16.mxu0 0
  %769 = vmatpush2.bf16.msra.mxu0 0
  %770 = vmatprep.subr.bf16.mxu0 0
  %771 = vmatpush2.bf16.msra.mxu0 0
  %772 = vmatprep.subr.bf16.mxu0 0
  %773 = vmatpush2.bf16.msra.mxu0 0
  %774 = vmatprep.subr.bf16.mxu0 0
  %775 = vmatpush2.bf16.msra.mxu0 0
  %776 = vmatprep.subr.bf16.mxu0 0
  %777 = vmatpush2.bf16.msra.mxu0 0
  %778 = vmatprep.subr.bf16.mxu0 0
  %779 = vmatpush2.bf16.msra.mxu0 0
  %780 = vmatprep.subr.bf16.mxu0 0
  %781 = vmatpush2.bf16.msra.mxu0 0
  %782 = vmatprep.subr.bf16.mxu0 0
  %783 = vmatpush2.bf16.msra.mxu0 0
  %784 = vmatprep.mubr.bf16.mxu0 0
  %785 = vmatmul.mubr.bf16.gmra.mxu0 %v710
  %v786 = vpop.f32.mrf.mxu0
  %v787 = vadd.f32 %v373, %v786
  %v788 = vpop.f32.mrf.mxu0
  %v789 = vpop.f32.mrf.mxu0
  %v790 = vpop.f32.mrf.mxu0
  %791 = vdwg.mxu0
  %v792 = vadd.f32 %v271, %v746
  %v793 = vxor.u32 %v792, 2147483648
  %v794 = vmul.f32 %v793, 1.442695
  %v795 = vpow.pop %v794
  %v796 = vadd.f32 %v795, 1.0
  %v797 = vrcp.pop %v796
  %v798 = vmul.f32 1.0, %v797
  %v799 = vadd.f32 %v273, %v748
  %v800 = vxor.u32 %v799, 2147483648
  %v801 = vmul.f32 %v800, 1.442695
  %v802 = vpow.pop %v801
  %v803 = vadd.f32 %v802, 1.0
  %v804 = vrcp.pop %v803
  %v805 = vmul.f32 1.0, %v804
  %v806 = vmul.f32 %v798, %v787
  %v807 = vadd.f32 %v322, %v806
  %v808 = vtanh.pop %v807
  %v809 = vsub.f32 1.0, %v805
  %v810 = vmul.f32 %v809, %v808
  %v811 = vmul.f32 %v805, %v709
  %v812 = vadd.f32 %v810, %v811
  %v813 = vpack.c.bf16 %v812, %v812
  %814 = vmatprep.subr.bf16.mxu0 %v479
  %815 = vmatpush1.bf16.msra.mxu0 %v478
  %816 = vmatprep.subr.bf16.mxu0 %v476
  %817 = vmatpush1.bf16.msra.mxu0 %v475
  %818 = vmatprep.subr.bf16.mxu0 %v473
  %819 = vmatpush1.bf16.msra.mxu0 %v472
  %820 = vmatprep.subr.bf16.mxu0 %v470
  %821 = vmatpush1.bf16.msra.mxu0 %v469
  %822 = vmatprep.subr.bf16.mxu0 %v467
  %823 = vmatpush1.bf16.msra.mxu0 %v466
  %824 = vmatprep.subr.bf16.mxu0 %v464
  %825 = vmatpush1.bf16.msra.mxu0 %v463
  %826 = vmatprep.subr.bf16.mxu0 %v461
  %827 = vmatpush1.bf16.msra.mxu0 %v460
  %828 = vmatprep.subr.bf16.mxu0 %v458
  %829 = vmatpush1.bf16.msra.mxu0 %v457
  %830 = vmatprep.subr.bf16.mxu0 0
  %831 = vmatpush2.bf16.msra.mxu0 0
  %832 = vmatprep.subr.bf16.mxu0 0
  %833 = vmatpush2.bf16.msra.mxu0 0
  %834 = vmatprep.subr.bf16.mxu0 0
  %835 = vmatpush2.bf16.msra.mxu0 0
  %836 = vmatprep.subr.bf16.mxu0 0
  %837 = vmatpush2.bf16.msra.mxu0 0
  %838 = vmatprep.subr.bf16.mxu0 0
  %839 = vmatpush2.bf16.msra.mxu0 0
  %840 = vmatprep.subr.bf16.mxu0 0
  %841 = vmatpush2.bf16.msra.mxu0 0
  %842 = vmatprep.subr.bf16.mxu0 0
  %843 = vmatpush2.bf16.msra.mxu0 0
  %844 = vmatprep.subr.bf16.mxu0 0
  %845 = vmatpush2.bf16.msra.mxu0 0
  %846 = vmatprep.mubr.bf16.mxu0 0
  %847 = vmatmul.mubr.bf16.gmra.mxu0 %v813
  %v848 = vpop.f32.mrf.mxu0
  %v849 = vadd.f32 %v365, %v848
  %v850 = vpop.f32.mrf.mxu0
  %v851 = vadd.f32 %v369, %v850
  %v852 = vpop.f32.mrf.mxu0
  %v853 = vpop.f32.mrf.mxu0
  %854 = vdwg.mxu0
  %855 = vmatprep.subr.bf16.mxu0 0
  %856 = vmatpush1.bf16.msra.mxu0 %v480
  %857 = vmatprep.subr.bf16.mxu0 0
  %858 = vmatpush1.bf16.msra.mxu0 %v477
  %859 = vmatprep.subr.bf16.mxu0 0
  %860 = vmatpush1.bf16.msra.mxu0 %v474
  %861 = vmatprep.subr.bf16.mxu0 0
  %862 = vmatpush1.bf16.msra.mxu0 %v471
  %863 = vmatprep.subr.bf16.mxu0 0
  %864 = vmatpush1.bf16.msra.mxu0 %v468
  %865 = vmatprep.subr.bf16.mxu0 0
  %866 = vmatpush1.bf16.msra.mxu0 %v465
  %867 = vmatprep.subr.bf16.mxu0 0
  %868 = vmatpush1.bf16.msra.mxu0 %v462
  %869 = vmatprep.subr.bf16.mxu0 0
  %870 = vmatpush1.bf16.msra.mxu0 %v459
  %871 = vmatprep.subr.bf16.mxu0 0
  %872 = vmatpush2.bf16.msra.mxu0 0
  %873 = vmatprep.subr.bf16.mxu0 0
  %874 = vmatpush2.bf16.msra.mxu0 0
  %875 = vmatprep.subr.bf16.mxu0 0
  %876 = vmatpush2.bf16.msra.mxu0 0
  %877 = vmatprep.subr.bf16.mxu0 0
  %878 = vmatpush2.bf16.msra.mxu0 0
  %879 = vmatprep.subr.bf16.mxu0 0
  %880 = vmatpush2.bf16.msra.mxu0 0
  %881 = vmatprep.subr.bf16.mxu0 0
  %882 = vmatpush2.bf16.msra.mxu0 0
  %883 = vmatprep.subr.bf16.mxu0 0
  %884 = vmatpush2.bf16.msra.mxu0 0
  %885 = vmatprep.subr.bf16.mxu0 0
  %886 = vmatpush2.bf16.msra.mxu0 0
  %887 = vmatprep.mubr.bf16.mxu0 0
  %888 = vmatmul.mubr.bf16.gmra.mxu0 %v813
  %v889 = vpop.f32.mrf.mxu0
  %v890 = vadd.f32 %v373, %v889
  %v891 = vpop.f32.mrf.mxu0
  %v892 = vpop.f32.mrf.mxu0
  %v893 = vpop.f32.mrf.mxu0
  %894 = vdwg.mxu0
  %v895 = vadd.f32 %v275, %v849
  %v896 = vxor.u32 %v895, 2147483648
  %v897 = vmul.f32 %v896, 1.442695
  %v898 = vpow.pop %v897
  %v899 = vadd.f32 %v898, 1.0
  %v900 = vrcp.pop %v899
  %v901 = vmul.f32 1.0, %v900
  %v902 = vadd.f32 %v277, %v851
  %v903 = vxor.u32 %v902, 2147483648
  %v904 = vmul.f32 %v903, 1.442695
  %v905 = vpow.pop %v904
  %v906 = vadd.f32 %v905, 1.0
  %v907 = vrcp.pop %v906
  %v908 = vmul.f32 1.0, %v907
  %v909 = vmul.f32 %v901, %v890
  %v910 = vadd.f32 %v325, %v909
  %v911 = vtanh.pop %v910
  %v912 = vsub.f32 1.0, %v908
  %v913 = vmul.f32 %v912, %v911
  %v914 = vmul.f32 %v908, %v812
  %v915 = vadd.f32 %v913, %v914
  %v916 = vpack.c.bf16 %v915, %v915
  %v917 = vld [vmem:[%s5] sm:$0xf]
  %v918 = vld [vmem:[%s5 + $0x4] sm:$0xf]
  %v919 = vld [vmem:[%s5 + $0x8] sm:$0xf]
  %v920 = vld [vmem:[%s5 + $0xc] sm:$0xf]
  %v921 = vld [vmem:[%s5 + $0x10] sm:$0xf]
  %v922 = vld [vmem:[%s5 + $0x14] sm:$0xf]
  %v923 = vld [vmem:[%s5 + $0x18] sm:$0xf]
  %v924 = vld [vmem:[%s5 + $0x1c] sm:$0xf]
  %v925 = vld [vmem:[%s5 + $0x20] sm:$0xf]
  %v926 = vld [vmem:[%s5 + $0x24] sm:$0xf]
  %v927 = vld [vmem:[%s5 + $0x28] sm:$0xf]
  %v928 = vld [vmem:[%s5 + $0x2c] sm:$0xf]
  %v929 = vld [vmem:[%s5 + $0x30] sm:$0xf]
  %v930 = vld [vmem:[%s5 + $0x34] sm:$0xf]
  %v931 = vld [vmem:[%s5 + $0x38] sm:$0xf]
  %v932 = vld [vmem:[%s5 + $0x3c] sm:$0xf]
  %v933 = vld [vmem:[%s6] sm:$0x1]
  %v935 = vlaneseq
  %v936 = vshrl.u32 %v935, 7
  %v937 = vsub.s32 0, %v936
  %v938 = vrot.slane %v933, %v937
  %v956 = vunpack.c.l.b16 %v917
  %v957 = vunpack.c.l.b16 %v918
  %v958 = vunpack.c.l.b16 %v919
  %v959 = vunpack.c.l.b16 %v920
  %v960 = vunpack.c.l.b16 %v921
  %v961 = vunpack.c.l.b16 %v922
  %v962 = vunpack.c.l.b16 %v923
  %v963 = vunpack.c.l.b16 %v924
  %v964 = vunpack.c.l.b16 %v925
  %v965 = vunpack.c.l.b16 %v926
  %v966 = vunpack.c.l.b16 %v927
  %v967 = vunpack.c.l.b16 %v928
  %v968 = vunpack.c.l.b16 %v929
  %v969 = vunpack.c.l.b16 %v930
  %v970 = vunpack.c.l.b16 %v931
  %v971 = vunpack.c.l.b16 %v932
  %v972 = vpack.c.b16 %v957, %v956
  %v973 = vpack.c.b16 %v959, %v958
  %v974 = vpack.c.b16 %v961, %v960
  %v975 = vpack.c.b16 %v963, %v962
  %v976 = vpack.c.b16 %v965, %v964
  %v977 = vpack.c.b16 %v967, %v966
  %v978 = vpack.c.b16 %v969, %v968
  %v979 = vpack.c.b16 %v971, %v970
  %988 = vmatprep.subr.bf16.mxu0 0
  %989 = vmatpush1.bf16.msra.mxu0 %v979
  %990 = vmatprep.subr.bf16.mxu0 0
  %991 = vmatpush1.bf16.msra.mxu0 %v978
  %992 = vmatprep.subr.bf16.mxu0 0
  %993 = vmatpush1.bf16.msra.mxu0 %v977
  %994 = vmatprep.subr.bf16.mxu0 0
  %995 = vmatpush1.bf16.msra.mxu0 %v976
  %996 = vmatprep.subr.bf16.mxu0 0
  %997 = vmatpush1.bf16.msra.mxu0 %v975
  %998 = vmatprep.subr.bf16.mxu0 0
  %999 = vmatpush1.bf16.msra.mxu0 %v974
  %1000 = vmatprep.subr.bf16.mxu0 0
  %1001 = vmatpush1.bf16.msra.mxu0 %v973
  %1002 = vmatprep.subr.bf16.mxu0 0
  %1003 = vmatpush1.bf16.msra.mxu0 %v972
  %1004 = vmatprep.subr.bf16.mxu0 0
  %1005 = vmatpush2.bf16.msra.mxu0 0
  %1006 = vmatprep.subr.bf16.mxu0 0
  %1007 = vmatpush2.bf16.msra.mxu0 0
  %1008 = vmatprep.subr.bf16.mxu0 0
  %1009 = vmatpush2.bf16.msra.mxu0 0
  %1010 = vmatprep.subr.bf16.mxu0 0
  %1011 = vmatpush2.bf16.msra.mxu0 0
  %1012 = vmatprep.subr.bf16.mxu0 0
  %1013 = vmatpush2.bf16.msra.mxu0 0
  %1014 = vmatprep.subr.bf16.mxu0 0
  %1015 = vmatpush2.bf16.msra.mxu0 0
  %1016 = vmatprep.subr.bf16.mxu0 0
  %1017 = vmatpush2.bf16.msra.mxu0 0
  %1018 = vmatprep.subr.bf16.mxu0 0
  %1019 = vmatpush2.bf16.msra.mxu0 0
  %1020 = vmatprep.mubr.bf16.mxu0 0
  %1021 = vmatmul.mubr.bf16.gmra.mxu0 %v916
  %v1022 = vpop.f32.mrf.mxu0
  %v1023 = vadd.f32 %v938, %v1022
  %v1024 = vpop.f32.mrf.mxu0
  %v1025 = vpop.f32.mrf.mxu0
  %v1026 = vpop.f32.mrf.mxu0
  %1027 = vdwg.mxu0
  %v1028 = vmax.f32 %v1023, 0.0
  %v1029 = vpack.c.bf16 %v1028, %v1028
  %v1030 = vld [vmem:[%s7] sm:$0xf]
  %v1031 = vld [vmem:[%s7 + $0x4] sm:$0xf]
  %v1032 = vld [vmem:[%s7 + $0x8] sm:$0xf]
  %v1033 = vld [vmem:[%s7 + $0xc] sm:$0xf]
  %v1034 = vld [vmem:[%s7 + $0x10] sm:$0xf]
  %v1035 = vld [vmem:[%s7 + $0x14] sm:$0xf]
  %v1036 = vld [vmem:[%s7 + $0x18] sm:$0xf]
  %v1037 = vld [vmem:[%s7 + $0x1c] sm:$0xf]
  %v1038 = vld [vmem:[%s8] sm:$0x1]
  %v1040 = vlaneseq
  %v1041 = vshrl.u32 %v1040, 7
  %v1042 = vsub.s32 0, %v1041
  %v1043 = vrot.slane %v1038, %v1042
  %v1053 = vunpack.c.l.b16 %v1030
  %v1054 = vunpack.c.l.b16 %v1031
  %v1055 = vunpack.c.l.b16 %v1032
  %v1056 = vunpack.c.l.b16 %v1033
  %v1057 = vunpack.c.l.b16 %v1034
  %v1058 = vunpack.c.l.b16 %v1035
  %v1059 = vunpack.c.l.b16 %v1036
  %v1060 = vunpack.c.l.b16 %v1037
  %v1061 = vpack.c.b16 %v1054, %v1053
  %v1062 = vpack.c.b16 %v1056, %v1055
  %v1063 = vpack.c.b16 %v1058, %v1057
  %v1064 = vpack.c.b16 %v1060, %v1059
  %vm1069 = vcmask 523264
  %v1071 = vsel %vm1069, %v1029, 0
  %1073 = vmatprep.subr.bf16.mxu0 0
  %1074 = vmatpush1.bf16.msra.mxu0 0
  %1075 = vmatprep.subr.bf16.mxu0 0
  %1076 = vmatpush1.bf16.msra.mxu0 0
  %1077 = vmatprep.subr.bf16.mxu0 0
  %1078 = vmatpush1.bf16.msra.mxu0 0
  %1079 = vmatprep.subr.bf16.mxu0 0
  %1080 = vmatpush1.bf16.msra.mxu0 0
  %1081 = vmatprep.subr.bf16.mxu0 0
  %1082 = vmatpush1.bf16.msra.mxu0 %v1064
  %1083 = vmatprep.subr.bf16.mxu0 0
  %1084 = vmatpush1.bf16.msra.mxu0 %v1063
  %1085 = vmatprep.subr.bf16.mxu0 0
  %1086 = vmatpush1.bf16.msra.mxu0 %v1062
  %1087 = vmatprep.subr.bf16.mxu0 0
  %1088 = vmatpush1.bf16.msra.mxu0 %v1061
  %1089 = vmatprep.subr.bf16.mxu0 0
  %1090 = vmatpush2.bf16.msra.mxu0 0
  %1091 = vmatprep.subr.bf16.mxu0 0
  %1092 = vmatpush2.bf16.msra.mxu0 0
  %1093 = vmatprep.subr.bf16.mxu0 0
  %1094 = vmatpush2.bf16.msra.mxu0 0
  %1095 = vmatprep.subr.bf16.mxu0 0
  %1096 = vmatpush2.bf16.msra.mxu0 0
  %1097 = vmatprep.subr.bf16.mxu0 0
  %1098 = vmatpush2.bf16.msra.mxu0 0
  %1099 = vmatprep.subr.bf16.mxu0 0
  %1100 = vmatpush2.bf16.msra.mxu0 0
  %1101 = vmatprep.subr.bf16.mxu0 0
  %1102 = vmatpush2.bf16.msra.mxu0 0
  %1103 = vmatprep.subr.bf16.mxu0 0
  %1104 = vmatpush2.bf16.msra.mxu0 0
  %1105 = vmatprep.mubr.bf16.mxu0 0
  %1106 = vmatmul.mubr.bf16.gmra.mxu0 %v1071
  %v1107 = vpop.f32.mrf.mxu0
  %v1108 = vadd.f32 %v1043, %v1107
  %v1109 = vpop.f32.mrf.mxu0
  %v1110 = vpop.f32.mrf.mxu0
  %v1111 = vpop.f32.mrf.mxu0
  %1112 = vdwg.mxu0
  %vm1113 = vcmask 15360
  %1114 = vst.msk [vmem:[%s9] sm:$0xff] %vm1113, %v1108
  // Predicated region
  $region38: #{validator_net_forward.7} parent=0 // pred_check
    _
  $region39: #{validator_net_forward.7} parent=0 // pred_check_branch
    %1116 = sbr.rel (0) target = $region41
  $region40: #{validator_net_forward.7} parent=0 // pred_region
    _
  $region41: #{validator_net_forward.7} parent=0 // pred_fallthru
    _
  // Predicated region
  $region42: #{validator_net_forward.7} parent=0 // pred_check
    _
  $region43: #{validator_net_forward.7} parent=0 // pred_check_branch
    %1118 = sbr.rel (0) target = $region45
  $region44: #{validator_net_forward.7} parent=0 // pred_region
    _
  $region45: #{validator_net_forward.7} parent=0 // pred_fallthru
    _

</llo_original>
